<compile_context>
chip_gen: v7x
topology: tpu7x:2x2x1
jax: 0.10.0
libtpu: 0.0.40
codegen_flags: <defaults>
</compile_context>

<pallas_src>
import functools
import math

import jax
import jax.numpy as jnp
from jax.experimental import pallas as pl
from jax.experimental.pallas import tpu as pltpu

# ----------------------------- model config --------------------------------
CONFIG = {
    "hidden_size": 128,
    "vocab_size": 32,      # +1 inside the model, like the PyTorch module
    "max_length": 16,
    "class_num": 8,
    "num_layers": 2,
    "num_heads": 2,
    "intermediate_size": 256,
    "use_crf": False,
}

H = CONFIG["hidden_size"]
NUM_HEADS = CONFIG["num_heads"]
HEAD_DIM = H // NUM_HEADS
FFN = CONFIG["intermediate_size"]
NUM_LAYERS = CONFIG["num_layers"]
CLASS_NUM = CONFIG["class_num"]
CLS_PAD = 128                      # lane-dense classifier output width
LN_EPS = 1e-12
WEIGHT_DTYPE = jnp.bfloat16        # MXU-input / DMA-bytes dtype (f32 accumulation)


# ------------------------------ kernel helpers ------------------------------
def _layernorm(x, g, b):
    mu = jnp.mean(x, axis=-1, keepdims=True)
    var = jnp.mean(jnp.square(x - mu), axis=-1, keepdims=True)
    return (x - mu) * jax.lax.rsqrt(var + LN_EPS) * g + b


def _dense(x, w, b):
    # bf16 MXU inputs, f32 accumulation; elementwise math stays f32.
    return jnp.dot(x.astype(w.dtype), w, preferred_element_type=jnp.float32) + b


# ------------------------------ fused kernel --------------------------------
def encoder_kernel(
    x_emb_ref,                 # (1, S, H)   f32  gathered word embeddings
    pos_ref,                   # (S, H)      f32
    typ_ref,                   # (1, H)      f32
    emb_g_ref, emb_b_ref,      # (1, H)      f32
    wqkv_ref, bqkv_ref,        # (L, H, 3H)  bf16 / (L, 1, 3H) f32
    wo_ref, bo_ref,            # (L, H, H)   bf16 / (L, 1, H)  f32
    ln1_g_ref, ln1_b_ref,      # (L, 1, H)   f32
    w1_ref, b1_ref,            # (L, H, FFN) bf16 / (L, 1, FFN) f32
    w2_ref, b2_ref,            # (L, FFN, H) bf16 / (L, 1, H)  f32
    ln2_g_ref, ln2_b_ref,      # (L, 1, H)   f32
    cls_w_ref, cls_b_ref,      # (H, 128)    bf16 / (1, 128)   f32
    o_ref,                     # (1, S, 128) f32
):
    S = x_emb_ref.shape[1]
    scale = 1.0 / math.sqrt(HEAD_DIM)

    # Embedding sum + embedding LayerNorm (note: BertModel(x) with no attention
    # mask treats all positions as valid, so no mask is applied here either).
    x = x_emb_ref[0] + pos_ref[...] + typ_ref[...]
    x = _layernorm(x, emb_g_ref[...], emb_b_ref[...])

    # Static unroll over layers; all weights stay resident in VMEM.
    for l in range(NUM_LAYERS):
        # ---- multi-head self-attention + residual + post-LN ----
        qkv = _dense(x, wqkv_ref[l], bqkv_ref[l])                   # (S, 3H)
        q = qkv[:, :H].reshape(S, NUM_HEADS, HEAD_DIM)
        k = qkv[:, H:2 * H].reshape(S, NUM_HEADS, HEAD_DIM)
        v = qkv[:, 2 * H:].reshape(S, NUM_HEADS, HEAD_DIM)

        s = jnp.einsum("qhd,khd->hqk", q, k,
                       preferred_element_type=jnp.float32) * scale   # (NH, S, S)
        s = s - jnp.max(s, axis=-1, keepdims=True)
        p = jnp.exp(s)
        p = p * pl.reciprocal(jnp.sum(p, axis=-1, keepdims=True), approx=True)
        ctx = jnp.einsum("hqk,khd->qhd", p, v,
                         preferred_element_type=jnp.float32).reshape(S, H)

        proj = _dense(ctx, wo_ref[l], bo_ref[l])
        x = _layernorm(x + proj, ln1_g_ref[l], ln1_b_ref[l])

        # ---- feed-forward (GELU) + residual + post-LN ----
        h = jax.nn.gelu(_dense(x, w1_ref[l], b1_ref[l]))
        y = _dense(h, w2_ref[l], b2_ref[l])
        x = _layernorm(x + y, ln2_g_ref[l], ln2_b_ref[l])

    # ---- classification head (lane-dense, padded to 128 columns) ----
    o_ref[0] = _dense(x, cls_w_ref[...], cls_b_ref[...])


# ------------------------------ parameter init ------------------------------
def init_params(key):
    vocab = CONFIG["vocab_size"] + 1
    max_len = CONFIG["max_length"]

    def normal(k, shape, std=0.02):
        return (std * jax.random.normal(k, shape)).astype(jnp.float32)

    keys = jax.random.split(key, 4 + NUM_LAYERS)
    params = {
        "word_emb": normal(keys[0], (vocab, H)).at[0].set(0.0),   # padding_idx=0
        "pos_emb": normal(keys[1], (max_len, H)),
        "type_emb": normal(keys[2], (2, H)),
        "emb_ln_g": jnp.ones((1, H), jnp.float32),
        "emb_ln_b": jnp.zeros((1, H), jnp.float32),
    }

    # Classifier padded to lane-dense 128 output columns.
    cls_w = normal(keys[3], (H, CLASS_NUM))
    params["cls_w"] = (jnp.zeros((H, CLS_PAD), jnp.float32)
                       .at[:, :CLASS_NUM].set(cls_w)).astype(WEIGHT_DTYPE)
    params["cls_b"] = jnp.zeros((1, CLS_PAD), jnp.float32)

    wqkv, wo, w1, w2 = [], [], [], []
    for li in range(NUM_LAYERS):
        lk = jax.random.split(keys[4 + li], 6)
        wqkv.append(jnp.concatenate([normal(lk[0], (H, H)),
                                     normal(lk[1], (H, H)),
                                     normal(lk[2], (H, H))], axis=1))
        wo.append(normal(lk[3], (H, H)))
        w1.append(normal(lk[4], (H, FFN)))
        w2.append(normal(lk[5], (FFN, H)))

    params["wqkv"] = jnp.stack(wqkv).astype(WEIGHT_DTYPE)          # (L, H, 3H)
    params["bqkv"] = jnp.zeros((NUM_LAYERS, 1, 3 * H), jnp.float32)
    params["wo"] = jnp.stack(wo).astype(WEIGHT_DTYPE)              # (L, H, H)
    params["bo"] = jnp.zeros((NUM_LAYERS, 1, H), jnp.float32)
    params["ln1_g"] = jnp.ones((NUM_LAYERS, 1, H), jnp.float32)
    params["ln1_b"] = jnp.zeros((NUM_LAYERS, 1, H), jnp.float32)
    params["w1"] = jnp.stack(w1).astype(WEIGHT_DTYPE)              # (L, H, FFN)
    params["b1"] = jnp.zeros((NUM_LAYERS, 1, FFN), jnp.float32)
    params["w2"] = jnp.stack(w2).astype(WEIGHT_DTYPE)              # (L, FFN, H)
    params["b2"] = jnp.zeros((NUM_LAYERS, 1, H), jnp.float32)
    params["ln2_g"] = jnp.ones((NUM_LAYERS, 1, H), jnp.float32)
    params["ln2_b"] = jnp.zeros((NUM_LAYERS, 1, H), jnp.float32)
    return params


# ------------------------------ forward pass --------------------------------
@jax.jit
def forward(params, token_ids):
    """Equivalent of TorchModel.forward(x) with target=None, use_crf=False."""
    B, S = token_ids.shape

    # Embedding gather is the only JAX glue; everything downstream is one kernel.
    word = jnp.take(params["word_emb"], token_ids, axis=0)          # (B, S, H)
    pos = params["pos_emb"][:S]                                     # (S, H)
    typ = params["type_emb"][0:1]                                   # (1, H)

    act_in = pl.BlockSpec((1, S, H), lambda b: (b, 0, 0))
    act_out = pl.BlockSpec((1, S, CLS_PAD), lambda b: (b, 0, 0))

    def rep2(shape):
        return pl.BlockSpec(shape, lambda b: (0, 0))

    def rep3(shape):
        return pl.BlockSpec(shape, lambda b: (0, 0, 0))

    logits_pad = pl.pallas_call(
        encoder_kernel,
        out_shape=jax.ShapeDtypeStruct((B, S, CLS_PAD), jnp.float32),
        grid=(B,),
        in_specs=[
            act_in,
            rep2((S, H)), rep2((1, H)),                       # pos, type
            rep2((1, H)), rep2((1, H)),                       # emb LN g/b
            rep3((NUM_LAYERS, H, 3 * H)), rep3((NUM_LAYERS, 1, 3 * H)),
            rep3((NUM_LAYERS, H, H)), rep3((NUM_LAYERS, 1, H)),
            rep3((NUM_LAYERS, 1, H)), rep3((NUM_LAYERS, 1, H)),
            rep3((NUM_LAYERS, H, FFN)), rep3((NUM_LAYERS, 1, FFN)),
            rep3((NUM_LAYERS, FFN, H)), rep3((NUM_LAYERS, 1, H)),
            rep3((NUM_LAYERS, 1, H)), rep3((NUM_LAYERS, 1, H)),
            rep2((H, CLS_PAD)), rep2((1, CLS_PAD)),
        ],
        out_specs=act_out,
        compiler_params=pltpu.CompilerParams(
            dimension_semantics=("parallel",)),   # 2-wide -> both v7x TCs
    )(word, pos, typ,
      params["emb_ln_g"], params["emb_ln_b"],
      params["wqkv"], params["bqkv"],
      params["wo"], params["bo"],
      params["ln1_g"], params["ln1_b"],
      params["w1"], params["b1"],
      params["w2"], params["b2"],
      params["ln2_g"], params["ln2_b"],
      params["cls_w"], params["cls_b"])

    # Strip the lane padding down to the real class_num columns.
    return logits_pad[..., :CLASS_NUM]


if __name__ == "__main__":
    key = jax.random.PRNGKey(0)
    pkey, dkey = jax.random.split(key)
    params = init_params(pkey)

    B, S = 2, CONFIG["max_length"]
    token_ids = jax.random.randint(dkey, (B, S), 1, CONFIG["vocab_size"] + 1,
                                   dtype=jnp.int32)

    logits = forward(params, token_ids)
    jax.block_until_ready(logits)
    assert logits.shape == (B, S, CONFIG["class_num"])
    assert bool(jnp.all(jnp.isfinite(logits)))
    print("KERNEL_OK")
</pallas_src>

<mosaic_0001>
module attributes {stable_mosaic.version = 11 : i64} {
  func.func @encoder_kernel(%arg0: i32, %arg1: memref<1x16x128xf32, #tpu.memory_space<vmem>>, %arg2: memref<16x128xf32, #tpu.memory_space<vmem>>, %arg3: memref<1x128xf32, #tpu.memory_space<vmem>>, %arg4: memref<1x128xf32, #tpu.memory_space<vmem>>, %arg5: memref<1x128xf32, #tpu.memory_space<vmem>>, %arg6: memref<2x128x384xbf16, #tpu.memory_space<vmem>>, %arg7: memref<2x1x384xf32, #tpu.memory_space<vmem>>, %arg8: memref<2x128x128xbf16, #tpu.memory_space<vmem>>, %arg9: memref<2x1x128xf32, #tpu.memory_space<vmem>>, %arg10: memref<2x1x128xf32, #tpu.memory_space<vmem>>, %arg11: memref<2x1x128xf32, #tpu.memory_space<vmem>>, %arg12: memref<2x128x256xbf16, #tpu.memory_space<vmem>>, %arg13: memref<2x1x256xf32, #tpu.memory_space<vmem>>, %arg14: memref<2x256x128xbf16, #tpu.memory_space<vmem>>, %arg15: memref<2x1x128xf32, #tpu.memory_space<vmem>>, %arg16: memref<2x1x128xf32, #tpu.memory_space<vmem>>, %arg17: memref<2x1x128xf32, #tpu.memory_space<vmem>>, %arg18: memref<128x128xbf16, #tpu.memory_space<vmem>>, %arg19: memref<1x128xf32, #tpu.memory_space<vmem>>, %arg20: memref<1x16x128xf32, #tpu.memory_space<vmem>>) attributes {dimension_semantics = [#tpu.dimension_semantics<parallel>], iteration_bounds = array<i64: 2>, scalar_prefetch = 0 : i64, scratch_operands = 0 : i64, tpu.core_type = #tpu.core_type<tc>, window_params = [{transform_indices = @transform_0, window_bounds = array<i64: 1, 16, 128>}, {pipeline_mode = #tpu.pipeline_mode<synchronous>, transform_indices = @transform_1, window_bounds = array<i64: 16, 128>}, {pipeline_mode = #tpu.pipeline_mode<synchronous>, transform_indices = @transform_2, window_bounds = array<i64: 1, 128>}, {pipeline_mode = #tpu.pipeline_mode<synchronous>, transform_indices = @transform_3, window_bounds = array<i64: 1, 128>}, {pipeline_mode = #tpu.pipeline_mode<synchronous>, transform_indices = @transform_4, window_bounds = array<i64: 1, 128>}, {pipeline_mode = #tpu.pipeline_mode<synchronous>, transform_indices = @transform_5, window_bounds = array<i64: 2, 128, 384>}, {pipeline_mode = #tpu.pipeline_mode<synchronous>, transform_indices = @transform_6, window_bounds = array<i64: 2, 1, 384>}, {pipeline_mode = #tpu.pipeline_mode<synchronous>, transform_indices = @transform_7, window_bounds = array<i64: 2, 128, 128>}, {pipeline_mode = #tpu.pipeline_mode<synchronous>, transform_indices = @transform_8, window_bounds = array<i64: 2, 1, 128>}, {pipeline_mode = #tpu.pipeline_mode<synchronous>, transform_indices = @transform_9, window_bounds = array<i64: 2, 1, 128>}, {pipeline_mode = #tpu.pipeline_mode<synchronous>, transform_indices = @transform_10, window_bounds = array<i64: 2, 1, 128>}, {pipeline_mode = #tpu.pipeline_mode<synchronous>, transform_indices = @transform_11, window_bounds = array<i64: 2, 128, 256>}, {pipeline_mode = #tpu.pipeline_mode<synchronous>, transform_indices = @transform_12, window_bounds = array<i64: 2, 1, 256>}, {pipeline_mode = #tpu.pipeline_mode<synchronous>, transform_indices = @transform_13, window_bounds = array<i64: 2, 256, 128>}, {pipeline_mode = #tpu.pipeline_mode<synchronous>, transform_indices = @transform_14, window_bounds = array<i64: 2, 1, 128>}, {pipeline_mode = #tpu.pipeline_mode<synchronous>, transform_indices = @transform_15, window_bounds = array<i64: 2, 1, 128>}, {pipeline_mode = #tpu.pipeline_mode<synchronous>, transform_indices = @transform_16, window_bounds = array<i64: 2, 1, 128>}, {pipeline_mode = #tpu.pipeline_mode<synchronous>, transform_indices = @transform_17, window_bounds = array<i64: 128, 128>}, {pipeline_mode = #tpu.pipeline_mode<synchronous>, transform_indices = @transform_18, window_bounds = array<i64: 1, 128>}, {transform_indices = @transform_19, window_bounds = array<i64: 1, 16, 128>}]} {
    %c0 = arith.constant 0 : index
    %c0_0 = arith.constant 0 : index
    %c0_1 = arith.constant 0 : index
    %0 = vector.load %arg1[%c0, %c0_0, %c0_1] : memref<1x16x128xf32, #tpu.memory_space<vmem>>, vector<1x16x128xf32>
    %1 = vector.shape_cast %0 : vector<1x16x128xf32> to vector<16x128xf32>
    %c0_2 = arith.constant 0 : index
    %c0_3 = arith.constant 0 : index
    %2 = vector.load %arg2[%c0_2, %c0_3] : memref<16x128xf32, #tpu.memory_space<vmem>>, vector<16x128xf32>
    %3 = arith.addf %1, %2 : vector<16x128xf32>
    %c0_4 = arith.constant 0 : index
    %c0_5 = arith.constant 0 : index
    %4 = vector.load %arg3[%c0_4, %c0_5] : memref<1x128xf32, #tpu.memory_space<vmem>>, vector<1x128xf32>
    %5 = vector.broadcast %4 : vector<1x128xf32> to vector<16x128xf32>
    %6 = arith.addf %3, %5 : vector<16x128xf32>
    %c0_6 = arith.constant 0 : index
    %c0_7 = arith.constant 0 : index
    %7 = vector.load %arg4[%c0_6, %c0_7] : memref<1x128xf32, #tpu.memory_space<vmem>>, vector<1x128xf32>
    %c0_8 = arith.constant 0 : index
    %c0_9 = arith.constant 0 : index
    %8 = vector.load %arg5[%c0_8, %c0_9] : memref<1x128xf32, #tpu.memory_space<vmem>>, vector<1x128xf32>
    %cst = arith.constant dense<0.000000e+00> : vector<16xf32>
    %9 = vector.multi_reduction <add>, %6, %cst [1] : vector<16x128xf32> to vector<16xf32>
    %10 = vector.shape_cast %9 : vector<16xf32> to vector<16x1xf32>
    %cst_10 = arith.constant 1.280000e+02 : f32
    %11 = vector.broadcast %cst_10 : f32 to vector<16x1xf32>
    %12 = arith.divf %10, %11 : vector<16x1xf32>
    %13 = vector.broadcast %12 : vector<16x1xf32> to vector<16x128xf32>
    %14 = arith.subf %6, %13 : vector<16x128xf32>
    %15 = arith.mulf %14, %14 : vector<16x128xf32>
    %cst_11 = arith.constant dense<0.000000e+00> : vector<16xf32>
    %16 = vector.multi_reduction <add>, %15, %cst_11 [1] : vector<16x128xf32> to vector<16xf32>
    %17 = vector.shape_cast %16 : vector<16xf32> to vector<16x1xf32>
    %cst_12 = arith.constant 1.280000e+02 : f32
    %18 = vector.broadcast %cst_12 : f32 to vector<16x1xf32>
    %19 = arith.divf %17, %18 : vector<16x1xf32>
    %20 = vector.broadcast %12 : vector<16x1xf32> to vector<16x128xf32>
    %21 = arith.subf %6, %20 : vector<16x128xf32>
    %cst_13 = arith.constant 9.99999996E-13 : f32
    %22 = vector.broadcast %cst_13 : f32 to vector<16x1xf32>
    %23 = arith.addf %19, %22 : vector<16x1xf32>
    %24 = math.rsqrt %23 : vector<16x1xf32>
    %25 = vector.broadcast %24 : vector<16x1xf32> to vector<16x128xf32>
    %26 = arith.mulf %21, %25 : vector<16x128xf32>
    %27 = vector.broadcast %7 : vector<1x128xf32> to vector<16x128xf32>
    %28 = arith.mulf %26, %27 : vector<16x128xf32>
    %29 = vector.broadcast %8 : vector<1x128xf32> to vector<16x128xf32>
    %30 = arith.addf %28, %29 : vector<16x128xf32>
    %c0_14 = arith.constant 0 : index
    %c0_15 = arith.constant 0 : index
    %c0_16 = arith.constant 0 : index
    %31 = vector.load %arg6[%c0_14, %c0_15, %c0_16] : memref<2x128x384xbf16, #tpu.memory_space<vmem>>, vector<1x128x384xbf16>
    %32 = vector.shape_cast %31 : vector<1x128x384xbf16> to vector<128x384xbf16>
    %c0_17 = arith.constant 0 : index
    %c0_18 = arith.constant 0 : index
    %c0_19 = arith.constant 0 : index
    %33 = vector.load %arg7[%c0_17, %c0_18, %c0_19] : memref<2x1x384xf32, #tpu.memory_space<vmem>>, vector<1x1x384xf32>
    %34 = vector.shape_cast %33 : vector<1x1x384xf32> to vector<1x384xf32>
    %35 = arith.truncf %30 : vector<16x128xf32> to vector<16x128xbf16>
    %cst_20 = arith.constant dense<0.000000e+00> : vector<16x384xf32>
    %36 = tpu.matmul %35, %32, %cst_20 {dimension_numbers = #tpu.dot_dimension_numbers<[1], [0], [0], [1], [0, 0, 1, 1], [], []>} : vector<16x128xbf16>, vector<128x384xbf16>, vector<16x384xf32> -> vector<16x384xf32>
    %37 = vector.broadcast %34 : vector<1x384xf32> to vector<16x384xf32>
    %38 = arith.addf %36, %37 : vector<16x384xf32>
    %39 = vector.extract_strided_slice %38 {offsets = [0, 0], sizes = [16, 128], strides = [1, 1]} : vector<16x384xf32> to vector<16x128xf32>
    %40 = vector.shape_cast %39 : vector<16x128xf32> to vector<16x2x64xf32>
    %41 = vector.extract_strided_slice %38 {offsets = [0, 128], sizes = [16, 128], strides = [1, 1]} : vector<16x384xf32> to vector<16x128xf32>
    %42 = vector.shape_cast %41 : vector<16x128xf32> to vector<16x2x64xf32>
    %43 = vector.extract_strided_slice %38 {offsets = [0, 256], sizes = [16, 128], strides = [1, 1]} : vector<16x384xf32> to vector<16x128xf32>
    %44 = vector.shape_cast %43 : vector<16x128xf32> to vector<16x2x64xf32>
    "tpu.trace_start"() <{level = 10 : i32, message = "qhd,khd->hqk"}> : () -> ()
    %cst_21 = arith.constant dense<0.000000e+00> : vector<2x16x16xf32>
    %45 = tpu.matmul %40, %42, %cst_21 {dimension_numbers = #tpu.dot_dimension_numbers<[2], [2], [0], [0], [0, 1, 0, 0, 1, 0], [1], [1]>} : vector<16x2x64xf32>, vector<16x2x64xf32>, vector<2x16x16xf32> -> vector<2x16x16xf32>
    "tpu.trace_stop"() : () -> ()
    %cst_22 = arith.constant 1.250000e-01 : f32
    %46 = vector.broadcast %cst_22 : f32 to vector<2x16x16xf32>
    %47 = arith.mulf %45, %46 : vector<2x16x16xf32>
    %cst_23 = arith.constant dense<0xFF800000> : vector<2x16xf32>
    %48 = vector.multi_reduction <maximumf>, %47, %cst_23 [2] : vector<2x16x16xf32> to vector<2x16xf32>
    %49 = vector.shape_cast %48 : vector<2x16xf32> to vector<2x16x1xf32>
    %50 = vector.broadcast %49 : vector<2x16x1xf32> to vector<2x16x16xf32>
    %51 = arith.subf %47, %50 : vector<2x16x16xf32>
    %52 = math.exp %51 : vector<2x16x16xf32>
    %cst_24 = arith.constant dense<0.000000e+00> : vector<2x16xf32>
    %53 = vector.multi_reduction <add>, %52, %cst_24 [2] : vector<2x16x16xf32> to vector<2x16xf32>
    %54 = vector.shape_cast %53 : vector<2x16xf32> to vector<2x16x1xf32>
    %55 = tpu.reciprocal %54 {approx = true} : vector<2x16x1xf32> -> vector<2x16x1xf32>
    %56 = vector.broadcast %55 : vector<2x16x1xf32> to vector<2x16x16xf32>
    %57 = arith.mulf %52, %56 : vector<2x16x16xf32>
    "tpu.trace_start"() <{level = 10 : i32, message = "hqk,khd->qhd"}> : () -> ()
    %cst_25 = arith.constant dense<0.000000e+00> : vector<2x64x16xf32>
    %58 = tpu.matmul %44, %57, %cst_25 {dimension_numbers = #tpu.dot_dimension_numbers<[0], [2], [2], [1], [0, 1, 0, 2, 1, 1], [1], [0]>} : vector<16x2x64xf32>, vector<2x16x16xf32>, vector<2x64x16xf32> -> vector<2x64x16xf32>
    %59 = tpu.transpose %58, [2, 0, 1] : vector<2x64x16xf32> -> vector<16x2x64xf32>
    "tpu.trace_stop"() : () -> ()
    %60 = vector.shape_cast %59 : vector<16x2x64xf32> to vector<16x128xf32>
    %c0_26 = arith.constant 0 : index
    %c0_27 = arith.constant 0 : index
    %c0_28 = arith.constant 0 : index
    %61 = vector.load %arg8[%c0_26, %c0_27, %c0_28] : memref<2x128x128xbf16, #tpu.memory_space<vmem>>, vector<1x128x128xbf16>
    %62 = vector.shape_cast %61 : vector<1x128x128xbf16> to vector<128x128xbf16>
    %c0_29 = arith.constant 0 : index
    %c0_30 = arith.constant 0 : index
    %c0_31 = arith.constant 0 : index
    %63 = vector.load %arg9[%c0_29, %c0_30, %c0_31] : memref<2x1x128xf32, #tpu.memory_space<vmem>>, vector<1x1x128xf32>
    %64 = vector.shape_cast %63 : vector<1x1x128xf32> to vector<1x128xf32>
    %65 = arith.truncf %60 : vector<16x128xf32> to vector<16x128xbf16>
    %cst_32 = arith.constant dense<0.000000e+00> : vector<16x128xf32>
    %66 = tpu.matmul %65, %62, %cst_32 {dimension_numbers = #tpu.dot_dimension_numbers<[1], [0], [0], [1], [0, 0, 1, 1], [], []>} : vector<16x128xbf16>, vector<128x128xbf16>, vector<16x128xf32> -> vector<16x128xf32>
    %67 = vector.broadcast %64 : vector<1x128xf32> to vector<16x128xf32>
    %68 = arith.addf %66, %67 : vector<16x128xf32>
    %69 = arith.addf %30, %68 : vector<16x128xf32>
    %c0_33 = arith.constant 0 : index
    %c0_34 = arith.constant 0 : index
    %c0_35 = arith.constant 0 : index
    %70 = vector.load %arg10[%c0_33, %c0_34, %c0_35] : memref<2x1x128xf32, #tpu.memory_space<vmem>>, vector<1x1x128xf32>
    %71 = vector.shape_cast %70 : vector<1x1x128xf32> to vector<1x128xf32>
    %c0_36 = arith.constant 0 : index
    %c0_37 = arith.constant 0 : index
    %c0_38 = arith.constant 0 : index
    %72 = vector.load %arg11[%c0_36, %c0_37, %c0_38] : memref<2x1x128xf32, #tpu.memory_space<vmem>>, vector<1x1x128xf32>
    %73 = vector.shape_cast %72 : vector<1x1x128xf32> to vector<1x128xf32>
    %cst_39 = arith.constant dense<0.000000e+00> : vector<16xf32>
    %74 = vector.multi_reduction <add>, %69, %cst_39 [1] : vector<16x128xf32> to vector<16xf32>
    %75 = vector.shape_cast %74 : vector<16xf32> to vector<16x1xf32>
    %cst_40 = arith.constant 1.280000e+02 : f32
    %76 = vector.broadcast %cst_40 : f32 to vector<16x1xf32>
    %77 = arith.divf %75, %76 : vector<16x1xf32>
    %78 = vector.broadcast %77 : vector<16x1xf32> to vector<16x128xf32>
    %79 = arith.subf %69, %78 : vector<16x128xf32>
    %80 = arith.mulf %79, %79 : vector<16x128xf32>
    %cst_41 = arith.constant dense<0.000000e+00> : vector<16xf32>
    %81 = vector.multi_reduction <add>, %80, %cst_41 [1] : vector<16x128xf32> to vector<16xf32>
    %82 = vector.shape_cast %81 : vector<16xf32> to vector<16x1xf32>
    %cst_42 = arith.constant 1.280000e+02 : f32
    %83 = vector.broadcast %cst_42 : f32 to vector<16x1xf32>
    %84 = arith.divf %82, %83 : vector<16x1xf32>
    %85 = vector.broadcast %77 : vector<16x1xf32> to vector<16x128xf32>
    %86 = arith.subf %69, %85 : vector<16x128xf32>
    %cst_43 = arith.constant 9.99999996E-13 : f32
    %87 = vector.broadcast %cst_43 : f32 to vector<16x1xf32>
    %88 = arith.addf %84, %87 : vector<16x1xf32>
    %89 = math.rsqrt %88 : vector<16x1xf32>
    %90 = vector.broadcast %89 : vector<16x1xf32> to vector<16x128xf32>
    %91 = arith.mulf %86, %90 : vector<16x128xf32>
    %92 = vector.broadcast %71 : vector<1x128xf32> to vector<16x128xf32>
    %93 = arith.mulf %91, %92 : vector<16x128xf32>
    %94 = vector.broadcast %73 : vector<1x128xf32> to vector<16x128xf32>
    %95 = arith.addf %93, %94 : vector<16x128xf32>
    %c0_44 = arith.constant 0 : index
    %c0_45 = arith.constant 0 : index
    %c0_46 = arith.constant 0 : index
    %96 = vector.load %arg12[%c0_44, %c0_45, %c0_46] : memref<2x128x256xbf16, #tpu.memory_space<vmem>>, vector<1x128x256xbf16>
    %97 = vector.shape_cast %96 : vector<1x128x256xbf16> to vector<128x256xbf16>
    %c0_47 = arith.constant 0 : index
    %c0_48 = arith.constant 0 : index
    %c0_49 = arith.constant 0 : index
    %98 = vector.load %arg13[%c0_47, %c0_48, %c0_49] : memref<2x1x256xf32, #tpu.memory_space<vmem>>, vector<1x1x256xf32>
    %99 = vector.shape_cast %98 : vector<1x1x256xf32> to vector<1x256xf32>
    %100 = arith.truncf %95 : vector<16x128xf32> to vector<16x128xbf16>
    %cst_50 = arith.constant dense<0.000000e+00> : vector<16x256xf32>
    %101 = tpu.matmul %100, %97, %cst_50 {dimension_numbers = #tpu.dot_dimension_numbers<[1], [0], [0], [1], [0, 0, 1, 1], [], []>} : vector<16x128xbf16>, vector<128x256xbf16>, vector<16x256xf32> -> vector<16x256xf32>
    %102 = vector.broadcast %99 : vector<1x256xf32> to vector<16x256xf32>
    %103 = arith.addf %101, %102 : vector<16x256xf32>
    %104 = arith.mulf %103, %103 : vector<16x256xf32>
    %105 = arith.mulf %103, %104 : vector<16x256xf32>
    %cst_51 = arith.constant 4.471500e-02 : f32
    %106 = vector.broadcast %cst_51 : f32 to vector<16x256xf32>
    %107 = arith.mulf %106, %105 : vector<16x256xf32>
    %108 = arith.addf %103, %107 : vector<16x256xf32>
    %cst_52 = arith.constant 0.797884583 : f32
    %109 = vector.broadcast %cst_52 : f32 to vector<16x256xf32>
    %110 = arith.mulf %109, %108 : vector<16x256xf32>
    %111 = math.tanh %110 : vector<16x256xf32>
    %cst_53 = arith.constant 1.000000e+00 : f32
    %112 = vector.broadcast %cst_53 : f32 to vector<16x256xf32>
    %113 = arith.addf %112, %111 : vector<16x256xf32>
    %cst_54 = arith.constant 5.000000e-01 : f32
    %114 = vector.broadcast %cst_54 : f32 to vector<16x256xf32>
    %115 = arith.mulf %114, %113 : vector<16x256xf32>
    %116 = arith.mulf %103, %115 : vector<16x256xf32>
    %c0_55 = arith.constant 0 : index
    %c0_56 = arith.constant 0 : index
    %c0_57 = arith.constant 0 : index
    %117 = vector.load %arg14[%c0_55, %c0_56, %c0_57] : memref<2x256x128xbf16, #tpu.memory_space<vmem>>, vector<1x256x128xbf16>
    %118 = vector.shape_cast %117 : vector<1x256x128xbf16> to vector<256x128xbf16>
    %c0_58 = arith.constant 0 : index
    %c0_59 = arith.constant 0 : index
    %c0_60 = arith.constant 0 : index
    %119 = vector.load %arg15[%c0_58, %c0_59, %c0_60] : memref<2x1x128xf32, #tpu.memory_space<vmem>>, vector<1x1x128xf32>
    %120 = vector.shape_cast %119 : vector<1x1x128xf32> to vector<1x128xf32>
    %121 = arith.truncf %116 : vector<16x256xf32> to vector<16x256xbf16>
    %cst_61 = arith.constant dense<0.000000e+00> : vector<16x128xf32>
    %122 = tpu.matmul %121, %118, %cst_61 {dimension_numbers = #tpu.dot_dimension_numbers<[1], [0], [0], [1], [0, 0, 1, 1], [], []>} : vector<16x256xbf16>, vector<256x128xbf16>, vector<16x128xf32> -> vector<16x128xf32>
    %123 = vector.broadcast %120 : vector<1x128xf32> to vector<16x128xf32>
    %124 = arith.addf %122, %123 : vector<16x128xf32>
    %125 = arith.addf %95, %124 : vector<16x128xf32>
    %c0_62 = arith.constant 0 : index
    %c0_63 = arith.constant 0 : index
    %c0_64 = arith.constant 0 : index
    %126 = vector.load %arg16[%c0_62, %c0_63, %c0_64] : memref<2x1x128xf32, #tpu.memory_space<vmem>>, vector<1x1x128xf32>
    %127 = vector.shape_cast %126 : vector<1x1x128xf32> to vector<1x128xf32>
    %c0_65 = arith.constant 0 : index
    %c0_66 = arith.constant 0 : index
    %c0_67 = arith.constant 0 : index
    %128 = vector.load %arg17[%c0_65, %c0_66, %c0_67] : memref<2x1x128xf32, #tpu.memory_space<vmem>>, vector<1x1x128xf32>
    %129 = vector.shape_cast %128 : vector<1x1x128xf32> to vector<1x128xf32>
    %cst_68 = arith.constant dense<0.000000e+00> : vector<16xf32>
    %130 = vector.multi_reduction <add>, %125, %cst_68 [1] : vector<16x128xf32> to vector<16xf32>
    %131 = vector.shape_cast %130 : vector<16xf32> to vector<16x1xf32>
    %cst_69 = arith.constant 1.280000e+02 : f32
    %132 = vector.broadcast %cst_69 : f32 to vector<16x1xf32>
    %133 = arith.divf %131, %132 : vector<16x1xf32>
    %134 = vector.broadcast %133 : vector<16x1xf32> to vector<16x128xf32>
    %135 = arith.subf %125, %134 : vector<16x128xf32>
    %136 = arith.mulf %135, %135 : vector<16x128xf32>
    %cst_70 = arith.constant dense<0.000000e+00> : vector<16xf32>
    %137 = vector.multi_reduction <add>, %136, %cst_70 [1] : vector<16x128xf32> to vector<16xf32>
    %138 = vector.shape_cast %137 : vector<16xf32> to vector<16x1xf32>
    %cst_71 = arith.constant 1.280000e+02 : f32
    %139 = vector.broadcast %cst_71 : f32 to vector<16x1xf32>
    %140 = arith.divf %138, %139 : vector<16x1xf32>
    %141 = vector.broadcast %133 : vector<16x1xf32> to vector<16x128xf32>
    %142 = arith.subf %125, %141 : vector<16x128xf32>
    %cst_72 = arith.constant 9.99999996E-13 : f32
    %143 = vector.broadcast %cst_72 : f32 to vector<16x1xf32>
    %144 = arith.addf %140, %143 : vector<16x1xf32>
    %145 = math.rsqrt %144 : vector<16x1xf32>
    %146 = vector.broadcast %145 : vector<16x1xf32> to vector<16x128xf32>
    %147 = arith.mulf %142, %146 : vector<16x128xf32>
    %148 = vector.broadcast %127 : vector<1x128xf32> to vector<16x128xf32>
    %149 = arith.mulf %147, %148 : vector<16x128xf32>
    %150 = vector.broadcast %129 : vector<1x128xf32> to vector<16x128xf32>
    %151 = arith.addf %149, %150 : vector<16x128xf32>
    %c1 = arith.constant 1 : index
    %c0_73 = arith.constant 0 : index
    %c0_74 = arith.constant 0 : index
    %152 = vector.load %arg6[%c1, %c0_73, %c0_74] : memref<2x128x384xbf16, #tpu.memory_space<vmem>>, vector<1x128x384xbf16>
    %153 = vector.shape_cast %152 : vector<1x128x384xbf16> to vector<128x384xbf16>
    %c1_75 = arith.constant 1 : index
    %c0_76 = arith.constant 0 : index
    %c0_77 = arith.constant 0 : index
    %154 = vector.load %arg7[%c1_75, %c0_76, %c0_77] : memref<2x1x384xf32, #tpu.memory_space<vmem>>, vector<1x1x384xf32>
    %155 = vector.shape_cast %154 : vector<1x1x384xf32> to vector<1x384xf32>
    %156 = arith.truncf %151 : vector<16x128xf32> to vector<16x128xbf16>
    %cst_78 = arith.constant dense<0.000000e+00> : vector<16x384xf32>
    %157 = tpu.matmul %156, %153, %cst_78 {dimension_numbers = #tpu.dot_dimension_numbers<[1], [0], [0], [1], [0, 0, 1, 1], [], []>} : vector<16x128xbf16>, vector<128x384xbf16>, vector<16x384xf32> -> vector<16x384xf32>
    %158 = vector.broadcast %155 : vector<1x384xf32> to vector<16x384xf32>
    %159 = arith.addf %157, %158 : vector<16x384xf32>
    %160 = vector.extract_strided_slice %159 {offsets = [0, 0], sizes = [16, 128], strides = [1, 1]} : vector<16x384xf32> to vector<16x128xf32>
    %161 = vector.shape_cast %160 : vector<16x128xf32> to vector<16x2x64xf32>
    %162 = vector.extract_strided_slice %159 {offsets = [0, 128], sizes = [16, 128], strides = [1, 1]} : vector<16x384xf32> to vector<16x128xf32>
    %163 = vector.shape_cast %162 : vector<16x128xf32> to vector<16x2x64xf32>
    %164 = vector.extract_strided_slice %159 {offsets = [0, 256], sizes = [16, 128], strides = [1, 1]} : vector<16x384xf32> to vector<16x128xf32>
    %165 = vector.shape_cast %164 : vector<16x128xf32> to vector<16x2x64xf32>
    "tpu.trace_start"() <{level = 10 : i32, message = "qhd,khd->hqk"}> : () -> ()
    %cst_79 = arith.constant dense<0.000000e+00> : vector<2x16x16xf32>
    %166 = tpu.matmul %161, %163, %cst_79 {dimension_numbers = #tpu.dot_dimension_numbers<[2], [2], [0], [0], [0, 1, 0, 0, 1, 0], [1], [1]>} : vector<16x2x64xf32>, vector<16x2x64xf32>, vector<2x16x16xf32> -> vector<2x16x16xf32>
    "tpu.trace_stop"() : () -> ()
    %cst_80 = arith.constant 1.250000e-01 : f32
    %167 = vector.broadcast %cst_80 : f32 to vector<2x16x16xf32>
    %168 = arith.mulf %166, %167 : vector<2x16x16xf32>
    %cst_81 = arith.constant dense<0xFF800000> : vector<2x16xf32>
    %169 = vector.multi_reduction <maximumf>, %168, %cst_81 [2] : vector<2x16x16xf32> to vector<2x16xf32>
    %170 = vector.shape_cast %169 : vector<2x16xf32> to vector<2x16x1xf32>
    %171 = vector.broadcast %170 : vector<2x16x1xf32> to vector<2x16x16xf32>
    %172 = arith.subf %168, %171 : vector<2x16x16xf32>
    %173 = math.exp %172 : vector<2x16x16xf32>
    %cst_82 = arith.constant dense<0.000000e+00> : vector<2x16xf32>
    %174 = vector.multi_reduction <add>, %173, %cst_82 [2] : vector<2x16x16xf32> to vector<2x16xf32>
    %175 = vector.shape_cast %174 : vector<2x16xf32> to vector<2x16x1xf32>
    %176 = tpu.reciprocal %175 {approx = true} : vector<2x16x1xf32> -> vector<2x16x1xf32>
    %177 = vector.broadcast %176 : vector<2x16x1xf32> to vector<2x16x16xf32>
    %178 = arith.mulf %173, %177 : vector<2x16x16xf32>
    "tpu.trace_start"() <{level = 10 : i32, message = "hqk,khd->qhd"}> : () -> ()
    %cst_83 = arith.constant dense<0.000000e+00> : vector<2x64x16xf32>
    %179 = tpu.matmul %165, %178, %cst_83 {dimension_numbers = #tpu.dot_dimension_numbers<[0], [2], [2], [1], [0, 1, 0, 2, 1, 1], [1], [0]>} : vector<16x2x64xf32>, vector<2x16x16xf32>, vector<2x64x16xf32> -> vector<2x64x16xf32>
    %180 = tpu.transpose %179, [2, 0, 1] : vector<2x64x16xf32> -> vector<16x2x64xf32>
    "tpu.trace_stop"() : () -> ()
    %181 = vector.shape_cast %180 : vector<16x2x64xf32> to vector<16x128xf32>
    %c1_84 = arith.constant 1 : index
    %c0_85 = arith.constant 0 : index
    %c0_86 = arith.constant 0 : index
    %182 = vector.load %arg8[%c1_84, %c0_85, %c0_86] : memref<2x128x128xbf16, #tpu.memory_space<vmem>>, vector<1x128x128xbf16>
    %183 = vector.shape_cast %182 : vector<1x128x128xbf16> to vector<128x128xbf16>
    %c1_87 = arith.constant 1 : index
    %c0_88 = arith.constant 0 : index
    %c0_89 = arith.constant 0 : index
    %184 = vector.load %arg9[%c1_87, %c0_88, %c0_89] : memref<2x1x128xf32, #tpu.memory_space<vmem>>, vector<1x1x128xf32>
    %185 = vector.shape_cast %184 : vector<1x1x128xf32> to vector<1x128xf32>
    %186 = arith.truncf %181 : vector<16x128xf32> to vector<16x128xbf16>
    %cst_90 = arith.constant dense<0.000000e+00> : vector<16x128xf32>
    %187 = tpu.matmul %186, %183, %cst_90 {dimension_numbers = #tpu.dot_dimension_numbers<[1], [0], [0], [1], [0, 0, 1, 1], [], []>} : vector<16x128xbf16>, vector<128x128xbf16>, vector<16x128xf32> -> vector<16x128xf32>
    %188 = vector.broadcast %185 : vector<1x128xf32> to vector<16x128xf32>
    %189 = arith.addf %187, %188 : vector<16x128xf32>
    %190 = arith.addf %151, %189 : vector<16x128xf32>
    %c1_91 = arith.constant 1 : index
    %c0_92 = arith.constant 0 : index
    %c0_93 = arith.constant 0 : index
    %191 = vector.load %arg10[%c1_91, %c0_92, %c0_93] : memref<2x1x128xf32, #tpu.memory_space<vmem>>, vector<1x1x128xf32>
    %192 = vector.shape_cast %191 : vector<1x1x128xf32> to vector<1x128xf32>
    %c1_94 = arith.constant 1 : index
    %c0_95 = arith.constant 0 : index
    %c0_96 = arith.constant 0 : index
    %193 = vector.load %arg11[%c1_94, %c0_95, %c0_96] : memref<2x1x128xf32, #tpu.memory_space<vmem>>, vector<1x1x128xf32>
    %194 = vector.shape_cast %193 : vector<1x1x128xf32> to vector<1x128xf32>
    %cst_97 = arith.constant dense<0.000000e+00> : vector<16xf32>
    %195 = vector.multi_reduction <add>, %190, %cst_97 [1] : vector<16x128xf32> to vector<16xf32>
    %196 = vector.shape_cast %195 : vector<16xf32> to vector<16x1xf32>
    %cst_98 = arith.constant 1.280000e+02 : f32
    %197 = vector.broadcast %cst_98 : f32 to vector<16x1xf32>
    %198 = arith.divf %196, %197 : vector<16x1xf32>
    %199 = vector.broadcast %198 : vector<16x1xf32> to vector<16x128xf32>
    %200 = arith.subf %190, %199 : vector<16x128xf32>
    %201 = arith.mulf %200, %200 : vector<16x128xf32>
    %cst_99 = arith.constant dense<0.000000e+00> : vector<16xf32>
    %202 = vector.multi_reduction <add>, %201, %cst_99 [1] : vector<16x128xf32> to vector<16xf32>
    %203 = vector.shape_cast %202 : vector<16xf32> to vector<16x1xf32>
    %cst_100 = arith.constant 1.280000e+02 : f32
    %204 = vector.broadcast %cst_100 : f32 to vector<16x1xf32>
    %205 = arith.divf %203, %204 : vector<16x1xf32>
    %206 = vector.broadcast %198 : vector<16x1xf32> to vector<16x128xf32>
    %207 = arith.subf %190, %206 : vector<16x128xf32>
    %cst_101 = arith.constant 9.99999996E-13 : f32
    %208 = vector.broadcast %cst_101 : f32 to vector<16x1xf32>
    %209 = arith.addf %205, %208 : vector<16x1xf32>
    %210 = math.rsqrt %209 : vector<16x1xf32>
    %211 = vector.broadcast %210 : vector<16x1xf32> to vector<16x128xf32>
    %212 = arith.mulf %207, %211 : vector<16x128xf32>
    %213 = vector.broadcast %192 : vector<1x128xf32> to vector<16x128xf32>
    %214 = arith.mulf %212, %213 : vector<16x128xf32>
    %215 = vector.broadcast %194 : vector<1x128xf32> to vector<16x128xf32>
    %216 = arith.addf %214, %215 : vector<16x128xf32>
    %c1_102 = arith.constant 1 : index
    %c0_103 = arith.constant 0 : index
    %c0_104 = arith.constant 0 : index
    %217 = vector.load %arg12[%c1_102, %c0_103, %c0_104] : memref<2x128x256xbf16, #tpu.memory_space<vmem>>, vector<1x128x256xbf16>
    %218 = vector.shape_cast %217 : vector<1x128x256xbf16> to vector<128x256xbf16>
    %c1_105 = arith.constant 1 : index
    %c0_106 = arith.constant 0 : index
    %c0_107 = arith.constant 0 : index
    %219 = vector.load %arg13[%c1_105, %c0_106, %c0_107] : memref<2x1x256xf32, #tpu.memory_space<vmem>>, vector<1x1x256xf32>
    %220 = vector.shape_cast %219 : vector<1x1x256xf32> to vector<1x256xf32>
    %221 = arith.truncf %216 : vector<16x128xf32> to vector<16x128xbf16>
    %cst_108 = arith.constant dense<0.000000e+00> : vector<16x256xf32>
    %222 = tpu.matmul %221, %218, %cst_108 {dimension_numbers = #tpu.dot_dimension_numbers<[1], [0], [0], [1], [0, 0, 1, 1], [], []>} : vector<16x128xbf16>, vector<128x256xbf16>, vector<16x256xf32> -> vector<16x256xf32>
    %223 = vector.broadcast %220 : vector<1x256xf32> to vector<16x256xf32>
    %224 = arith.addf %222, %223 : vector<16x256xf32>
    %225 = arith.mulf %224, %224 : vector<16x256xf32>
    %226 = arith.mulf %224, %225 : vector<16x256xf32>
    %cst_109 = arith.constant 4.471500e-02 : f32
    %227 = vector.broadcast %cst_109 : f32 to vector<16x256xf32>
    %228 = arith.mulf %227, %226 : vector<16x256xf32>
    %229 = arith.addf %224, %228 : vector<16x256xf32>
    %cst_110 = arith.constant 0.797884583 : f32
    %230 = vector.broadcast %cst_110 : f32 to vector<16x256xf32>
    %231 = arith.mulf %230, %229 : vector<16x256xf32>
    %232 = math.tanh %231 : vector<16x256xf32>
    %cst_111 = arith.constant 1.000000e+00 : f32
    %233 = vector.broadcast %cst_111 : f32 to vector<16x256xf32>
    %234 = arith.addf %233, %232 : vector<16x256xf32>
    %cst_112 = arith.constant 5.000000e-01 : f32
    %235 = vector.broadcast %cst_112 : f32 to vector<16x256xf32>
    %236 = arith.mulf %235, %234 : vector<16x256xf32>
    %237 = arith.mulf %224, %236 : vector<16x256xf32>
    %c1_113 = arith.constant 1 : index
    %c0_114 = arith.constant 0 : index
    %c0_115 = arith.constant 0 : index
    %238 = vector.load %arg14[%c1_113, %c0_114, %c0_115] : memref<2x256x128xbf16, #tpu.memory_space<vmem>>, vector<1x256x128xbf16>
    %239 = vector.shape_cast %238 : vector<1x256x128xbf16> to vector<256x128xbf16>
    %c1_116 = arith.constant 1 : index
    %c0_117 = arith.constant 0 : index
    %c0_118 = arith.constant 0 : index
    %240 = vector.load %arg15[%c1_116, %c0_117, %c0_118] : memref<2x1x128xf32, #tpu.memory_space<vmem>>, vector<1x1x128xf32>
    %241 = vector.shape_cast %240 : vector<1x1x128xf32> to vector<1x128xf32>
    %242 = arith.truncf %237 : vector<16x256xf32> to vector<16x256xbf16>
    %cst_119 = arith.constant dense<0.000000e+00> : vector<16x128xf32>
    %243 = tpu.matmul %242, %239, %cst_119 {dimension_numbers = #tpu.dot_dimension_numbers<[1], [0], [0], [1], [0, 0, 1, 1], [], []>} : vector<16x256xbf16>, vector<256x128xbf16>, vector<16x128xf32> -> vector<16x128xf32>
    %244 = vector.broadcast %241 : vector<1x128xf32> to vector<16x128xf32>
    %245 = arith.addf %243, %244 : vector<16x128xf32>
    %246 = arith.addf %216, %245 : vector<16x128xf32>
    %c1_120 = arith.constant 1 : index
    %c0_121 = arith.constant 0 : index
    %c0_122 = arith.constant 0 : index
    %247 = vector.load %arg16[%c1_120, %c0_121, %c0_122] : memref<2x1x128xf32, #tpu.memory_space<vmem>>, vector<1x1x128xf32>
    %248 = vector.shape_cast %247 : vector<1x1x128xf32> to vector<1x128xf32>
    %c1_123 = arith.constant 1 : index
    %c0_124 = arith.constant 0 : index
    %c0_125 = arith.constant 0 : index
    %249 = vector.load %arg17[%c1_123, %c0_124, %c0_125] : memref<2x1x128xf32, #tpu.memory_space<vmem>>, vector<1x1x128xf32>
    %250 = vector.shape_cast %249 : vector<1x1x128xf32> to vector<1x128xf32>
    %cst_126 = arith.constant dense<0.000000e+00> : vector<16xf32>
    %251 = vector.multi_reduction <add>, %246, %cst_126 [1] : vector<16x128xf32> to vector<16xf32>
    %252 = vector.shape_cast %251 : vector<16xf32> to vector<16x1xf32>
    %cst_127 = arith.constant 1.280000e+02 : f32
    %253 = vector.broadcast %cst_127 : f32 to vector<16x1xf32>
    %254 = arith.divf %252, %253 : vector<16x1xf32>
    %255 = vector.broadcast %254 : vector<16x1xf32> to vector<16x128xf32>
    %256 = arith.subf %246, %255 : vector<16x128xf32>
    %257 = arith.mulf %256, %256 : vector<16x128xf32>
    %cst_128 = arith.constant dense<0.000000e+00> : vector<16xf32>
    %258 = vector.multi_reduction <add>, %257, %cst_128 [1] : vector<16x128xf32> to vector<16xf32>
    %259 = vector.shape_cast %258 : vector<16xf32> to vector<16x1xf32>
    %cst_129 = arith.constant 1.280000e+02 : f32
    %260 = vector.broadcast %cst_129 : f32 to vector<16x1xf32>
    %261 = arith.divf %259, %260 : vector<16x1xf32>
    %262 = vector.broadcast %254 : vector<16x1xf32> to vector<16x128xf32>
    %263 = arith.subf %246, %262 : vector<16x128xf32>
    %cst_130 = arith.constant 9.99999996E-13 : f32
    %264 = vector.broadcast %cst_130 : f32 to vector<16x1xf32>
    %265 = arith.addf %261, %264 : vector<16x1xf32>
    %266 = math.rsqrt %265 : vector<16x1xf32>
    %267 = vector.broadcast %266 : vector<16x1xf32> to vector<16x128xf32>
    %268 = arith.mulf %263, %267 : vector<16x128xf32>
    %269 = vector.broadcast %248 : vector<1x128xf32> to vector<16x128xf32>
    %270 = arith.mulf %268, %269 : vector<16x128xf32>
    %271 = vector.broadcast %250 : vector<1x128xf32> to vector<16x128xf32>
    %272 = arith.addf %270, %271 : vector<16x128xf32>
    %c0_131 = arith.constant 0 : index
    %c0_132 = arith.constant 0 : index
    %273 = vector.load %arg18[%c0_131, %c0_132] : memref<128x128xbf16, #tpu.memory_space<vmem>>, vector<128x128xbf16>
    %c0_133 = arith.constant 0 : index
    %c0_134 = arith.constant 0 : index
    %274 = vector.load %arg19[%c0_133, %c0_134] : memref<1x128xf32, #tpu.memory_space<vmem>>, vector<1x128xf32>
    %275 = arith.truncf %272 : vector<16x128xf32> to vector<16x128xbf16>
    %cst_135 = arith.constant dense<0.000000e+00> : vector<16x128xf32>
    %276 = tpu.matmul %275, %273, %cst_135 {dimension_numbers = #tpu.dot_dimension_numbers<[1], [0], [0], [1], [0, 0, 1, 1], [], []>} : vector<16x128xbf16>, vector<128x128xbf16>, vector<16x128xf32> -> vector<16x128xf32>
    %277 = vector.broadcast %274 : vector<1x128xf32> to vector<16x128xf32>
    %278 = arith.addf %276, %277 : vector<16x128xf32>
    %c0_136 = arith.constant 0 : index
    %c0_137 = arith.constant 0 : index
    %c0_138 = arith.constant 0 : index
    %279 = vector.load %arg20[%c0_136, %c0_137, %c0_138] : memref<1x16x128xf32, #tpu.memory_space<vmem>>, vector<1x16x128xf32>
    %280 = vector.shape_cast %279 : vector<1x16x128xf32> to vector<16x128xf32>
    %281 = vector.shape_cast %278 : vector<16x128xf32> to vector<1x16x128xf32>
    tpu.vector_store %arg20[%c0_136, %c0_137, %c0_138], %281 {strides = array<i32>} : memref<1x16x128xf32, #tpu.memory_space<vmem>>, vector<1x16x128xf32>,
    return
  }
  func.func @transform_0(%arg0: i32) -> (i32, i32, i32) {
    %c0_i32 = arith.constant 0 : i32
    %c0_i32_0 = arith.constant 0 : i32
    %c0_i32_1 = arith.constant 0 : i32
    return %arg0, %c0_i32, %c0_i32_0 : i32, i32, i32
  }
  func.func @transform_1(%arg0: i32) -> (i32, i32) {
    %c0_i32 = arith.constant 0 : i32
    %c0_i32_0 = arith.constant 0 : i32
    %c0_i32_1 = arith.constant 0 : i32
    return %c0_i32, %c0_i32_0 : i32, i32
  }
  func.func @transform_2(%arg0: i32) -> (i32, i32) {
    %c0_i32 = arith.constant 0 : i32
    %c0_i32_0 = arith.constant 0 : i32
    %c0_i32_1 = arith.constant 0 : i32
    return %c0_i32, %c0_i32_0 : i32, i32
  }
  func.func @transform_3(%arg0: i32) -> (i32, i32) {
    %c0_i32 = arith.constant 0 : i32
    %c0_i32_0 = arith.constant 0 : i32
    %c0_i32_1 = arith.constant 0 : i32
    return %c0_i32, %c0_i32_0 : i32, i32
  }
  func.func @transform_4(%arg0: i32) -> (i32, i32) {
    %c0_i32 = arith.constant 0 : i32
    %c0_i32_0 = arith.constant 0 : i32
    %c0_i32_1 = arith.constant 0 : i32
    return %c0_i32, %c0_i32_0 : i32, i32
  }
  func.func @transform_5(%arg0: i32) -> (i32, i32, i32) {
    %c0_i32 = arith.constant 0 : i32
    %c0_i32_0 = arith.constant 0 : i32
    %c0_i32_1 = arith.constant 0 : i32
    %c0_i32_2 = arith.constant 0 : i32
    return %c0_i32, %c0_i32_0, %c0_i32_1 : i32, i32, i32
  }
  func.func @transform_6(%arg0: i32) -> (i32, i32, i32) {
    %c0_i32 = arith.constant 0 : i32
    %c0_i32_0 = arith.constant 0 : i32
    %c0_i32_1 = arith.constant 0 : i32
    %c0_i32_2 = arith.constant 0 : i32
    return %c0_i32, %c0_i32_0, %c0_i32_1 : i32, i32, i32
  }
  func.func @transform_7(%arg0: i32) -> (i32, i32, i32) {
    %c0_i32 = arith.constant 0 : i32
    %c0_i32_0 = arith.constant 0 : i32
    %c0_i32_1 = arith.constant 0 : i32
    %c0_i32_2 = arith.constant 0 : i32
    return %c0_i32, %c0_i32_0, %c0_i32_1 : i32, i32, i32
  }
  func.func @transform_8(%arg0: i32) -> (i32, i32, i32) {
    %c0_i32 = arith.constant 0 : i32
    %c0_i32_0 = arith.constant 0 : i32
    %c0_i32_1 = arith.constant 0 : i32
    %c0_i32_2 = arith.constant 0 : i32
    return %c0_i32, %c0_i32_0, %c0_i32_1 : i32, i32, i32
  }
  func.func @transform_9(%arg0: i32) -> (i32, i32, i32) {
    %c0_i32 = arith.constant 0 : i32
    %c0_i32_0 = arith.constant 0 : i32
    %c0_i32_1 = arith.constant 0 : i32
    %c0_i32_2 = arith.constant 0 : i32
    return %c0_i32, %c0_i32_0, %c0_i32_1 : i32, i32, i32
  }
  func.func @transform_10(%arg0: i32) -> (i32, i32, i32) {
    %c0_i32 = arith.constant 0 : i32
    %c0_i32_0 = arith.constant 0 : i32
    %c0_i32_1 = arith.constant 0 : i32
    %c0_i32_2 = arith.constant 0 : i32
    return %c0_i32, %c0_i32_0, %c0_i32_1 : i32, i32, i32
  }
  func.func @transform_11(%arg0: i32) -> (i32, i32, i32) {
    %c0_i32 = arith.constant 0 : i32
    %c0_i32_0 = arith.constant 0 : i32
    %c0_i32_1 = arith.constant 0 : i32
    %c0_i32_2 = arith.constant 0 : i32
    return %c0_i32, %c0_i32_0, %c0_i32_1 : i32, i32, i32
  }
  func.func @transform_12(%arg0: i32) -> (i32, i32, i32) {
    %c0_i32 = arith.constant 0 : i32
    %c0_i32_0 = arith.constant 0 : i32
    %c0_i32_1 = arith.constant 0 : i32
    %c0_i32_2 = arith.constant 0 : i32
    return %c0_i32, %c0_i32_0, %c0_i32_1 : i32, i32, i32
  }
  func.func @transform_13(%arg0: i32) -> (i32, i32, i32) {
    %c0_i32 = arith.constant 0 : i32
    %c0_i32_0 = arith.constant 0 : i32
    %c0_i32_1 = arith.constant 0 : i32
    %c0_i32_2 = arith.constant 0 : i32
    return %c0_i32, %c0_i32_0, %c0_i32_1 : i32, i32, i32
  }
  func.func @transform_14(%arg0: i32) -> (i32, i32, i32) {
    %c0_i32 = arith.constant 0 : i32
    %c0_i32_0 = arith.constant 0 : i32
    %c0_i32_1 = arith.constant 0 : i32
    %c0_i32_2 = arith.constant 0 : i32
    return %c0_i32, %c0_i32_0, %c0_i32_1 : i32, i32, i32
  }
  func.func @transform_15(%arg0: i32) -> (i32, i32, i32) {
    %c0_i32 = arith.constant 0 : i32
    %c0_i32_0 = arith.constant 0 : i32
    %c0_i32_1 = arith.constant 0 : i32
    %c0_i32_2 = arith.constant 0 : i32
    return %c0_i32, %c0_i32_0, %c0_i32_1 : i32, i32, i32
  }
  func.func @transform_16(%arg0: i32) -> (i32, i32, i32) {
    %c0_i32 = arith.constant 0 : i32
    %c0_i32_0 = arith.constant 0 : i32
    %c0_i32_1 = arith.constant 0 : i32
    %c0_i32_2 = arith.constant 0 : i32
    return %c0_i32, %c0_i32_0, %c0_i32_1 : i32, i32, i32
  }
  func.func @transform_17(%arg0: i32) -> (i32, i32) {
    %c0_i32 = arith.constant 0 : i32
    %c0_i32_0 = arith.constant 0 : i32
    %c0_i32_1 = arith.constant 0 : i32
    return %c0_i32, %c0_i32_0 : i32, i32
  }
  func.func @transform_18(%arg0: i32) -> (i32, i32) {
    %c0_i32 = arith.constant 0 : i32
    %c0_i32_0 = arith.constant 0 : i32
    %c0_i32_1 = arith.constant 0 : i32
    return %c0_i32, %c0_i32_0 : i32, i32
  }
  func.func @transform_19(%arg0: i32) -> (i32, i32, i32) {
    %c0_i32 = arith.constant 0 : i32
    %c0_i32_0 = arith.constant 0 : i32
    %c0_i32_1 = arith.constant 0 : i32
    return %arg0, %c0_i32, %c0_i32_0 : i32, i32, i32
  }
}

</mosaic_0001>

<llo_original>
// kernel: forward.1
$region0: #{forward.1}
  #allocation0 [shape = 'u32[]', space=smem, size = 0x4, offset = 0x4, fixed_abs, tag = 'smem constant byte address 0x4 - core index']
  #allocation1 [shape = 'u32[144,128]{1,0:T(1,128)}', space=vmem, size = 0x12000, scoped, tag = 'internal scratch']
  %s0 = inlined_call_operand.vmem [shape: f32[2,16,128], index: 0, kind: input, shape index: {}]
  %s1 = inlined_call_operand.hbm [shape: f32[16,128], index: 1, kind: input, shape index: {}]
  %s2 = inlined_call_operand.vmem [shape: f32[1,128], index: 2, kind: input, shape index: {}]
  %s3 = inlined_call_operand.vmem [shape: f32[1,128], index: 3, kind: input, shape index: {}]
  %s4 = inlined_call_operand.vmem [shape: f32[1,128], index: 4, kind: input, shape index: {}]
  %s5 = inlined_call_operand.hbm [shape: bf16[2,128,384], index: 5, kind: input, shape index: {}]
  %s6 = inlined_call_operand.vmem [shape: f32[2,1,384], index: 6, kind: input, shape index: {}]
  %s7 = inlined_call_operand.vmem [shape: bf16[2,128,128], index: 7, kind: input, shape index: {}]
  %s8 = inlined_call_operand.vmem [shape: f32[2,1,128], index: 8, kind: input, shape index: {}]
  %s9 = inlined_call_operand.vmem [shape: f32[2,1,128], index: 9, kind: input, shape index: {}]
  %s10 = inlined_call_operand.vmem [shape: f32[2,1,128], index: 10, kind: input, shape index: {}]
  %s11 = inlined_call_operand.vmem [shape: bf16[2,128,256], index: 11, kind: input, shape index: {}]
  %s12 = inlined_call_operand.vmem [shape: f32[2,1,256], index: 12, kind: input, shape index: {}]
  %s13 = inlined_call_operand.hbm [shape: bf16[2,256,128], index: 13, kind: input, shape index: {}]
  %s14 = inlined_call_operand.vmem [shape: f32[2,1,128], index: 14, kind: input, shape index: {}]
  %s15 = inlined_call_operand.hbm [shape: f32[2,1,128], index: 15, kind: input, shape index: {}]
  %s16 = inlined_call_operand.vmem [shape: f32[2,1,128], index: 16, kind: input, shape index: {}]
  %s17 = inlined_call_operand.hbm [shape: bf16[128,128], index: 17, kind: input, shape index: {}]
  %s18 = inlined_call_operand.vmem [shape: f32[1,128], index: 18, kind: input, shape index: {}]
  %s19 = inlined_call_operand.vmem [shape: f32[2,16,128], index: 19, kind: output, shape index: {}]
  %s20 = sld [smem:[#allocation0]]
  $region129: #{forward.1} parent=0
    _
  %s22 = ssub.s32 1, %s20
  %s23 = scalar_select 0, %s22, %s20
  $region1: #{forward.1} parent=0
    #allocation2 [shape = 'u8[8192]{0}', space=vmem, size = 0x2000, scoped, tag = 'input window, operand 1, single buffered']
    #allocation3 [shape = 's32[2]{0}', space=sflag, size = 0x8, scoped, tag = 'scoped memory for forward.1']
    #allocation4 [shape = 'u8[196608]{0}', space=vmem, size = 0x30000, scoped, tag = 'input window, operand 5, single buffered']
    #allocation5 [shape = 's32[1]{0}', space=sflag, size = 0x4, scoped, tag = 'scoped memory for forward.1']
    #allocation6 [shape = 'u8[131072]{0}', space=vmem, size = 0x20000, scoped, tag = 'input window, operand 13, single buffered']
    #allocation7 [shape = 'u8[1024]{0}', space=vmem, size = 0x400, scoped, tag = 'input window, operand 15, single buffered']
    #allocation8 [shape = 's32[1]{0}', space=sflag, size = 0x4, scoped, tag = 'scoped memory for forward.1']
    #allocation9 [shape = 'u8[32768]{0}', space=vmem, size = 0x8000, scoped, tag = 'input window, operand 17, single buffered']
    %24 = vsyncpa [#allocation3], 0
    %25 = vsyncpa [#allocation5], 0
    %26 = vsyncpa [#allocation8], 0
    loop: start=0, step=1, limit=4
    $region2: #{forward.1} parent=1 // loop_pre_header
      _
    $region3: #{forward.1} parent=1 // loop_header
      %s28 = sphi 0, %s32
      %p29 = scmp.ge.s32.totalorder %s28, 4
      %s38 = sphi 0, %s40
      %s41 = sphi 0, %s38
      %s42 = sphi 0, %s41
      %s58 = sphi 0, %s42
      %s62 = sphi 0, %s62
      %s64 = sphi 0, %s62
      %s65 = sphi 0, %s64
      %s79 = sphi 0, %s65
      %s83 = sphi 0, %s83
      %s85 = sphi 0, %s83
      %s86 = sphi 0, %s85
      %s100 = sphi 0, %s86
      %s104 = sphi 0, %s104
      %s106 = sphi 0, %s104
      %s107 = sphi 0, %s106
      %s121 = sphi 0, %s107
      %s125 = sphi 0, %s125
      %s127 = sphi 0, %s125
      %s128 = sphi 0, %s127
      %s142 = sphi 0, %s128
      %s146 = sphi 0, %s146
      %s148 = sphi 0, %s146
      %s149 = sphi 0, %s148
      %s163 = sphi 0, %s149
      %s167 = sphi 0, %s167
      %s169 = sphi 0, %s167
      %s170 = sphi 0, %s169
      %s184 = sphi 0, %s170
      %s188 = sphi 0, %s188
      %s190 = sphi 0, %s188
      %s191 = sphi 0, %s190
      %s205 = sphi 0, %s191
      %s209 = sphi 0, %s209
      %s211 = sphi 0, %s209
      %s212 = sphi 0, %s211
      %s226 = sphi 0, %s212
      %s230 = sphi 0, %s230
      %s232 = sphi 0, %s230
      %s233 = sphi 0, %s232
      %s247 = sphi 0, %s233
      %s251 = sphi 0, %s251
      %s253 = sphi 0, %s251
      %s254 = sphi 0, %s253
      %s268 = sphi 0, %s254
      %s272 = sphi 0, %s272
      %s274 = sphi 0, %s272
      %s275 = sphi 0, %s274
      %s289 = sphi 0, %s275
      %s293 = sphi 0, %s293
      %s295 = sphi 0, %s293
      %s296 = sphi 0, %s295
      %s310 = sphi 0, %s296
      %s314 = sphi 0, %s314
      %s316 = sphi 0, %s314
      %s317 = sphi 0, %s316
      %s331 = sphi 0, %s317
      %s335 = sphi 0, %s335
      %s337 = sphi 0, %s335
      %s338 = sphi 0, %s337
      %s352 = sphi 0, %s338
      %s356 = sphi 0, %s356
      %s358 = sphi 0, %s356
      %s359 = sphi 0, %s358
      %s373 = sphi 0, %s359
      %s377 = sphi 0, %s377
      %s379 = sphi 0, %s377
      %s380 = sphi 0, %s379
      %s394 = sphi 0, %s380
      %s398 = sphi 0, %s398
      %s400 = sphi 0, %s398
      %s401 = sphi 0, %s400
      %s415 = sphi 0, %s401
      %s419 = sphi 0, %s419
      %s421 = sphi 0, %s419
      %s422 = sphi 0, %s421
      %s436 = sphi 0, %s422
      %s442 = sphi 0, %s444
      %s445 = sphi 0, %s442
      %s446 = sphi 0, %s445
      %s462 = sphi 0, %s446
    $region4: #{forward.1} parent=1 // loop_header_branch
      %31 = sbr.rel (%p29) target = $region8
    $region5: #{forward.1} parent=1 // loop_body
      %s33 = ssub.s32 %s28, 1
      %s34 = ssub.s32 %s28, 2
      %s35 = sadd.s32 %s28, 1
      %s36 = ssub.s32 %s28, %s35
      %p37 = scmp.eq.s32.totalorder %s36, 0
      %s39 = sadd.s32 %s38, 1
      %s40 = scalar_select %p37, %s38, %s39
      %p43 = pneg %p37
      %p44 = scmp.eq.s32.totalorder %s28, 1
      %p45 = por %p43, %p44
      %p46 = scmp.ne.s32.totalorder %s38, %s41
      %p47 = scmp.eq.s32.totalorder %s28, 0
      %p48 = por %p46, %p47
      %p49 = scmp.ne.s32.totalorder %s38, %s41
      %p50 = scmp.eq.s32.totalorder %s33, 1
      %p51 = por %p49, %p50
      %p52 = scmp.ne.s32.totalorder %s41, %s42
      %p53 = scmp.eq.s32.totalorder %s33, 0
      %p54 = por %p52, %p53
      %p55 = scmp.ne.s32.totalorder %s41, %s42
      %p56 = scmp.eq.s32.totalorder %s34, 1
      %p57 = por %p55, %p56
      %p59 = scmp.ne.s32.totalorder %s42, %s58
      %p60 = scmp.eq.s32.totalorder %s34, 0
      %p61 = por %p59, %p60
      %s63 = sadd.s32 %s62, 1
      %p66 = scmp.eq.s32.totalorder %s28, 1
      %p67 = scmp.ne.s32.totalorder %s62, %s64
      %p68 = scmp.eq.s32.totalorder %s28, 0
      %p69 = por %p67, %p68
      %p70 = scmp.ne.s32.totalorder %s62, %s64
      %p71 = scmp.eq.s32.totalorder %s33, 1
      %p72 = por %p70, %p71
      %p73 = scmp.ne.s32.totalorder %s64, %s65
      %p74 = scmp.eq.s32.totalorder %s33, 0
      %p75 = por %p73, %p74
      %p76 = scmp.ne.s32.totalorder %s64, %s65
      %p77 = scmp.eq.s32.totalorder %s34, 1
      %p78 = por %p76, %p77
      %p80 = scmp.ne.s32.totalorder %s65, %s79
      %p81 = scmp.eq.s32.totalorder %s34, 0
      %p82 = por %p80, %p81
      %s84 = sadd.s32 %s83, 1
      %p87 = scmp.eq.s32.totalorder %s28, 1
      %p88 = scmp.ne.s32.totalorder %s83, %s85
      %p89 = scmp.eq.s32.totalorder %s28, 0
      %p90 = por %p88, %p89
      %p91 = scmp.ne.s32.totalorder %s83, %s85
      %p92 = scmp.eq.s32.totalorder %s33, 1
      %p93 = por %p91, %p92
      %p94 = scmp.ne.s32.totalorder %s85, %s86
      %p95 = scmp.eq.s32.totalorder %s33, 0
      %p96 = por %p94, %p95
      %p97 = scmp.ne.s32.totalorder %s85, %s86
      %p98 = scmp.eq.s32.totalorder %s34, 1
      %p99 = por %p97, %p98
      %p101 = scmp.ne.s32.totalorder %s86, %s100
      %p102 = scmp.eq.s32.totalorder %s34, 0
      %p103 = por %p101, %p102
      %s105 = sadd.s32 %s104, 1
      %p108 = scmp.eq.s32.totalorder %s28, 1
      %p109 = scmp.ne.s32.totalorder %s104, %s106
      %p110 = scmp.eq.s32.totalorder %s28, 0
      %p111 = por %p109, %p110
      %p112 = scmp.ne.s32.totalorder %s104, %s106
      %p113 = scmp.eq.s32.totalorder %s33, 1
      %p114 = por %p112, %p113
      %p115 = scmp.ne.s32.totalorder %s106, %s107
      %p116 = scmp.eq.s32.totalorder %s33, 0
      %p117 = por %p115, %p116
      %p118 = scmp.ne.s32.totalorder %s106, %s107
      %p119 = scmp.eq.s32.totalorder %s34, 1
      %p120 = por %p118, %p119
      %p122 = scmp.ne.s32.totalorder %s107, %s121
      %p123 = scmp.eq.s32.totalorder %s34, 0
      %p124 = por %p122, %p123
      %s126 = sadd.s32 %s125, 1
      %p129 = scmp.eq.s32.totalorder %s28, 1
      %p130 = scmp.ne.s32.totalorder %s125, %s127
      %p131 = scmp.eq.s32.totalorder %s28, 0
      %p132 = por %p130, %p131
      %p133 = scmp.ne.s32.totalorder %s125, %s127
      %p134 = scmp.eq.s32.totalorder %s33, 1
      %p135 = por %p133, %p134
      %p136 = scmp.ne.s32.totalorder %s127, %s128
      %p137 = scmp.eq.s32.totalorder %s33, 0
      %p138 = por %p136, %p137
      %p139 = scmp.ne.s32.totalorder %s127, %s128
      %p140 = scmp.eq.s32.totalorder %s34, 1
      %p141 = por %p139, %p140
      %p143 = scmp.ne.s32.totalorder %s128, %s142
      %p144 = scmp.eq.s32.totalorder %s34, 0
      %p145 = por %p143, %p144
      %s147 = sadd.s32 %s146, 1
      %p150 = scmp.eq.s32.totalorder %s28, 1
      %p151 = scmp.ne.s32.totalorder %s146, %s148
      %p152 = scmp.eq.s32.totalorder %s28, 0
      %p153 = por %p151, %p152
      %p154 = scmp.ne.s32.totalorder %s146, %s148
      %p155 = scmp.eq.s32.totalorder %s33, 1
      %p156 = por %p154, %p155
      %p157 = scmp.ne.s32.totalorder %s148, %s149
      %p158 = scmp.eq.s32.totalorder %s33, 0
      %p159 = por %p157, %p158
      %p160 = scmp.ne.s32.totalorder %s148, %s149
      %p161 = scmp.eq.s32.totalorder %s34, 1
      %p162 = por %p160, %p161
      %p164 = scmp.ne.s32.totalorder %s149, %s163
      %p165 = scmp.eq.s32.totalorder %s34, 0
      %p166 = por %p164, %p165
      %s168 = sadd.s32 %s167, 1
      %p171 = scmp.eq.s32.totalorder %s28, 1
      %p172 = scmp.ne.s32.totalorder %s167, %s169
      %p173 = scmp.eq.s32.totalorder %s28, 0
      %p174 = por %p172, %p173
      %p175 = scmp.ne.s32.totalorder %s167, %s169
      %p176 = scmp.eq.s32.totalorder %s33, 1
      %p177 = por %p175, %p176
      %p178 = scmp.ne.s32.totalorder %s169, %s170
      %p179 = scmp.eq.s32.totalorder %s33, 0
      %p180 = por %p178, %p179
      %p181 = scmp.ne.s32.totalorder %s169, %s170
      %p182 = scmp.eq.s32.totalorder %s34, 1
      %p183 = por %p181, %p182
      %p185 = scmp.ne.s32.totalorder %s170, %s184
      %p186 = scmp.eq.s32.totalorder %s34, 0
      %p187 = por %p185, %p186
      %s189 = sadd.s32 %s188, 1
      %p192 = scmp.eq.s32.totalorder %s28, 1
      %p193 = scmp.ne.s32.totalorder %s188, %s190
      %p194 = scmp.eq.s32.totalorder %s28, 0
      %p195 = por %p193, %p194
      %p196 = scmp.ne.s32.totalorder %s188, %s190
      %p197 = scmp.eq.s32.totalorder %s33, 1
      %p198 = por %p196, %p197
      %p199 = scmp.ne.s32.totalorder %s190, %s191
      %p200 = scmp.eq.s32.totalorder %s33, 0
      %p201 = por %p199, %p200
      %p202 = scmp.ne.s32.totalorder %s190, %s191
      %p203 = scmp.eq.s32.totalorder %s34, 1
      %p204 = por %p202, %p203
      %p206 = scmp.ne.s32.totalorder %s191, %s205
      %p207 = scmp.eq.s32.totalorder %s34, 0
      %p208 = por %p206, %p207
      %s210 = sadd.s32 %s209, 1
      %p213 = scmp.eq.s32.totalorder %s28, 1
      %p214 = scmp.ne.s32.totalorder %s209, %s211
      %p215 = scmp.eq.s32.totalorder %s28, 0
      %p216 = por %p214, %p215
      %p217 = scmp.ne.s32.totalorder %s209, %s211
      %p218 = scmp.eq.s32.totalorder %s33, 1
      %p219 = por %p217, %p218
      %p220 = scmp.ne.s32.totalorder %s211, %s212
      %p221 = scmp.eq.s32.totalorder %s33, 0
      %p222 = por %p220, %p221
      %p223 = scmp.ne.s32.totalorder %s211, %s212
      %p224 = scmp.eq.s32.totalorder %s34, 1
      %p225 = por %p223, %p224
      %p227 = scmp.ne.s32.totalorder %s212, %s226
      %p228 = scmp.eq.s32.totalorder %s34, 0
      %p229 = por %p227, %p228
      %s231 = sadd.s32 %s230, 1
      %p234 = scmp.eq.s32.totalorder %s28, 1
      %p235 = scmp.ne.s32.totalorder %s230, %s232
      %p236 = scmp.eq.s32.totalorder %s28, 0
      %p237 = por %p235, %p236
      %p238 = scmp.ne.s32.totalorder %s230, %s232
      %p239 = scmp.eq.s32.totalorder %s33, 1
      %p240 = por %p238, %p239
      %p241 = scmp.ne.s32.totalorder %s232, %s233
      %p242 = scmp.eq.s32.totalorder %s33, 0
      %p243 = por %p241, %p242
      %p244 = scmp.ne.s32.totalorder %s232, %s233
      %p245 = scmp.eq.s32.totalorder %s34, 1
      %p246 = por %p244, %p245
      %p248 = scmp.ne.s32.totalorder %s233, %s247
      %p249 = scmp.eq.s32.totalorder %s34, 0
      %p250 = por %p248, %p249
      %s252 = sadd.s32 %s251, 1
      %p255 = scmp.eq.s32.totalorder %s28, 1
      %p256 = scmp.ne.s32.totalorder %s251, %s253
      %p257 = scmp.eq.s32.totalorder %s28, 0
      %p258 = por %p256, %p257
      %p259 = scmp.ne.s32.totalorder %s251, %s253
      %p260 = scmp.eq.s32.totalorder %s33, 1
      %p261 = por %p259, %p260
      %p262 = scmp.ne.s32.totalorder %s253, %s254
      %p263 = scmp.eq.s32.totalorder %s33, 0
      %p264 = por %p262, %p263
      %p265 = scmp.ne.s32.totalorder %s253, %s254
      %p266 = scmp.eq.s32.totalorder %s34, 1
      %p267 = por %p265, %p266
      %p269 = scmp.ne.s32.totalorder %s254, %s268
      %p270 = scmp.eq.s32.totalorder %s34, 0
      %p271 = por %p269, %p270
      %s273 = sadd.s32 %s272, 1
      %p276 = scmp.eq.s32.totalorder %s28, 1
      %p277 = scmp.ne.s32.totalorder %s272, %s274
      %p278 = scmp.eq.s32.totalorder %s28, 0
      %p279 = por %p277, %p278
      %p280 = scmp.ne.s32.totalorder %s272, %s274
      %p281 = scmp.eq.s32.totalorder %s33, 1
      %p282 = por %p280, %p281
      %p283 = scmp.ne.s32.totalorder %s274, %s275
      %p284 = scmp.eq.s32.totalorder %s33, 0
      %p285 = por %p283, %p284
      %p286 = scmp.ne.s32.totalorder %s274, %s275
      %p287 = scmp.eq.s32.totalorder %s34, 1
      %p288 = por %p286, %p287
      %p290 = scmp.ne.s32.totalorder %s275, %s289
      %p291 = scmp.eq.s32.totalorder %s34, 0
      %p292 = por %p290, %p291
      %s294 = sadd.s32 %s293, 1
      %p297 = scmp.eq.s32.totalorder %s28, 1
      %p298 = scmp.ne.s32.totalorder %s293, %s295
      %p299 = scmp.eq.s32.totalorder %s28, 0
      %p300 = por %p298, %p299
      %p301 = scmp.ne.s32.totalorder %s293, %s295
      %p302 = scmp.eq.s32.totalorder %s33, 1
      %p303 = por %p301, %p302
      %p304 = scmp.ne.s32.totalorder %s295, %s296
      %p305 = scmp.eq.s32.totalorder %s33, 0
      %p306 = por %p304, %p305
      %p307 = scmp.ne.s32.totalorder %s295, %s296
      %p308 = scmp.eq.s32.totalorder %s34, 1
      %p309 = por %p307, %p308
      %p311 = scmp.ne.s32.totalorder %s296, %s310
      %p312 = scmp.eq.s32.totalorder %s34, 0
      %p313 = por %p311, %p312
      %s315 = sadd.s32 %s314, 1
      %p318 = scmp.eq.s32.totalorder %s28, 1
      %p319 = scmp.ne.s32.totalorder %s314, %s316
      %p320 = scmp.eq.s32.totalorder %s28, 0
      %p321 = por %p319, %p320
      %p322 = scmp.ne.s32.totalorder %s314, %s316
      %p323 = scmp.eq.s32.totalorder %s33, 1
      %p324 = por %p322, %p323
      %p325 = scmp.ne.s32.totalorder %s316, %s317
      %p326 = scmp.eq.s32.totalorder %s33, 0
      %p327 = por %p325, %p326
      %p328 = scmp.ne.s32.totalorder %s316, %s317
      %p329 = scmp.eq.s32.totalorder %s34, 1
      %p330 = por %p328, %p329
      %p332 = scmp.ne.s32.totalorder %s317, %s331
      %p333 = scmp.eq.s32.totalorder %s34, 0
      %p334 = por %p332, %p333
      %s336 = sadd.s32 %s335, 1
      %p339 = scmp.eq.s32.totalorder %s28, 1
      %p340 = scmp.ne.s32.totalorder %s335, %s337
      %p341 = scmp.eq.s32.totalorder %s28, 0
      %p342 = por %p340, %p341
      %p343 = scmp.ne.s32.totalorder %s335, %s337
      %p344 = scmp.eq.s32.totalorder %s33, 1
      %p345 = por %p343, %p344
      %p346 = scmp.ne.s32.totalorder %s337, %s338
      %p347 = scmp.eq.s32.totalorder %s33, 0
      %p348 = por %p346, %p347
      %p349 = scmp.ne.s32.totalorder %s337, %s338
      %p350 = scmp.eq.s32.totalorder %s34, 1
      %p351 = por %p349, %p350
      %p353 = scmp.ne.s32.totalorder %s338, %s352
      %p354 = scmp.eq.s32.totalorder %s34, 0
      %p355 = por %p353, %p354
      %s357 = sadd.s32 %s356, 1
      %p360 = scmp.eq.s32.totalorder %s28, 1
      %p361 = scmp.ne.s32.totalorder %s356, %s358
      %p362 = scmp.eq.s32.totalorder %s28, 0
      %p363 = por %p361, %p362
      %p364 = scmp.ne.s32.totalorder %s356, %s358
      %p365 = scmp.eq.s32.totalorder %s33, 1
      %p366 = por %p364, %p365
      %p367 = scmp.ne.s32.totalorder %s358, %s359
      %p368 = scmp.eq.s32.totalorder %s33, 0
      %p369 = por %p367, %p368
      %p370 = scmp.ne.s32.totalorder %s358, %s359
      %p371 = scmp.eq.s32.totalorder %s34, 1
      %p372 = por %p370, %p371
      %p374 = scmp.ne.s32.totalorder %s359, %s373
      %p375 = scmp.eq.s32.totalorder %s34, 0
      %p376 = por %p374, %p375
      %s378 = sadd.s32 %s377, 1
      %p381 = scmp.eq.s32.totalorder %s28, 1
      %p382 = scmp.ne.s32.totalorder %s377, %s379
      %p383 = scmp.eq.s32.totalorder %s28, 0
      %p384 = por %p382, %p383
      %p385 = scmp.ne.s32.totalorder %s377, %s379
      %p386 = scmp.eq.s32.totalorder %s33, 1
      %p387 = por %p385, %p386
      %p388 = scmp.ne.s32.totalorder %s379, %s380
      %p389 = scmp.eq.s32.totalorder %s33, 0
      %p390 = por %p388, %p389
      %p391 = scmp.ne.s32.totalorder %s379, %s380
      %p392 = scmp.eq.s32.totalorder %s34, 1
      %p393 = por %p391, %p392
      %p395 = scmp.ne.s32.totalorder %s380, %s394
      %p396 = scmp.eq.s32.totalorder %s34, 0
      %p397 = por %p395, %p396
      %s399 = sadd.s32 %s398, 1
      %p402 = scmp.eq.s32.totalorder %s28, 1
      %p403 = scmp.ne.s32.totalorder %s398, %s400
      %p404 = scmp.eq.s32.totalorder %s28, 0
      %p405 = por %p403, %p404
      %p406 = scmp.ne.s32.totalorder %s398, %s400
      %p407 = scmp.eq.s32.totalorder %s33, 1
      %p408 = por %p406, %p407
      %p409 = scmp.ne.s32.totalorder %s400, %s401
      %p410 = scmp.eq.s32.totalorder %s33, 0
      %p411 = por %p409, %p410
      %p412 = scmp.ne.s32.totalorder %s400, %s401
      %p413 = scmp.eq.s32.totalorder %s34, 1
      %p414 = por %p412, %p413
      %p416 = scmp.ne.s32.totalorder %s401, %s415
      %p417 = scmp.eq.s32.totalorder %s34, 0
      %p418 = por %p416, %p417
      %s420 = sadd.s32 %s419, 1
      %p423 = scmp.eq.s32.totalorder %s28, 1
      %p424 = scmp.ne.s32.totalorder %s419, %s421
      %p425 = scmp.eq.s32.totalorder %s28, 0
      %p426 = por %p424, %p425
      %p427 = scmp.ne.s32.totalorder %s419, %s421
      %p428 = scmp.eq.s32.totalorder %s33, 1
      %p429 = por %p427, %p428
      %p430 = scmp.ne.s32.totalorder %s421, %s422
      %p431 = scmp.eq.s32.totalorder %s33, 0
      %p432 = por %p430, %p431
      %p433 = scmp.ne.s32.totalorder %s421, %s422
      %p434 = scmp.eq.s32.totalorder %s34, 1
      %p435 = por %p433, %p434
      %p437 = scmp.ne.s32.totalorder %s422, %s436
      %p438 = scmp.eq.s32.totalorder %s34, 0
      %p439 = por %p437, %p438
      %s440 = ssub.s32 %s28, %s35
      %p441 = scmp.eq.s32.totalorder %s440, 0
      %s443 = sadd.s32 %s442, 1
      %s444 = scalar_select %p441, %s442, %s443
      %p447 = pneg %p441
      %p448 = scmp.eq.s32.totalorder %s28, 1
      %p449 = por %p447, %p448
      %p450 = scmp.ne.s32.totalorder %s442, %s445
      %p451 = scmp.eq.s32.totalorder %s28, 0
      %p452 = por %p450, %p451
      %p453 = scmp.ne.s32.totalorder %s442, %s445
      %p454 = scmp.eq.s32.totalorder %s33, 1
      %p455 = por %p453, %p454
      %p456 = scmp.ne.s32.totalorder %s445, %s446
      %p457 = scmp.eq.s32.totalorder %s33, 0
      %p458 = por %p456, %p457
      %p459 = scmp.ne.s32.totalorder %s445, %s446
      %p460 = scmp.eq.s32.totalorder %s34, 1
      %p461 = por %p459, %p460
      %p463 = scmp.ne.s32.totalorder %s446, %s462
      %p464 = scmp.eq.s32.totalorder %s34, 0
      %p465 = por %p463, %p464
      %p466 = scmp.le.s32.totalorder 1, %s28
      %p467 = scmp.lt.s32.totalorder %s28, 3
      %p468 = pnand %p466, %p467
      %p469 = pneg %p468
      // Predicated region
      $region9: #{forward.1} parent=5 // pred_check
        _
      $region10: #{forward.1} parent=5 // pred_check_branch
        %471 = sbr.rel (%p468) target = $region12
      $region11: #{forward.1} parent=5 // pred_region
        %s472 = ssub.s32 %s28, 1
        // Predicated region
        $region13: #{forward.1} parent=11 // pred_check
          %p473 = pneg %p75
        $region14: #{forward.1} parent=11 // pred_check_branch
          %475 = sbr.rel (%p473) target = $region16
        $region15: #{forward.1} parent=11 // pred_region
          %s477 = ssub.s32 256, 256
          %478 = vsyncadd [#allocation3], %s477
          %s479 = sshll.u32 [#allocation2], 4
          %s480 = int_to_ptr.vmem [resolvable:$true] %s479
          %485 = dma.hbm_to_vmem [thread:$0]  %s1, 256, %s480, [#allocation3], 128, 128, 8
        $region16: #{forward.1} parent=11 // pred_fallthru
          _
        // Predicated region
        $region17: #{forward.1} parent=11 // pred_check
          %p486 = pneg %p96
        $region18: #{forward.1} parent=11 // pred_check_branch
          %488 = sbr.rel (%p486) target = $region20
        $region19: #{forward.1} parent=11 // pred_region
          _
        $region20: #{forward.1} parent=11 // pred_fallthru
          _
        // Predicated region
        $region21: #{forward.1} parent=11 // pred_check
          %p489 = pneg %p117
        $region22: #{forward.1} parent=11 // pred_check_branch
          %491 = sbr.rel (%p489) target = $region24
        $region23: #{forward.1} parent=11 // pred_region
          _
        $region24: #{forward.1} parent=11 // pred_fallthru
          _
        // Predicated region
        $region25: #{forward.1} parent=11 // pred_check
          %p492 = pneg %p138
        $region26: #{forward.1} parent=11 // pred_check_branch
          %494 = sbr.rel (%p492) target = $region28
        $region27: #{forward.1} parent=11 // pred_region
          _
        $region28: #{forward.1} parent=11 // pred_fallthru
          _
        // Predicated region
        $region29: #{forward.1} parent=11 // pred_check
          %p495 = pneg %p159
        $region30: #{forward.1} parent=11 // pred_check_branch
          %497 = sbr.rel (%p495) target = $region32
        $region31: #{forward.1} parent=11 // pred_region
          %s499 = ssub.s32 6144, 6144
          %500 = vsyncadd [#allocation5], %s499
          %s501 = sshll.u32 [#allocation4], 4
          %s502 = int_to_ptr.vmem [resolvable:$true] %s501
          %507 = dma.hbm_to_vmem [thread:$0]  %s5, 6144, %s502, [#allocation5], 192, 192, 12
        $region32: #{forward.1} parent=11 // pred_fallthru
          _
        // Predicated region
        $region33: #{forward.1} parent=11 // pred_check
          %p508 = pneg %p180
        $region34: #{forward.1} parent=11 // pred_check_branch
          %510 = sbr.rel (%p508) target = $region36
        $region35: #{forward.1} parent=11 // pred_region
          _
        $region36: #{forward.1} parent=11 // pred_fallthru
          _
        // Predicated region
        $region37: #{forward.1} parent=11 // pred_check
          %p511 = pneg %p201
        $region38: #{forward.1} parent=11 // pred_check_branch
          %513 = sbr.rel (%p511) target = $region40
        $region39: #{forward.1} parent=11 // pred_region
          _
        $region40: #{forward.1} parent=11 // pred_fallthru
          _
        // Predicated region
        $region41: #{forward.1} parent=11 // pred_check
          %p514 = pneg %p222
        $region42: #{forward.1} parent=11 // pred_check_branch
          %516 = sbr.rel (%p514) target = $region44
        $region43: #{forward.1} parent=11 // pred_region
          _
        $region44: #{forward.1} parent=11 // pred_fallthru
          _
        // Predicated region
        $region45: #{forward.1} parent=11 // pred_check
          %p517 = pneg %p243
        $region46: #{forward.1} parent=11 // pred_check_branch
          %519 = sbr.rel (%p517) target = $region48
        $region47: #{forward.1} parent=11 // pred_region
          _
        $region48: #{forward.1} parent=11 // pred_fallthru
          _
        // Predicated region
        $region49: #{forward.1} parent=11 // pred_check
          %p520 = pneg %p264
        $region50: #{forward.1} parent=11 // pred_check_branch
          %522 = sbr.rel (%p520) target = $region52
        $region51: #{forward.1} parent=11 // pred_region
          _
        $region52: #{forward.1} parent=11 // pred_fallthru
          _
        // Predicated region
        $region53: #{forward.1} parent=11 // pred_check
          %p523 = pneg %p285
        $region54: #{forward.1} parent=11 // pred_check_branch
          %525 = sbr.rel (%p523) target = $region56
        $region55: #{forward.1} parent=11 // pred_region
          _
        $region56: #{forward.1} parent=11 // pred_fallthru
          _
        // Predicated region
        $region57: #{forward.1} parent=11 // pred_check
          %p526 = pneg %p306
        $region58: #{forward.1} parent=11 // pred_check_branch
          %528 = sbr.rel (%p526) target = $region60
        $region59: #{forward.1} parent=11 // pred_region
          _
        $region60: #{forward.1} parent=11 // pred_fallthru
          _
        // Predicated region
        $region61: #{forward.1} parent=11 // pred_check
          %p529 = pneg %p327
        $region62: #{forward.1} parent=11 // pred_check_branch
          %531 = sbr.rel (%p529) target = $region64
        $region63: #{forward.1} parent=11 // pred_region
          %s533 = ssub.s32 4096, 4096
          %534 = vsyncadd [#allocation5], %s533
          %s535 = sshll.u32 [#allocation6], 4
          %s536 = int_to_ptr.vmem [resolvable:$true] %s535
          %541 = dma.hbm_to_vmem [thread:$0]  %s13, 4096, %s536, [#allocation5], 64, 64, 4
        $region64: #{forward.1} parent=11 // pred_fallthru
          _
        // Predicated region
        $region65: #{forward.1} parent=11 // pred_check
          %p542 = pneg %p348
        $region66: #{forward.1} parent=11 // pred_check_branch
          %544 = sbr.rel (%p542) target = $region68
        $region67: #{forward.1} parent=11 // pred_region
          _
        $region68: #{forward.1} parent=11 // pred_fallthru
          _
        // Predicated region
        $region69: #{forward.1} parent=11 // pred_check
          %p545 = pneg %p369
        $region70: #{forward.1} parent=11 // pred_check_branch
          %547 = sbr.rel (%p545) target = $region72
        $region71: #{forward.1} parent=11 // pred_region
          %s549 = ssub.s32 32, 32
          %550 = vsyncadd [#allocation8], %s549
          %s551 = sshll.u32 [#allocation7], 4
          %s552 = int_to_ptr.vmem [resolvable:$true] %s551
          %557 = dma.hbm_to_vmem [thread:$0]  %s15, 32, %s552, [#allocation8], 16, 16, 1
        $region72: #{forward.1} parent=11 // pred_fallthru
          _
        // Predicated region
        $region73: #{forward.1} parent=11 // pred_check
          %p558 = pneg %p390
        $region74: #{forward.1} parent=11 // pred_check_branch
          %560 = sbr.rel (%p558) target = $region76
        $region75: #{forward.1} parent=11 // pred_region
          _
        $region76: #{forward.1} parent=11 // pred_fallthru
          _
        // Predicated region
        $region77: #{forward.1} parent=11 // pred_check
          %p561 = pneg %p411
        $region78: #{forward.1} parent=11 // pred_check_branch
          %563 = sbr.rel (%p561) target = $region80
        $region79: #{forward.1} parent=11 // pred_region
          %s565 = ssub.s32 1024, 1024
          %566 = vsyncadd [#allocation8], %s565
          %s567 = sshll.u32 [#allocation9], 4
          %s568 = int_to_ptr.vmem [resolvable:$true] %s567
          %573 = dma.hbm_to_vmem [thread:$0]  %s17, 1024, %s568, [#allocation8], 64, 64, 4
        $region80: #{forward.1} parent=11 // pred_fallthru
          _
        // Predicated region
        $region81: #{forward.1} parent=11 // pred_check
          %p574 = pneg %p432
        $region82: #{forward.1} parent=11 // pred_check_branch
          %576 = sbr.rel (%p574) target = $region84
        $region83: #{forward.1} parent=11 // pred_region
          _
        $region84: #{forward.1} parent=11 // pred_fallthru
          _
      $region12: #{forward.1} parent=5 // pred_fallthru
        _
      %p577 = scmp.lt.s32.totalorder %s28, 2
      // Predicated region
      $region85: #{forward.1} parent=5 // pred_check
        %p578 = pneg %p577
      $region86: #{forward.1} parent=5 // pred_check_branch
        %580 = sbr.rel (%p578) target = $region88
      $region87: #{forward.1} parent=5 // pred_region
        // Predicated region
        $region89: #{forward.1} parent=87 // pred_check
          %p581 = pneg %p48
        $region90: #{forward.1} parent=87 // pred_check_branch
          %583 = sbr.rel (%p581) target = $region92
        $region91: #{forward.1} parent=87 // pred_region
          %p584 = scmp.lt.s32.totalorder %s28, 1
          %s585 = scalar_select %p584, %s28, 1
          %s586 = smul.addr %s585, 2
          %s587 = smul.addr %s586, 8
          %s588 = scalar_lea.vmem %s0, %s587
        $region92: #{forward.1} parent=87 // pred_fallthru
          _
      $region88: #{forward.1} parent=5 // pred_fallthru
        _
      %p589 = scmp.le.s32.totalorder 1, %s28
      %p590 = scmp.lt.s32.totalorder %s28, 3
      %p591 = pnand %p589, %p590
      %p592 = pneg %p591
      // Predicated region
      $region93: #{forward.1} parent=5 // pred_check
        _
      $region94: #{forward.1} parent=5 // pred_check_branch
        %594 = sbr.rel (%p591) target = $region96
      $region95: #{forward.1} parent=5 // pred_region
        %s595 = ssub.s32 %s28, 1
        // Predicated region
        $region97: #{forward.1} parent=95 // pred_check
          %p596 = pneg %p75
        $region98: #{forward.1} parent=95 // pred_check_branch
          %598 = sbr.rel (%p596) target = $region100
        $region99: #{forward.1} parent=95 // pred_region
          %599 = dma.done [#allocation3], 256
        $region100: #{forward.1} parent=95 // pred_fallthru
          _
        // Predicated region
        $region101: #{forward.1} parent=95 // pred_check
          %p600 = pneg %p159
        $region102: #{forward.1} parent=95 // pred_check_branch
          %602 = sbr.rel (%p600) target = $region104
        $region103: #{forward.1} parent=95 // pred_region
          %603 = dma.done [#allocation5], 6144
        $region104: #{forward.1} parent=95 // pred_fallthru
          _
        // Predicated region
        $region105: #{forward.1} parent=95 // pred_check
          %p604 = pneg %p327
        $region106: #{forward.1} parent=95 // pred_check_branch
          %606 = sbr.rel (%p604) target = $region108
        $region107: #{forward.1} parent=95 // pred_region
          %607 = dma.done [#allocation5], 4096
        $region108: #{forward.1} parent=95 // pred_fallthru
          _
        // Predicated region
        $region109: #{forward.1} parent=95 // pred_check
          %p608 = pneg %p369
        $region110: #{forward.1} parent=95 // pred_check_branch
          %610 = sbr.rel (%p608) target = $region112
        $region111: #{forward.1} parent=95 // pred_region
          %611 = dma.done [#allocation8], 32
        $region112: #{forward.1} parent=95 // pred_fallthru
          _
        // Predicated region
        $region113: #{forward.1} parent=95 // pred_check
          %p612 = pneg %p411
        $region114: #{forward.1} parent=95 // pred_check_branch
          %614 = sbr.rel (%p612) target = $region116
        $region115: #{forward.1} parent=95 // pred_region
          %615 = dma.done [#allocation8], 1024
        $region116: #{forward.1} parent=95 // pred_fallthru
          _
        %p616 = scmp.lt.s32.totalorder %s33, 1
        %s617 = scalar_select %p616, %s33, 1
        %s618 = smul.addr %s617, 2
        %s619 = smul.addr %s618, 8
        %s620 = scalar_lea.vmem %s0, %s619
        %p621 = pneg %p54
        %p622 = pneg %p51
        %p623 = pneg %p75
        %p624 = pneg %p72
        %p625 = pneg %p96
        %p626 = pneg %p93
        %p627 = pneg %p117
        %p628 = pneg %p114
        %p629 = pneg %p138
        %p630 = pneg %p135
        %p631 = pneg %p159
        %p632 = pneg %p156
        %p633 = pneg %p180
        %p634 = pneg %p177
        %p635 = pneg %p201
        %p636 = pneg %p198
        %p637 = pneg %p222
        %p638 = pneg %p219
        %p639 = pneg %p243
        %p640 = pneg %p240
        %p641 = pneg %p264
        %p642 = pneg %p261
        %p643 = pneg %p285
        %p644 = pneg %p282
        %p645 = pneg %p306
        %p646 = pneg %p303
        %p647 = pneg %p327
        %p648 = pneg %p324
        %p649 = pneg %p348
        %p650 = pneg %p345
        %p651 = pneg %p369
        %p652 = pneg %p366
        %p653 = pneg %p390
        %p654 = pneg %p387
        %p655 = pneg %p411
        %p656 = pneg %p408
        %p657 = pneg %p432
        %p658 = pneg %p429
        %p659 = pneg %p458
        %p660 = pneg %p455
        %p661 = scmp.lt.s32.totalorder %s33, 1
        %s662 = scalar_select %p661, %s33, 1
        %s663 = smul.addr %s662, 2
        %s664 = smul.addr %s663, 8
        %s665 = scalar_lea.vmem %s19, %s664
        %p666 = scmp.lt.s32.totalorder %s33, 1
        %s667 = scalar_select %p666, %s33, 1
        %s668 = smul.addr %s667, 2
        %s669 = smul.addr %s668, 8
        %s670 = scalar_lea.vmem %s0, %s669
        %p671 = scmp.lt.s32.totalorder %s33, 1
        %s672 = scalar_select %p671, %s33, 1
        %s673 = smul.addr %s672, 2
        %s674 = smul.addr %s673, 8
        %s675 = scalar_lea.vmem %s19, %s674
        %v677 = vld [vmem:[%s670] sm:$0xff]
        %v678 = vld [vmem:[%s670 + $0x8] sm:$0xff]
        %v679 = vld [vmem:[#allocation2] sm:$0xff]
        %v680 = vld [vmem:[#allocation2 + $0x8] sm:$0xff]
        %v681 = vadd.f32 %v677, %v679
        %v682 = vadd.f32 %v678, %v680
        %v683 = vld [vmem:[%s2] sm:$0x1]
        %v685 = vlaneseq
        %v686 = vshrl.u32 %v685, 7
        %v687 = vsub.s32 0, %v686
        %v688 = vrot.slane %v683, %v687
        %v690 = vadd.f32 %v681, %v688
        %v691 = vadd.f32 %v682, %v688
        %v692 = vld [vmem:[%s3] sm:$0x1]
        %v693 = vld [vmem:[%s4] sm:$0x1]
        %694 = vadd.xlane.f32.xlu0 %v690
        %v695 = vpop.xlane.xlu0 %694
        %696 = vadd.xlane.f32.xlu0 %v691
        %v697 = vpop.xlane.xlu0 %696
        %v698 = vrcp.pop 128.0
        %v699 = vmul.f32 %v695, %v698
        %v700 = vmul.f32 %v697, %v698
        %v701 = vsub.f32 %v690, %v699
        %v702 = vsub.f32 %v691, %v700
        %v703 = vmul.f32 %v701, %v701
        %v704 = vmul.f32 %v702, %v702
        %705 = vadd.xlane.f32.xlu0 %v703
        %v706 = vpop.xlane.xlu0 %705
        %707 = vadd.xlane.f32.xlu0 %v704
        %v708 = vpop.xlane.xlu0 %707
        %v709 = vmul.f32 %v706, %v698
        %v710 = vmul.f32 %v708, %v698
        %v711 = vadd.f32 %v709, 1e-12
        %v712 = vadd.f32 %v710, 1e-12
        %v713 = vrsqrt.pop %v711
        %v714 = vrsqrt.pop %v712
        %v715 = vmul.f32 %v701, %v713
        %v716 = vmul.f32 %v702, %v714
        %v718 = vlaneseq
        %v719 = vshrl.u32 %v718, 7
        %v720 = vsub.s32 0, %v719
        %v721 = vrot.slane %v692, %v720
        %v723 = vmul.f32 %v715, %v721
        %v724 = vmul.f32 %v716, %v721
        %v726 = vlaneseq
        %v727 = vshrl.u32 %v726, 7
        %v728 = vsub.s32 0, %v727
        %v729 = vrot.slane %v693, %v728
        %v731 = vadd.f32 %v723, %v729
        %v732 = vadd.f32 %v724, %v729
        %v733 = vld [vmem:[#allocation4] sm:$0xff]
        %v734 = vld [vmem:[#allocation4 + $0x8] sm:$0xf]
        %v735 = vld [vmem:[#allocation4 + $0xc] sm:$0xff]
        %v736 = vld [vmem:[#allocation4 + $0x14] sm:$0xf]
        %v737 = vld [vmem:[#allocation4 + $0x18] sm:$0xff]
        %v738 = vld [vmem:[#allocation4 + $0x20] sm:$0xf]
        %v739 = vld [vmem:[#allocation4 + $0x24] sm:$0xff]
        %v740 = vld [vmem:[#allocation4 + $0x2c] sm:$0xf]
        %v741 = vld [vmem:[#allocation4 + $0x30] sm:$0xff]
        %v742 = vld [vmem:[#allocation4 + $0x38] sm:$0xf]
        %v743 = vld [vmem:[#allocation4 + $0x3c] sm:$0xff]
        %v744 = vld [vmem:[#allocation4 + $0x44] sm:$0xf]
        %v745 = vld [vmem:[#allocation4 + $0x48] sm:$0xff]
        %v746 = vld [vmem:[#allocation4 + $0x50] sm:$0xf]
        %v747 = vld [vmem:[#allocation4 + $0x54] sm:$0xff]
        %v748 = vld [vmem:[#allocation4 + $0x5c] sm:$0xf]
        %v749 = vld [vmem:[#allocation4 + $0x60] sm:$0xff]
        %v750 = vld [vmem:[#allocation4 + $0x68] sm:$0xf]
        %v751 = vld [vmem:[#allocation4 + $0x6c] sm:$0xff]
        %v752 = vld [vmem:[#allocation4 + $0x74] sm:$0xf]
        %v753 = vld [vmem:[#allocation4 + $0x78] sm:$0xff]
        %v754 = vld [vmem:[#allocation4 + $0x80] sm:$0xf]
        %v755 = vld [vmem:[#allocation4 + $0x84] sm:$0xff]
        %v756 = vld [vmem:[#allocation4 + $0x8c] sm:$0xf]
        %v757 = vld [vmem:[#allocation4 + $0x90] sm:$0xff]
        %v758 = vld [vmem:[#allocation4 + $0x98] sm:$0xf]
        %v759 = vld [vmem:[#allocation4 + $0x9c] sm:$0xff]
        %v760 = vld [vmem:[#allocation4 + $0xa4] sm:$0xf]
        %v761 = vld [vmem:[#allocation4 + $0xa8] sm:$0xff]
        %v762 = vld [vmem:[#allocation4 + $0xb0] sm:$0xf]
        %v763 = vld [vmem:[#allocation4 + $0xb4] sm:$0xff]
        %v764 = vld [vmem:[#allocation4 + $0xbc] sm:$0xf]
        %v765 = vld [vmem:[%s6] sm:$0x7]
        %v766 = vpack.c.bf16 %v732, %v731
        %v768 = vlaneseq
        %v769 = vshrl.u32 %v768, 7
        %v770 = vsub.s32 0, %v769
        %v771 = vrot.slane %v765, %v770
        %v772 = vlaneseq
        %v773 = vshrl.u32 %v772, 7
        %v774 = vsub.s32 1, %v773
        %v775 = vrot.slane %v765, %v774
        %v776 = vlaneseq
        %v777 = vshrl.u32 %v776, 7
        %v778 = vsub.s32 2, %v777
        %v779 = vrot.slane %v765, %v778
        %v815 = vunpack.c.l.b16 %v733
        %v816 = vunpack.c.h.b16 %v733
        %v817 = vunpack.c.l.b16 %v734
        %v818 = vunpack.c.l.b16 %v735
        %v819 = vunpack.c.h.b16 %v735
        %v820 = vunpack.c.l.b16 %v736
        %v821 = vunpack.c.l.b16 %v737
        %v822 = vunpack.c.h.b16 %v737
        %v823 = vunpack.c.l.b16 %v738
        %v824 = vunpack.c.l.b16 %v739
        %v825 = vunpack.c.h.b16 %v739
        %v826 = vunpack.c.l.b16 %v740
        %v827 = vunpack.c.l.b16 %v741
        %v828 = vunpack.c.h.b16 %v741
        %v829 = vunpack.c.l.b16 %v742
        %v830 = vunpack.c.l.b16 %v743
        %v831 = vunpack.c.h.b16 %v743
        %v832 = vunpack.c.l.b16 %v744
        %v833 = vunpack.c.l.b16 %v745
        %v834 = vunpack.c.h.b16 %v745
        %v835 = vunpack.c.l.b16 %v746
        %v836 = vunpack.c.l.b16 %v747
        %v837 = vunpack.c.h.b16 %v747
        %v838 = vunpack.c.l.b16 %v748
        %v839 = vunpack.c.l.b16 %v749
        %v840 = vunpack.c.h.b16 %v749
        %v841 = vunpack.c.l.b16 %v750
        %v842 = vunpack.c.l.b16 %v751
        %v843 = vunpack.c.h.b16 %v751
        %v844 = vunpack.c.l.b16 %v752
        %v845 = vunpack.c.l.b16 %v753
        %v846 = vunpack.c.h.b16 %v753
        %v847 = vunpack.c.l.b16 %v754
        %v848 = vunpack.c.l.b16 %v755
        %v849 = vunpack.c.h.b16 %v755
        %v850 = vunpack.c.l.b16 %v756
        %v851 = vunpack.c.l.b16 %v757
        %v852 = vunpack.c.h.b16 %v757
        %v853 = vunpack.c.l.b16 %v758
        %v854 = vunpack.c.l.b16 %v759
        %v855 = vunpack.c.h.b16 %v759
        %v856 = vunpack.c.l.b16 %v760
        %v857 = vunpack.c.l.b16 %v761
        %v858 = vunpack.c.h.b16 %v761
        %v859 = vunpack.c.l.b16 %v762
        %v860 = vunpack.c.l.b16 %v763
        %v861 = vunpack.c.h.b16 %v763
        %v862 = vunpack.c.l.b16 %v764
        %v863 = vpack.c.b16 %v818, %v815
        %v864 = vpack.c.b16 %v819, %v816
        %v865 = vpack.c.b16 %v820, %v817
        %v866 = vpack.c.b16 %v824, %v821
        %v867 = vpack.c.b16 %v825, %v822
        %v868 = vpack.c.b16 %v826, %v823
        %v869 = vpack.c.b16 %v830, %v827
        %v870 = vpack.c.b16 %v831, %v828
        %v871 = vpack.c.b16 %v832, %v829
        %v872 = vpack.c.b16 %v836, %v833
        %v873 = vpack.c.b16 %v837, %v834
        %v874 = vpack.c.b16 %v838, %v835
        %v875 = vpack.c.b16 %v842, %v839
        %v876 = vpack.c.b16 %v843, %v840
        %v877 = vpack.c.b16 %v844, %v841
        %v878 = vpack.c.b16 %v848, %v845
        %v879 = vpack.c.b16 %v849, %v846
        %v880 = vpack.c.b16 %v850, %v847
        %v881 = vpack.c.b16 %v854, %v851
        %v882 = vpack.c.b16 %v855, %v852
        %v883 = vpack.c.b16 %v856, %v853
        %v884 = vpack.c.b16 %v860, %v857
        %v885 = vpack.c.b16 %v861, %v858
        %v886 = vpack.c.b16 %v862, %v859
        %911 = vmatprep.subr.bf16.mxu0 %v864
        %912 = vmatpush1.bf16.msra.mxu0 %v863
        %913 = vmatprep.subr.bf16.mxu0 %v867
        %914 = vmatpush1.bf16.msra.mxu0 %v866
        %915 = vmatprep.subr.bf16.mxu0 %v870
        %916 = vmatpush1.bf16.msra.mxu0 %v869
        %917 = vmatprep.subr.bf16.mxu0 %v873
        %918 = vmatpush1.bf16.msra.mxu0 %v872
        %919 = vmatprep.subr.bf16.mxu0 %v876
        %920 = vmatpush1.bf16.msra.mxu0 %v875
        %921 = vmatprep.subr.bf16.mxu0 %v879
        %922 = vmatpush1.bf16.msra.mxu0 %v878
        %923 = vmatprep.subr.bf16.mxu0 %v882
        %924 = vmatpush1.bf16.msra.mxu0 %v881
        %925 = vmatprep.subr.bf16.mxu0 %v885
        %926 = vmatpush1.bf16.msra.mxu0 %v884
        %927 = vmatprep.subr.bf16.mxu0 0
        %928 = vmatpush1.bf16.msra.mxu0 0
        %929 = vmatprep.subr.bf16.mxu0 0
        %930 = vmatpush1.bf16.msra.mxu0 0
        %931 = vmatprep.subr.bf16.mxu0 0
        %932 = vmatpush1.bf16.msra.mxu0 0
        %933 = vmatprep.subr.bf16.mxu0 0
        %934 = vmatpush1.bf16.msra.mxu0 0
        %935 = vmatprep.subr.bf16.mxu0 0
        %936 = vmatpush1.bf16.msra.mxu0 0
        %937 = vmatprep.subr.bf16.mxu0 0
        %938 = vmatpush1.bf16.msra.mxu0 0
        %939 = vmatprep.subr.bf16.mxu0 0
        %940 = vmatpush1.bf16.msra.mxu0 0
        %941 = vmatprep.subr.bf16.mxu0 0
        %942 = vmatpush1.bf16.msra.mxu0 0
        %943 = vmatprep.mubr.bf16.mxu0 0
        %944 = vmatmul.mubr.bf16.gmra.mrb[0].mxu0 %v766
        %v945 = vpop.f32.mrb[0].mxu0
        %v946 = vadd.f32 %v771, %v945
        %v947 = vpop.f32.mrb[0].mxu0
        %v948 = vadd.f32 %v775, %v947
        %v949 = vpop.f32.mrb[0].mxu0
        %v950 = vadd.f32 %v771, %v949
        %v951 = vpop.f32.mrb[0].mxu0
        %v952 = vadd.f32 %v775, %v951
        %953 = vdwg.mxu0
        %954 = vmatprep.subr.bf16.mxu0 0
        %955 = vmatpush1.bf16.msra.mxu0 %v865
        %956 = vmatprep.subr.bf16.mxu0 0
        %957 = vmatpush1.bf16.msra.mxu0 %v868
        %958 = vmatprep.subr.bf16.mxu0 0
        %959 = vmatpush1.bf16.msra.mxu0 %v871
        %960 = vmatprep.subr.bf16.mxu0 0
        %961 = vmatpush1.bf16.msra.mxu0 %v874
        %962 = vmatprep.subr.bf16.mxu0 0
        %963 = vmatpush1.bf16.msra.mxu0 %v877
        %964 = vmatprep.subr.bf16.mxu0 0
        %965 = vmatpush1.bf16.msra.mxu0 %v880
        %966 = vmatprep.subr.bf16.mxu0 0
        %967 = vmatpush1.bf16.msra.mxu0 %v883
        %968 = vmatprep.subr.bf16.mxu0 0
        %969 = vmatpush1.bf16.msra.mxu0 %v886
        %970 = vmatprep.subr.bf16.mxu0 0
        %971 = vmatpush1.bf16.msra.mxu0 0
        %972 = vmatprep.subr.bf16.mxu0 0
        %973 = vmatpush1.bf16.msra.mxu0 0
        %974 = vmatprep.subr.bf16.mxu0 0
        %975 = vmatpush1.bf16.msra.mxu0 0
        %976 = vmatprep.subr.bf16.mxu0 0
        %977 = vmatpush1.bf16.msra.mxu0 0
        %978 = vmatprep.subr.bf16.mxu0 0
        %979 = vmatpush1.bf16.msra.mxu0 0
        %980 = vmatprep.subr.bf16.mxu0 0
        %981 = vmatpush1.bf16.msra.mxu0 0
        %982 = vmatprep.subr.bf16.mxu0 0
        %983 = vmatpush1.bf16.msra.mxu0 0
        %984 = vmatprep.subr.bf16.mxu0 0
        %985 = vmatpush1.bf16.msra.mxu0 0
        %986 = vmatprep.mubr.bf16.mxu0 0
        %987 = vmatmul.mubr.bf16.gmra.mrb[0].mxu0 %v766
        %v988 = vpop.f32.mrb[0].mxu0
        %v989 = vadd.f32 %v779, %v988
        %v990 = vpop.f32.mrb[0].mxu0
        %v991 = vpop.f32.mrb[0].mxu0
        %v992 = vadd.f32 %v779, %v991
        %v993 = vpop.f32.mrb[0].mxu0
        %994 = vdwg.mxu0
        %997 = vrot.lane.b32.xlu0 %v946, 64
        %v998 = vpop.permute.xlu0 %997
        %999 = vrot.lane.b32.xlu0 %v950, 64
        %v1000 = vpop.permute.xlu0 %999
        %1003 = vrot.lane.b32.xlu0 %v948, 64
        %v1004 = vpop.permute.xlu0 %1003
        %1005 = vrot.lane.b32.xlu0 %v952, 64
        %v1006 = vpop.permute.xlu0 %1005
        %1011 = vrot.lane.b32.xlu0 %v989, 64
        %v1012 = vpop.permute.xlu0 %1011
        %1013 = vrot.lane.b32.xlu0 %v992, 64
        %v1014 = vpop.permute.xlu0 %1013
        %1017 = vxpose.xlu0.b32.start [1/16] %v948, 128
        %1018 = vxpose.xlu0.b32.cont [2/16] %v952, 128
        %1019 = vxpose.xlu0.b32.cont [3/16] 0.0, 128
        %1020 = vxpose.xlu0.b32.cont [4/16] 0.0, 128
        %1021 = vxpose.xlu0.b32.cont [5/16] 0.0, 128
        %1022 = vxpose.xlu0.b32.cont [6/16] 0.0, 128
        %1023 = vxpose.xlu0.b32.cont [7/16] 0.0, 128
        %1024 = vxpose.xlu0.b32.cont [8/16] 0.0, 128
        %1025 = vxpose.xlu0.b32.cont [9/16] 0.0, 128
        %1026 = vxpose.xlu0.b32.cont [10/16] 0.0, 128
        %1027 = vxpose.xlu0.b32.cont [11/16] 0.0, 128
        %1028 = vxpose.xlu0.b32.cont [12/16] 0.0, 128
        %1029 = vxpose.xlu0.b32.cont [13/16] 0.0, 128
        %1030 = vxpose.xlu0.b32.cont [14/16] 0.0, 128
        %1031 = vxpose.xlu0.b32.cont [15/16] 0.0, 128
        %1032 = vxpose.xlu0.b32.end [16/16] 0.0, 128
        %v1033 = vpop.trf.xlu0
        %v1034 = vpop.trf.xlu0
        %v1035 = vpop.trf.xlu0
        %v1036 = vpop.trf.xlu0
        %v1037 = vpop.trf.xlu0
        %v1038 = vpop.trf.xlu0
        %v1039 = vpop.trf.xlu0
        %v1040 = vpop.trf.xlu0
        %v1041 = vpop.trf.xlu0
        %v1042 = vpop.trf.xlu0
        %v1043 = vpop.trf.xlu0
        %v1044 = vpop.trf.xlu0
        %v1045 = vpop.trf.xlu0
        %v1046 = vpop.trf.xlu0
        %v1047 = vpop.trf.xlu0
        %v1048 = vpop.trf.xlu0
        %1049 = vxpose.xlu0.b32.start [1/16] %v1004, 128
        %1050 = vxpose.xlu0.b32.cont [2/16] %v1006, 128
        %1051 = vxpose.xlu0.b32.cont [3/16] 0.0, 128
        %1052 = vxpose.xlu0.b32.cont [4/16] 0.0, 128
        %1053 = vxpose.xlu0.b32.cont [5/16] 0.0, 128
        %1054 = vxpose.xlu0.b32.cont [6/16] 0.0, 128
        %1055 = vxpose.xlu0.b32.cont [7/16] 0.0, 128
        %1056 = vxpose.xlu0.b32.cont [8/16] 0.0, 128
        %1057 = vxpose.xlu0.b32.cont [9/16] 0.0, 128
        %1058 = vxpose.xlu0.b32.cont [10/16] 0.0, 128
        %1059 = vxpose.xlu0.b32.cont [11/16] 0.0, 128
        %1060 = vxpose.xlu0.b32.cont [12/16] 0.0, 128
        %1061 = vxpose.xlu0.b32.cont [13/16] 0.0, 128
        %1062 = vxpose.xlu0.b32.cont [14/16] 0.0, 128
        %1063 = vxpose.xlu0.b32.cont [15/16] 0.0, 128
        %1064 = vxpose.xlu0.b32.end [16/16] 0.0, 128
        %v1065 = vpop.trf.xlu0
        %v1066 = vpop.trf.xlu0
        %v1067 = vpop.trf.xlu0
        %v1068 = vpop.trf.xlu0
        %v1069 = vpop.trf.xlu0
        %v1070 = vpop.trf.xlu0
        %v1071 = vpop.trf.xlu0
        %v1072 = vpop.trf.xlu0
        %v1073 = vpop.trf.xlu0
        %v1074 = vpop.trf.xlu0
        %v1075 = vpop.trf.xlu0
        %v1076 = vpop.trf.xlu0
        %v1077 = vpop.trf.xlu0
        %v1078 = vpop.trf.xlu0
        %v1079 = vpop.trf.xlu0
        %v1080 = vpop.trf.xlu0
        %vm1081 = vcmask 523264
        %v1082 = vsel %vm1081, %v946, 0
        %v1084 = vsel %vm1081, %v950, 0
        %1086 = vmatprep.subr.mxu0 0.0
        %1087 = vmatpush1.msra.mxu0 %v1033
        %1088 = vmatprep.subr.mxu0 0.0
        %1089 = vmatpush1.msra.mxu0 %v1034
        %1090 = vmatprep.subr.mxu0 0.0
        %1091 = vmatpush1.msra.mxu0 %v1035
        %1092 = vmatprep.subr.mxu0 0.0
        %1093 = vmatpush1.msra.mxu0 %v1036
        %1094 = vmatprep.subr.mxu0 0.0
        %1095 = vmatpush1.msra.mxu0 %v1037
        %1096 = vmatprep.subr.mxu0 0.0
        %1097 = vmatpush1.msra.mxu0 %v1038
        %1098 = vmatprep.subr.mxu0 0.0
        %1099 = vmatpush1.msra.mxu0 %v1039
        %1100 = vmatprep.subr.mxu0 0.0
        %1101 = vmatpush1.msra.mxu0 %v1040
        %1102 = vmatprep.subr.mxu0 0.0
        %1103 = vmatpush1.msra.mxu0 0.0
        %1104 = vmatprep.subr.mxu0 0.0
        %1105 = vmatpush1.msra.mxu0 0.0
        %1106 = vmatprep.subr.mxu0 0.0
        %1107 = vmatpush1.msra.mxu0 0.0
        %1108 = vmatprep.subr.mxu0 0.0
        %1109 = vmatpush1.msra.mxu0 0.0
        %1110 = vmatprep.subr.mxu0 0.0
        %1111 = vmatpush1.msra.mxu0 0.0
        %1112 = vmatprep.subr.mxu0 0.0
        %1113 = vmatpush1.msra.mxu0 0.0
        %1114 = vmatprep.subr.mxu0 0.0
        %1115 = vmatpush1.msra.mxu0 0.0
        %1116 = vmatprep.subr.mxu0 0.0
        %1117 = vmatpush1.msra.mxu0 0.0
        %1118 = vmatprep.subr.mxu0 0.0
        %1119 = vmatpush1.msra.mxu0 0.0
        %1120 = vmatprep.subr.mxu0 0.0
        %1121 = vmatpush1.msra.mxu0 0.0
        %1122 = vmatprep.subr.mxu0 0.0
        %1123 = vmatpush1.msra.mxu0 0.0
        %1124 = vmatprep.subr.mxu0 0.0
        %1125 = vmatpush1.msra.mxu0 0.0
        %1126 = vmatprep.subr.mxu0 0.0
        %1127 = vmatpush1.msra.mxu0 0.0
        %1128 = vmatprep.subr.mxu0 0.0
        %1129 = vmatpush1.msra.mxu0 0.0
        %1130 = vmatprep.subr.mxu0 0.0
        %1131 = vmatpush1.msra.mxu0 0.0
        %1132 = vmatprep.subr.mxu0 0.0
        %1133 = vmatpush1.msra.mxu0 0.0
        %1134 = vmatprep.subr.mxu0 0.0
        %1135 = vmatpush1.msra.mxu0 0.0
        %1136 = vmatprep.subr.mxu0 0.0
        %1137 = vmatpush1.msra.mxu0 0.0
        %1138 = vmatprep.subr.mxu0 0.0
        %1139 = vmatpush1.msra.mxu0 0.0
        %1140 = vmatprep.subr.mxu0 0.0
        %1141 = vmatpush1.msra.mxu0 0.0
        %1142 = vmatprep.subr.mxu0 0.0
        %1143 = vmatpush1.msra.mxu0 0.0
        %1144 = vmatprep.subr.mxu0 0.0
        %1145 = vmatpush1.msra.mxu0 0.0
        %1146 = vmatprep.subr.mxu0 0.0
        %1147 = vmatpush1.msra.mxu0 0.0
        %1148 = vmatprep.subr.mxu0 0.0
        %1149 = vmatpush1.msra.mxu0 0.0
        %1150 = vmatprep.mubr.f32.mxu0 0.0
        %1151 = vmatmul.mubr.f32.gmra.mrb[0].mxu0 %v1082
        %v1152 = vpop.f32.mrb[0].mxu0
        %v1153 = vadd.f32 0.0, %v1152
        %v1154 = vpop.f32.mrb[0].mxu0
        %1155 = vmatprep.mubr.f32.mxu0 0.0
        %1156 = vmatmul.mubr.f32.gmra.mrb[0].mxu0 %v1084
        %v1157 = vpop.f32.mrb[0].mxu0
        %v1158 = vadd.f32 0.0, %v1157
        %v1159 = vpop.f32.mrb[0].mxu0
        %1160 = vdwg.mxu0
        %v1161 = vsel %vm1081, %v998, 0
        %v1163 = vsel %vm1081, %v1000, 0
        %1165 = vmatprep.subr.mxu0 0.0
        %1166 = vmatpush1.msra.mxu0 %v1065
        %1167 = vmatprep.subr.mxu0 0.0
        %1168 = vmatpush1.msra.mxu0 %v1066
        %1169 = vmatprep.subr.mxu0 0.0
        %1170 = vmatpush1.msra.mxu0 %v1067
        %1171 = vmatprep.subr.mxu0 0.0
        %1172 = vmatpush1.msra.mxu0 %v1068
        %1173 = vmatprep.subr.mxu0 0.0
        %1174 = vmatpush1.msra.mxu0 %v1069
        %1175 = vmatprep.subr.mxu0 0.0
        %1176 = vmatpush1.msra.mxu0 %v1070
        %1177 = vmatprep.subr.mxu0 0.0
        %1178 = vmatpush1.msra.mxu0 %v1071
        %1179 = vmatprep.subr.mxu0 0.0
        %1180 = vmatpush1.msra.mxu0 %v1072
        %1181 = vmatprep.subr.mxu0 0.0
        %1182 = vmatpush1.msra.mxu0 0.0
        %1183 = vmatprep.subr.mxu0 0.0
        %1184 = vmatpush1.msra.mxu0 0.0
        %1185 = vmatprep.subr.mxu0 0.0
        %1186 = vmatpush1.msra.mxu0 0.0
        %1187 = vmatprep.subr.mxu0 0.0
        %1188 = vmatpush1.msra.mxu0 0.0
        %1189 = vmatprep.subr.mxu0 0.0
        %1190 = vmatpush1.msra.mxu0 0.0
        %1191 = vmatprep.subr.mxu0 0.0
        %1192 = vmatpush1.msra.mxu0 0.0
        %1193 = vmatprep.subr.mxu0 0.0
        %1194 = vmatpush1.msra.mxu0 0.0
        %1195 = vmatprep.subr.mxu0 0.0
        %1196 = vmatpush1.msra.mxu0 0.0
        %1197 = vmatprep.subr.mxu0 0.0
        %1198 = vmatpush1.msra.mxu0 0.0
        %1199 = vmatprep.subr.mxu0 0.0
        %1200 = vmatpush1.msra.mxu0 0.0
        %1201 = vmatprep.subr.mxu0 0.0
        %1202 = vmatpush1.msra.mxu0 0.0
        %1203 = vmatprep.subr.mxu0 0.0
        %1204 = vmatpush1.msra.mxu0 0.0
        %1205 = vmatprep.subr.mxu0 0.0
        %1206 = vmatpush1.msra.mxu0 0.0
        %1207 = vmatprep.subr.mxu0 0.0
        %1208 = vmatpush1.msra.mxu0 0.0
        %1209 = vmatprep.subr.mxu0 0.0
        %1210 = vmatpush1.msra.mxu0 0.0
        %1211 = vmatprep.subr.mxu0 0.0
        %1212 = vmatpush1.msra.mxu0 0.0
        %1213 = vmatprep.subr.mxu0 0.0
        %1214 = vmatpush1.msra.mxu0 0.0
        %1215 = vmatprep.subr.mxu0 0.0
        %1216 = vmatpush1.msra.mxu0 0.0
        %1217 = vmatprep.subr.mxu0 0.0
        %1218 = vmatpush1.msra.mxu0 0.0
        %1219 = vmatprep.subr.mxu0 0.0
        %1220 = vmatpush1.msra.mxu0 0.0
        %1221 = vmatprep.subr.mxu0 0.0
        %1222 = vmatpush1.msra.mxu0 0.0
        %1223 = vmatprep.subr.mxu0 0.0
        %1224 = vmatpush1.msra.mxu0 0.0
        %1225 = vmatprep.subr.mxu0 0.0
        %1226 = vmatpush1.msra.mxu0 0.0
        %1227 = vmatprep.subr.mxu0 0.0
        %1228 = vmatpush1.msra.mxu0 0.0
        %1229 = vmatprep.mubr.f32.mxu0 0.0
        %1230 = vmatmul.mubr.f32.gmra.mrb[0].mxu0 %v1161
        %v1231 = vpop.f32.mrb[0].mxu0
        %v1232 = vadd.f32 0.0, %v1231
        %v1233 = vpop.f32.mrb[0].mxu0
        %1234 = vmatprep.mubr.f32.mxu0 0.0
        %1235 = vmatmul.mubr.f32.gmra.mrb[0].mxu0 %v1163
        %v1236 = vpop.f32.mrb[0].mxu0
        %v1237 = vadd.f32 0.0, %v1236
        %v1238 = vpop.f32.mrb[0].mxu0
        %1239 = vdwg.mxu0
        %v1240 = vmul.f32 %v1153, 0.125
        %v1241 = vmul.f32 %v1158, 0.125
        %v1242 = vmul.f32 %v1232, 0.125
        %v1243 = vmul.f32 %v1237, 0.125
        %vm1244 = vcmask 130048
        %v1245 = vsel %vm1244, %v1240, -inf
        %1246 = vmax.xlane.f32.xlu0 %v1245
        %v1247 = vpop.xlane.xlu0 %1246
        %v1248 = vsel %vm1244, %v1241, -inf
        %1249 = vmax.xlane.f32.xlu0 %v1248
        %v1250 = vpop.xlane.xlu0 %1249
        %v1251 = vsel %vm1244, %v1242, -inf
        %1252 = vmax.xlane.f32.xlu0 %v1251
        %v1253 = vpop.xlane.xlu0 %1252
        %v1254 = vsel %vm1244, %v1243, -inf
        %1255 = vmax.xlane.f32.xlu0 %v1254
        %v1256 = vpop.xlane.xlu0 %1255
        %v1257 = vsub.f32 %v1240, %v1247
        %v1258 = vsub.f32 %v1241, %v1250
        %v1259 = vsub.f32 %v1242, %v1253
        %v1260 = vsub.f32 %v1243, %v1256
        %v1261 = vmul.f32 %v1257, 1.442695
        %v1262 = vpow.pop %v1261
        %v1263 = vmul.f32 %v1258, 1.442695
        %v1264 = vpow.pop %v1263
        %v1265 = vmul.f32 %v1259, 1.442695
        %v1266 = vpow.pop %v1265
        %v1267 = vmul.f32 %v1260, 1.442695
        %v1268 = vpow.pop %v1267
        %v1269 = vsel %vm1244, %v1262, 0.0
        %1270 = vadd.xlane.f32.xlu0 %v1269
        %v1271 = vpop.xlane.xlu0 %1270
        %v1272 = vsel %vm1244, %v1264, 0.0
        %1273 = vadd.xlane.f32.xlu0 %v1272
        %v1274 = vpop.xlane.xlu0 %1273
        %v1275 = vsel %vm1244, %v1266, 0.0
        %1276 = vadd.xlane.f32.xlu0 %v1275
        %v1277 = vpop.xlane.xlu0 %1276
        %v1278 = vsel %vm1244, %v1268, 0.0
        %1279 = vadd.xlane.f32.xlu0 %v1278
        %v1280 = vpop.xlane.xlu0 %1279
        %v1281 = vrcp.pop %v1271
        %v1282 = vrcp.pop %v1274
        %v1283 = vrcp.pop %v1277
        %v1284 = vrcp.pop %v1280
        %v1285 = vmul.f32 %v1262, %v1281
        %v1286 = vmul.f32 %v1264, %v1282
        %v1287 = vmul.f32 %v1266, %v1283
        %v1288 = vmul.f32 %v1268, %v1284
        %1289 = vxpose.xlu0.b32.start [1/16] %v989, 128
        %1290 = vxpose.xlu0.b32.cont [2/16] %v992, 128
        %1291 = vxpose.xlu0.b32.cont [3/16] 0.0, 128
        %1292 = vxpose.xlu0.b32.cont [4/16] 0.0, 128
        %1293 = vxpose.xlu0.b32.cont [5/16] 0.0, 128
        %1294 = vxpose.xlu0.b32.cont [6/16] 0.0, 128
        %1295 = vxpose.xlu0.b32.cont [7/16] 0.0, 128
        %1296 = vxpose.xlu0.b32.cont [8/16] 0.0, 128
        %1297 = vxpose.xlu0.b32.cont [9/16] 0.0, 128
        %1298 = vxpose.xlu0.b32.cont [10/16] 0.0, 128
        %1299 = vxpose.xlu0.b32.cont [11/16] 0.0, 128
        %1300 = vxpose.xlu0.b32.cont [12/16] 0.0, 128
        %1301 = vxpose.xlu0.b32.cont [13/16] 0.0, 128
        %1302 = vxpose.xlu0.b32.cont [14/16] 0.0, 128
        %1303 = vxpose.xlu0.b32.cont [15/16] 0.0, 128
        %1304 = vxpose.xlu0.b32.end [16/16] 0.0, 128
        %v1305 = vpop.trf.xlu0
        %v1306 = vpop.trf.xlu0
        %v1307 = vpop.trf.xlu0
        %v1308 = vpop.trf.xlu0
        %v1309 = vpop.trf.xlu0
        %v1310 = vpop.trf.xlu0
        %v1311 = vpop.trf.xlu0
        %v1312 = vpop.trf.xlu0
        %v1313 = vpop.trf.xlu0
        %v1314 = vpop.trf.xlu0
        %v1315 = vpop.trf.xlu0
        %v1316 = vpop.trf.xlu0
        %v1317 = vpop.trf.xlu0
        %v1318 = vpop.trf.xlu0
        %v1319 = vpop.trf.xlu0
        %v1320 = vpop.trf.xlu0
        %1321 = vxpose.xlu0.b32.start [1/16] %v1012, 128
        %1322 = vxpose.xlu0.b32.cont [2/16] %v1014, 128
        %1323 = vxpose.xlu0.b32.cont [3/16] 0.0, 128
        %1324 = vxpose.xlu0.b32.cont [4/16] 0.0, 128
        %1325 = vxpose.xlu0.b32.cont [5/16] 0.0, 128
        %1326 = vxpose.xlu0.b32.cont [6/16] 0.0, 128
        %1327 = vxpose.xlu0.b32.cont [7/16] 0.0, 128
        %1328 = vxpose.xlu0.b32.cont [8/16] 0.0, 128
        %1329 = vxpose.xlu0.b32.cont [9/16] 0.0, 128
        %1330 = vxpose.xlu0.b32.cont [10/16] 0.0, 128
        %1331 = vxpose.xlu0.b32.cont [11/16] 0.0, 128
        %1332 = vxpose.xlu0.b32.cont [12/16] 0.0, 128
        %1333 = vxpose.xlu0.b32.cont [13/16] 0.0, 128
        %1334 = vxpose.xlu0.b32.cont [14/16] 0.0, 128
        %1335 = vxpose.xlu0.b32.cont [15/16] 0.0, 128
        %1336 = vxpose.xlu0.b32.end [16/16] 0.0, 128
        %v1337 = vpop.trf.xlu0
        %v1338 = vpop.trf.xlu0
        %v1339 = vpop.trf.xlu0
        %v1340 = vpop.trf.xlu0
        %v1341 = vpop.trf.xlu0
        %v1342 = vpop.trf.xlu0
        %v1343 = vpop.trf.xlu0
        %v1344 = vpop.trf.xlu0
        %v1345 = vpop.trf.xlu0
        %v1346 = vpop.trf.xlu0
        %v1347 = vpop.trf.xlu0
        %v1348 = vpop.trf.xlu0
        %v1349 = vpop.trf.xlu0
        %v1350 = vpop.trf.xlu0
        %v1351 = vpop.trf.xlu0
        %v1352 = vpop.trf.xlu0
        %v1354 = vsel %vm1244, %v1305, 0
        %v1357 = vsel %vm1244, %v1306, 0
        %v1360 = vsel %vm1244, %v1307, 0
        %v1363 = vsel %vm1244, %v1308, 0
        %v1366 = vsel %vm1244, %v1309, 0
        %v1369 = vsel %vm1244, %v1310, 0
        %v1372 = vsel %vm1244, %v1311, 0
        %v1375 = vsel %vm1244, %v1312, 0
        %v1378 = vsel %vm1244, %v1285, 0
        %v1381 = vsel %vm1244, %v1286, 0
        %1383 = vmatprep.subr.mxu0 0.0
        %1384 = vmatpush1.xpose.msra.mxu0 %v1378
        %1385 = vmatprep.subr.mxu0 0.0
        %1386 = vmatpush1.xpose.msra.mxu0 %v1381
        %1387 = vmatprep.subr.mxu0 0.0
        %1388 = vmatpush1.xpose.msra.mxu0 0.0
        %1389 = vmatprep.subr.mxu0 0.0
        %1390 = vmatpush1.xpose.msra.mxu0 0.0
        %1391 = vmatprep.subr.mxu0 0.0
        %1392 = vmatpush1.xpose.msra.mxu0 0.0
        %1393 = vmatprep.subr.mxu0 0.0
        %1394 = vmatpush1.xpose.msra.mxu0 0.0
        %1395 = vmatprep.subr.mxu0 0.0
        %1396 = vmatpush1.xpose.msra.mxu0 0.0
        %1397 = vmatprep.subr.mxu0 0.0
        %1398 = vmatpush1.xpose.msra.mxu0 0.0
        %1399 = vmatprep.subr.mxu0 0.0
        %1400 = vmatpush1.xpose.msra.mxu0 0.0
        %1401 = vmatprep.subr.mxu0 0.0
        %1402 = vmatpush1.xpose.msra.mxu0 0.0
        %1403 = vmatprep.subr.mxu0 0.0
        %1404 = vmatpush1.xpose.msra.mxu0 0.0
        %1405 = vmatprep.subr.mxu0 0.0
        %1406 = vmatpush1.xpose.msra.mxu0 0.0
        %1407 = vmatprep.subr.mxu0 0.0
        %1408 = vmatpush1.xpose.msra.mxu0 0.0
        %1409 = vmatprep.subr.mxu0 0.0
        %1410 = vmatpush1.xpose.msra.mxu0 0.0
        %1411 = vmatprep.subr.mxu0 0.0
        %1412 = vmatpush1.xpose.msra.mxu0 0.0
        %1413 = vmatprep.subr.mxu0 0.0
        %1414 = vmatpush1.xpose.msra.mxu0 0.0
        %1415 = vmatprep.subr.mxu0 0.0
        %1416 = vmatpush1.xpose.msra.mxu0 0.0
        %1417 = vmatprep.subr.mxu0 0.0
        %1418 = vmatpush1.xpose.msra.mxu0 0.0
        %1419 = vmatprep.subr.mxu0 0.0
        %1420 = vmatpush1.xpose.msra.mxu0 0.0
        %1421 = vmatprep.subr.mxu0 0.0
        %1422 = vmatpush1.xpose.msra.mxu0 0.0
        %1423 = vmatprep.subr.mxu0 0.0
        %1424 = vmatpush1.xpose.msra.mxu0 0.0
        %1425 = vmatprep.subr.mxu0 0.0
        %1426 = vmatpush1.xpose.msra.mxu0 0.0
        %1427 = vmatprep.subr.mxu0 0.0
        %1428 = vmatpush1.xpose.msra.mxu0 0.0
        %1429 = vmatprep.subr.mxu0 0.0
        %1430 = vmatpush1.xpose.msra.mxu0 0.0
        %1431 = vmatprep.subr.mxu0 0.0
        %1432 = vmatpush1.xpose.msra.mxu0 0.0
        %1433 = vmatprep.subr.mxu0 0.0
        %1434 = vmatpush1.xpose.msra.mxu0 0.0
        %1435 = vmatprep.subr.mxu0 0.0
        %1436 = vmatpush1.xpose.msra.mxu0 0.0
        %1437 = vmatprep.subr.mxu0 0.0
        %1438 = vmatpush1.xpose.msra.mxu0 0.0
        %1439 = vmatprep.subr.mxu0 0.0
        %1440 = vmatpush1.xpose.msra.mxu0 0.0
        %1441 = vmatprep.subr.mxu0 0.0
        %1442 = vmatpush1.xpose.msra.mxu0 0.0
        %1443 = vmatprep.subr.mxu0 0.0
        %1444 = vmatpush1.xpose.msra.mxu0 0.0
        %1445 = vmatprep.subr.mxu0 0.0
        %1446 = vmatpush1.xpose.msra.mxu0 0.0
        %1447 = vmatprep.mubr.f32.mxu0 0.0
        %1448 = vmatmul.mubr.f32.gmra.mrb[0].mxu0 %v1354
        %v1449 = vpop.f32.mrb[0].mxu0
        %v1450 = vadd.f32 0.0, %v1449
        %v1451 = vpop.f32.mrb[0].mxu0
        %1452 = vmatprep.mubr.f32.mxu0 0.0
        %1453 = vmatmul.mubr.f32.gmra.mrb[0].mxu0 %v1357
        %v1454 = vpop.f32.mrb[0].mxu0
        %v1455 = vadd.f32 0.0, %v1454
        %v1456 = vpop.f32.mrb[0].mxu0
        %1457 = vmatprep.mubr.f32.mxu0 0.0
        %1458 = vmatmul.mubr.f32.gmra.mrb[0].mxu0 %v1360
        %v1459 = vpop.f32.mrb[0].mxu0
        %v1460 = vadd.f32 0.0, %v1459
        %v1461 = vpop.f32.mrb[0].mxu0
        %1462 = vmatprep.mubr.f32.mxu0 0.0
        %1463 = vmatmul.mubr.f32.gmra.mrb[0].mxu0 %v1363
        %v1464 = vpop.f32.mrb[0].mxu0
        %v1465 = vadd.f32 0.0, %v1464
        %v1466 = vpop.f32.mrb[0].mxu0
        %1467 = vmatprep.mubr.f32.mxu0 0.0
        %1468 = vmatmul.mubr.f32.gmra.mrb[0].mxu0 %v1366
        %v1469 = vpop.f32.mrb[0].mxu0
        %v1470 = vadd.f32 0.0, %v1469
        %v1471 = vpop.f32.mrb[0].mxu0
        %1472 = vmatprep.mubr.f32.mxu0 0.0
        %1473 = vmatmul.mubr.f32.gmra.mrb[0].mxu0 %v1369
        %v1474 = vpop.f32.mrb[0].mxu0
        %v1475 = vadd.f32 0.0, %v1474
        %v1476 = vpop.f32.mrb[0].mxu0
        %1477 = vmatprep.mubr.f32.mxu0 0.0
        %1478 = vmatmul.mubr.f32.gmra.mrb[0].mxu0 %v1372
        %v1479 = vpop.f32.mrb[0].mxu0
        %v1480 = vadd.f32 0.0, %v1479
        %v1481 = vpop.f32.mrb[0].mxu0
        %1482 = vmatprep.mubr.f32.mxu0 0.0
        %1483 = vmatmul.mubr.f32.gmra.mrb[0].mxu0 %v1375
        %v1484 = vpop.f32.mrb[0].mxu0
        %v1485 = vadd.f32 0.0, %v1484
        %v1486 = vpop.f32.mrb[0].mxu0
        %1487 = vdwg.mxu0
        %v1489 = vsel %vm1244, %v1337, 0
        %v1492 = vsel %vm1244, %v1338, 0
        %v1495 = vsel %vm1244, %v1339, 0
        %v1498 = vsel %vm1244, %v1340, 0
        %v1501 = vsel %vm1244, %v1341, 0
        %v1504 = vsel %vm1244, %v1342, 0
        %v1507 = vsel %vm1244, %v1343, 0
        %v1510 = vsel %vm1244, %v1344, 0
        %v1513 = vsel %vm1244, %v1287, 0
        %v1516 = vsel %vm1244, %v1288, 0
        %1518 = vmatprep.subr.mxu0 0.0
        %1519 = vmatpush1.xpose.msra.mxu0 %v1513
        %1520 = vmatprep.subr.mxu0 0.0
        %1521 = vmatpush1.xpose.msra.mxu0 %v1516
        %1522 = vmatprep.subr.mxu0 0.0
        %1523 = vmatpush1.xpose.msra.mxu0 0.0
        %1524 = vmatprep.subr.mxu0 0.0
        %1525 = vmatpush1.xpose.msra.mxu0 0.0
        %1526 = vmatprep.subr.mxu0 0.0
        %1527 = vmatpush1.xpose.msra.mxu0 0.0
        %1528 = vmatprep.subr.mxu0 0.0
        %1529 = vmatpush1.xpose.msra.mxu0 0.0
        %1530 = vmatprep.subr.mxu0 0.0
        %1531 = vmatpush1.xpose.msra.mxu0 0.0
        %1532 = vmatprep.subr.mxu0 0.0
        %1533 = vmatpush1.xpose.msra.mxu0 0.0
        %1534 = vmatprep.subr.mxu0 0.0
        %1535 = vmatpush1.xpose.msra.mxu0 0.0
        %1536 = vmatprep.subr.mxu0 0.0
        %1537 = vmatpush1.xpose.msra.mxu0 0.0
        %1538 = vmatprep.subr.mxu0 0.0
        %1539 = vmatpush1.xpose.msra.mxu0 0.0
        %1540 = vmatprep.subr.mxu0 0.0
        %1541 = vmatpush1.xpose.msra.mxu0 0.0
        %1542 = vmatprep.subr.mxu0 0.0
        %1543 = vmatpush1.xpose.msra.mxu0 0.0
        %1544 = vmatprep.subr.mxu0 0.0
        %1545 = vmatpush1.xpose.msra.mxu0 0.0
        %1546 = vmatprep.subr.mxu0 0.0
        %1547 = vmatpush1.xpose.msra.mxu0 0.0
        %1548 = vmatprep.subr.mxu0 0.0
        %1549 = vmatpush1.xpose.msra.mxu0 0.0
        %1550 = vmatprep.subr.mxu0 0.0
        %1551 = vmatpush1.xpose.msra.mxu0 0.0
        %1552 = vmatprep.subr.mxu0 0.0
        %1553 = vmatpush1.xpose.msra.mxu0 0.0
        %1554 = vmatprep.subr.mxu0 0.0
        %1555 = vmatpush1.xpose.msra.mxu0 0.0
        %1556 = vmatprep.subr.mxu0 0.0
        %1557 = vmatpush1.xpose.msra.mxu0 0.0
        %1558 = vmatprep.subr.mxu0 0.0
        %1559 = vmatpush1.xpose.msra.mxu0 0.0
        %1560 = vmatprep.subr.mxu0 0.0
        %1561 = vmatpush1.xpose.msra.mxu0 0.0
        %1562 = vmatprep.subr.mxu0 0.0
        %1563 = vmatpush1.xpose.msra.mxu0 0.0
        %1564 = vmatprep.subr.mxu0 0.0
        %1565 = vmatpush1.xpose.msra.mxu0 0.0
        %1566 = vmatprep.subr.mxu0 0.0
        %1567 = vmatpush1.xpose.msra.mxu0 0.0
        %1568 = vmatprep.subr.mxu0 0.0
        %1569 = vmatpush1.xpose.msra.mxu0 0.0
        %1570 = vmatprep.subr.mxu0 0.0
        %1571 = vmatpush1.xpose.msra.mxu0 0.0
        %1572 = vmatprep.subr.mxu0 0.0
        %1573 = vmatpush1.xpose.msra.mxu0 0.0
        %1574 = vmatprep.subr.mxu0 0.0
        %1575 = vmatpush1.xpose.msra.mxu0 0.0
        %1576 = vmatprep.subr.mxu0 0.0
        %1577 = vmatpush1.xpose.msra.mxu0 0.0
        %1578 = vmatprep.subr.mxu0 0.0
        %1579 = vmatpush1.xpose.msra.mxu0 0.0
        %1580 = vmatprep.subr.mxu0 0.0
        %1581 = vmatpush1.xpose.msra.mxu0 0.0
        %1582 = vmatprep.mubr.f32.mxu0 0.0
        %1583 = vmatmul.mubr.f32.gmra.mrb[0].mxu0 %v1489
        %v1584 = vpop.f32.mrb[0].mxu0
        %v1585 = vadd.f32 0.0, %v1584
        %v1586 = vpop.f32.mrb[0].mxu0
        %1587 = vmatprep.mubr.f32.mxu0 0.0
        %1588 = vmatmul.mubr.f32.gmra.mrb[0].mxu0 %v1492
        %v1589 = vpop.f32.mrb[0].mxu0
        %v1590 = vadd.f32 0.0, %v1589
        %v1591 = vpop.f32.mrb[0].mxu0
        %1592 = vmatprep.mubr.f32.mxu0 0.0
        %1593 = vmatmul.mubr.f32.gmra.mrb[0].mxu0 %v1495
        %v1594 = vpop.f32.mrb[0].mxu0
        %v1595 = vadd.f32 0.0, %v1594
        %v1596 = vpop.f32.mrb[0].mxu0
        %1597 = vmatprep.mubr.f32.mxu0 0.0
        %1598 = vmatmul.mubr.f32.gmra.mrb[0].mxu0 %v1498
        %v1599 = vpop.f32.mrb[0].mxu0
        %v1600 = vadd.f32 0.0, %v1599
        %v1601 = vpop.f32.mrb[0].mxu0
        %1602 = vmatprep.mubr.f32.mxu0 0.0
        %1603 = vmatmul.mubr.f32.gmra.mrb[0].mxu0 %v1501
        %v1604 = vpop.f32.mrb[0].mxu0
        %v1605 = vadd.f32 0.0, %v1604
        %v1606 = vpop.f32.mrb[0].mxu0
        %1607 = vmatprep.mubr.f32.mxu0 0.0
        %1608 = vmatmul.mubr.f32.gmra.mrb[0].mxu0 %v1504
        %v1609 = vpop.f32.mrb[0].mxu0
        %v1610 = vadd.f32 0.0, %v1609
        %v1611 = vpop.f32.mrb[0].mxu0
        %1612 = vmatprep.mubr.f32.mxu0 0.0
        %1613 = vmatmul.mubr.f32.gmra.mrb[0].mxu0 %v1507
        %v1614 = vpop.f32.mrb[0].mxu0
        %v1615 = vadd.f32 0.0, %v1614
        %v1616 = vpop.f32.mrb[0].mxu0
        %1617 = vmatprep.mubr.f32.mxu0 0.0
        %1618 = vmatmul.mubr.f32.gmra.mrb[0].mxu0 %v1510
        %v1619 = vpop.f32.mrb[0].mxu0
        %v1620 = vadd.f32 0.0, %v1619
        %v1621 = vpop.f32.mrb[0].mxu0
        %1622 = vdwg.mxu0
        %1623 = vxpose.xlu0.b32.start [1/16] %v1450, 128
        %1624 = vxpose.xlu0.b32.cont [2/16] %v1455, 128
        %1625 = vxpose.xlu0.b32.cont [3/16] %v1460, 128
        %1626 = vxpose.xlu0.b32.cont [4/16] %v1465, 128
        %1627 = vxpose.xlu0.b32.cont [5/16] %v1470, 128
        %1628 = vxpose.xlu0.b32.cont [6/16] %v1475, 128
        %1629 = vxpose.xlu0.b32.cont [7/16] %v1480, 128
        %1630 = vxpose.xlu0.b32.cont [8/16] %v1485, 128
        %1631 = vxpose.xlu0.b32.cont [9/16] 0.0, 128
        %1632 = vxpose.xlu0.b32.cont [10/16] 0.0, 128
        %1633 = vxpose.xlu0.b32.cont [11/16] 0.0, 128
        %1634 = vxpose.xlu0.b32.cont [12/16] 0.0, 128
        %1635 = vxpose.xlu0.b32.cont [13/16] 0.0, 128
        %1636 = vxpose.xlu0.b32.cont [14/16] 0.0, 128
        %1637 = vxpose.xlu0.b32.cont [15/16] 0.0, 128
        %1638 = vxpose.xlu0.b32.end [16/16] 0.0, 128
        %v1639 = vpop.trf.xlu0
        %v1640 = vpop.trf.xlu0
        %v1641 = vpop.trf.xlu0
        %v1642 = vpop.trf.xlu0
        %v1643 = vpop.trf.xlu0
        %v1644 = vpop.trf.xlu0
        %v1645 = vpop.trf.xlu0
        %v1646 = vpop.trf.xlu0
        %v1647 = vpop.trf.xlu0
        %v1648 = vpop.trf.xlu0
        %v1649 = vpop.trf.xlu0
        %v1650 = vpop.trf.xlu0
        %v1651 = vpop.trf.xlu0
        %v1652 = vpop.trf.xlu0
        %v1653 = vpop.trf.xlu0
        %v1654 = vpop.trf.xlu0
        %1655 = vxpose.xlu0.b32.start [1/16] %v1585, 128
        %1656 = vxpose.xlu0.b32.cont [2/16] %v1590, 128
        %1657 = vxpose.xlu0.b32.cont [3/16] %v1595, 128
        %1658 = vxpose.xlu0.b32.cont [4/16] %v1600, 128
        %1659 = vxpose.xlu0.b32.cont [5/16] %v1605, 128
        %1660 = vxpose.xlu0.b32.cont [6/16] %v1610, 128
        %1661 = vxpose.xlu0.b32.cont [7/16] %v1615, 128
        %1662 = vxpose.xlu0.b32.cont [8/16] %v1620, 128
        %1663 = vxpose.xlu0.b32.cont [9/16] 0.0, 128
        %1664 = vxpose.xlu0.b32.cont [10/16] 0.0, 128
        %1665 = vxpose.xlu0.b32.cont [11/16] 0.0, 128
        %1666 = vxpose.xlu0.b32.cont [12/16] 0.0, 128
        %1667 = vxpose.xlu0.b32.cont [13/16] 0.0, 128
        %1668 = vxpose.xlu0.b32.cont [14/16] 0.0, 128
        %1669 = vxpose.xlu0.b32.cont [15/16] 0.0, 128
        %1670 = vxpose.xlu0.b32.end [16/16] 0.0, 128
        %v1671 = vpop.trf.xlu0
        %v1672 = vpop.trf.xlu0
        %v1673 = vpop.trf.xlu0
        %v1674 = vpop.trf.xlu0
        %v1675 = vpop.trf.xlu0
        %v1676 = vpop.trf.xlu0
        %v1677 = vpop.trf.xlu0
        %v1678 = vpop.trf.xlu0
        %v1679 = vpop.trf.xlu0
        %v1680 = vpop.trf.xlu0
        %v1681 = vpop.trf.xlu0
        %v1682 = vpop.trf.xlu0
        %v1683 = vpop.trf.xlu0
        %v1684 = vpop.trf.xlu0
        %v1685 = vpop.trf.xlu0
        %v1686 = vpop.trf.xlu0
        %v1687 = vcombine.high %v1639, 0.0
        %v1689 = vunpack.c.l.s4 1983009808
        %v1690 = vunpack.c.0.s8 %v1689
        %v1691 = vlaneseq
        %v1692 = vshrl.u32 %v1691, 7
        %v1693 = vsub.s32 %v1690, %v1692
        %v1694 = vrot.slane %v1639, %v1693
        %v1696 = vunpack.c.l.s4 1983009808
        %v1697 = vunpack.c.0.s8 %v1696
        %v1698 = vlaneseq
        %v1699 = vshrl.u32 %v1698, 7
        %v1700 = vsub.s32 %v1697, %v1699
        %v1701 = vrot.slane %v1687, %v1700
        %v1702 = vcombine.high %v1671, 0.0
        %v1704 = vunpack.c.l.s4 1983009808
        %v1705 = vunpack.c.0.s8 %v1704
        %v1706 = vlaneseq
        %v1707 = vshrl.u32 %v1706, 7
        %v1708 = vsub.s32 %v1705, %v1707
        %v1709 = vrot.slane %v1671, %v1708
        %v1711 = vunpack.c.l.s4 1983009808
        %v1712 = vunpack.c.0.s8 %v1711
        %v1713 = vlaneseq
        %v1714 = vshrl.u32 %v1713, 7
        %v1715 = vsub.s32 %v1712, %v1714
        %v1716 = vrot.slane %v1702, %v1715
        %v1717 = vcombine.low %v1694, %v1709
        %v1718 = vcombine.high %v1694, %v1709
        %v1720 = vunpack.c.l.s4 1934713408
        %v1721 = vunpack.c.0.s8 %v1720
        %v1722 = vlaneseq
        %v1723 = vshrl.u32 %v1722, 7
        %v1724 = vsub.s32 %v1721, %v1723
        %v1725 = vrot.slane %v1717, %v1724
        %v1727 = vunpack.c.l.s4 1934713408
        %v1728 = vunpack.c.0.s8 %v1727
        %v1729 = vlaneseq
        %v1730 = vshrl.u32 %v1729, 7
        %v1731 = vsub.s32 %v1728, %v1730
        %v1732 = vrot.slane %v1718, %v1731
        %v1733 = vcombine.low %v1701, %v1716
        %v1734 = vcombine.high %v1701, %v1716
        %v1736 = vunpack.c.l.s4 1934713408
        %v1737 = vunpack.c.0.s8 %v1736
        %v1738 = vlaneseq
        %v1739 = vshrl.u32 %v1738, 7
        %v1740 = vsub.s32 %v1737, %v1739
        %v1741 = vrot.slane %v1733, %v1740
        %v1743 = vunpack.c.l.s4 1934713408
        %v1744 = vunpack.c.0.s8 %v1743
        %v1745 = vlaneseq
        %v1746 = vshrl.u32 %v1745, 7
        %v1747 = vsub.s32 %v1744, %v1746
        %v1748 = vrot.slane %v1734, %v1747
        %v1749 = vcombine.high %v1725, 0.0
        %v1750 = vcombine.high %v1732, 0.0
        %v1751 = vcombine.high %v1741, 0.0
        %v1752 = vcombine.high %v1748, 0.0
        %v1753 = vcombine.high %v1640, 0.0
        %v1755 = vunpack.c.l.s4 1983009808
        %v1756 = vunpack.c.0.s8 %v1755
        %v1757 = vlaneseq
        %v1758 = vshrl.u32 %v1757, 7
        %v1759 = vsub.s32 %v1756, %v1758
        %v1760 = vrot.slane %v1640, %v1759
        %v1762 = vunpack.c.l.s4 1983009808
        %v1763 = vunpack.c.0.s8 %v1762
        %v1764 = vlaneseq
        %v1765 = vshrl.u32 %v1764, 7
        %v1766 = vsub.s32 %v1763, %v1765
        %v1767 = vrot.slane %v1753, %v1766
        %v1768 = vcombine.high %v1672, 0.0
        %v1770 = vunpack.c.l.s4 1983009808
        %v1771 = vunpack.c.0.s8 %v1770
        %v1772 = vlaneseq
        %v1773 = vshrl.u32 %v1772, 7
        %v1774 = vsub.s32 %v1771, %v1773
        %v1775 = vrot.slane %v1672, %v1774
        %v1777 = vunpack.c.l.s4 1983009808
        %v1778 = vunpack.c.0.s8 %v1777
        %v1779 = vlaneseq
        %v1780 = vshrl.u32 %v1779, 7
        %v1781 = vsub.s32 %v1778, %v1780
        %v1782 = vrot.slane %v1768, %v1781
        %v1783 = vcombine.low %v1760, %v1775
        %v1784 = vcombine.high %v1760, %v1775
        %v1786 = vunpack.c.l.s4 1934713408
        %v1787 = vunpack.c.0.s8 %v1786
        %v1788 = vlaneseq
        %v1789 = vshrl.u32 %v1788, 7
        %v1790 = vsub.s32 %v1787, %v1789
        %v1791 = vrot.slane %v1783, %v1790
        %v1793 = vunpack.c.l.s4 1934713408
        %v1794 = vunpack.c.0.s8 %v1793
        %v1795 = vlaneseq
        %v1796 = vshrl.u32 %v1795, 7
        %v1797 = vsub.s32 %v1794, %v1796
        %v1798 = vrot.slane %v1784, %v1797
        %v1799 = vcombine.low %v1767, %v1782
        %v1800 = vcombine.high %v1767, %v1782
        %v1802 = vunpack.c.l.s4 1934713408
        %v1803 = vunpack.c.0.s8 %v1802
        %v1804 = vlaneseq
        %v1805 = vshrl.u32 %v1804, 7
        %v1806 = vsub.s32 %v1803, %v1805
        %v1807 = vrot.slane %v1799, %v1806
        %v1809 = vunpack.c.l.s4 1934713408
        %v1810 = vunpack.c.0.s8 %v1809
        %v1811 = vlaneseq
        %v1812 = vshrl.u32 %v1811, 7
        %v1813 = vsub.s32 %v1810, %v1812
        %v1814 = vrot.slane %v1800, %v1813
        %v1815 = vcombine.high %v1791, 0.0
        %v1816 = vcombine.high %v1798, 0.0
        %v1817 = vcombine.high %v1807, 0.0
        %v1818 = vcombine.high %v1814, 0.0
        %v1819 = vcombine.low %v1725, %v1732
        %v1821 = vunpack.c.l.s4 1983009808
        %v1822 = vunpack.c.0.s8 %v1821
        %v1823 = vlaneseq
        %v1824 = vshrl.u32 %v1823, 7
        %v1825 = vsub.s32 %v1822, %v1824
        %v1826 = vrot.slane %v1819, %v1825
        %v1827 = vcombine.low %v1749, %v1750
        %v1829 = vunpack.c.l.s4 1983009808
        %v1830 = vunpack.c.0.s8 %v1829
        %v1831 = vlaneseq
        %v1832 = vshrl.u32 %v1831, 7
        %v1833 = vsub.s32 %v1830, %v1832
        %v1834 = vrot.slane %v1827, %v1833
        %v1835 = vcombine.low %v1741, %v1748
        %v1837 = vunpack.c.l.s4 1983009808
        %v1838 = vunpack.c.0.s8 %v1837
        %v1839 = vlaneseq
        %v1840 = vshrl.u32 %v1839, 7
        %v1841 = vsub.s32 %v1838, %v1840
        %v1842 = vrot.slane %v1835, %v1841
        %v1843 = vcombine.low %v1751, %v1752
        %v1845 = vunpack.c.l.s4 1983009808
        %v1846 = vunpack.c.0.s8 %v1845
        %v1847 = vlaneseq
        %v1848 = vshrl.u32 %v1847, 7
        %v1849 = vsub.s32 %v1846, %v1848
        %v1850 = vrot.slane %v1843, %v1849
        %v1851 = vcombine.low %v1826, %v1834
        %v1853 = vunpack.c.l.s4 1934713408
        %v1854 = vunpack.c.0.s8 %v1853
        %v1855 = vlaneseq
        %v1856 = vshrl.u32 %v1855, 7
        %v1857 = vsub.s32 %v1854, %v1856
        %v1858 = vrot.slane %v1851, %v1857
        %v1859 = vcombine.low %v1842, %v1850
        %v1861 = vunpack.c.l.s4 1934713408
        %v1862 = vunpack.c.0.s8 %v1861
        %v1863 = vlaneseq
        %v1864 = vshrl.u32 %v1863, 7
        %v1865 = vsub.s32 %v1862, %v1864
        %v1866 = vrot.slane %v1859, %v1865
        %v1867 = vcombine.low %v1858, %v1866
        %v1868 = vcombine.high %v1858, %v1866
        %v1869 = vcombine.low %v1791, %v1798
        %v1871 = vunpack.c.l.s4 1983009808
        %v1872 = vunpack.c.0.s8 %v1871
        %v1873 = vlaneseq
        %v1874 = vshrl.u32 %v1873, 7
        %v1875 = vsub.s32 %v1872, %v1874
        %v1876 = vrot.slane %v1869, %v1875
        %v1877 = vcombine.low %v1815, %v1816
        %v1879 = vunpack.c.l.s4 1983009808
        %v1880 = vunpack.c.0.s8 %v1879
        %v1881 = vlaneseq
        %v1882 = vshrl.u32 %v1881, 7
        %v1883 = vsub.s32 %v1880, %v1882
        %v1884 = vrot.slane %v1877, %v1883
        %v1885 = vcombine.low %v1807, %v1814
        %v1887 = vunpack.c.l.s4 1983009808
        %v1888 = vunpack.c.0.s8 %v1887
        %v1889 = vlaneseq
        %v1890 = vshrl.u32 %v1889, 7
        %v1891 = vsub.s32 %v1888, %v1890
        %v1892 = vrot.slane %v1885, %v1891
        %v1893 = vcombine.low %v1817, %v1818
        %v1895 = vunpack.c.l.s4 1983009808
        %v1896 = vunpack.c.0.s8 %v1895
        %v1897 = vlaneseq
        %v1898 = vshrl.u32 %v1897, 7
        %v1899 = vsub.s32 %v1896, %v1898
        %v1900 = vrot.slane %v1893, %v1899
        %v1901 = vcombine.low %v1876, %v1884
        %v1903 = vunpack.c.l.s4 1934713408
        %v1904 = vunpack.c.0.s8 %v1903
        %v1905 = vlaneseq
        %v1906 = vshrl.u32 %v1905, 7
        %v1907 = vsub.s32 %v1904, %v1906
        %v1908 = vrot.slane %v1901, %v1907
        %v1909 = vcombine.low %v1892, %v1900
        %v1911 = vunpack.c.l.s4 1934713408
        %v1912 = vunpack.c.0.s8 %v1911
        %v1913 = vlaneseq
        %v1914 = vshrl.u32 %v1913, 7
        %v1915 = vsub.s32 %v1912, %v1914
        %v1916 = vrot.slane %v1909, %v1915
        %v1917 = vcombine.low %v1908, %v1916
        %v1918 = vcombine.high %v1908, %v1916
        %1921 = vrot.lane.b32.xlu0 %v1868, 64
        %v1922 = vpop.permute.xlu0 %1921
        %1923 = vrot.lane.b32.xlu0 %v1918, 64
        %v1924 = vpop.permute.xlu0 %1923
        %v1927 = vsel %vm1081, %v1867, %v1922
        %v1928 = vsel %vm1081, %v1917, %v1924
        %v1929 = vld [vmem:[%s7] sm:$0xf]
        %v1930 = vld [vmem:[%s7 + $0x4] sm:$0xf]
        %v1931 = vld [vmem:[%s7 + $0x8] sm:$0xf]
        %v1932 = vld [vmem:[%s7 + $0xc] sm:$0xf]
        %v1933 = vld [vmem:[%s7 + $0x10] sm:$0xf]
        %v1934 = vld [vmem:[%s7 + $0x14] sm:$0xf]
        %v1935 = vld [vmem:[%s7 + $0x18] sm:$0xf]
        %v1936 = vld [vmem:[%s7 + $0x1c] sm:$0xf]
        %v1937 = vld [vmem:[%s7 + $0x20] sm:$0xf]
        %v1938 = vld [vmem:[%s7 + $0x24] sm:$0xf]
        %v1939 = vld [vmem:[%s7 + $0x28] sm:$0xf]
        %v1940 = vld [vmem:[%s7 + $0x2c] sm:$0xf]
        %v1941 = vld [vmem:[%s7 + $0x30] sm:$0xf]
        %v1942 = vld [vmem:[%s7 + $0x34] sm:$0xf]
        %v1943 = vld [vmem:[%s7 + $0x38] sm:$0xf]
        %v1944 = vld [vmem:[%s7 + $0x3c] sm:$0xf]
        %v1945 = vld [vmem:[%s8] sm:$0x1]
        %v1946 = vpack.c.bf16 %v1928, %v1927
        %v1948 = vlaneseq
        %v1949 = vshrl.u32 %v1948, 7
        %v1950 = vsub.s32 0, %v1949
        %v1951 = vrot.slane %v1945, %v1950
        %v1969 = vunpack.c.l.b16 %v1929
        %v1970 = vunpack.c.l.b16 %v1930
        %v1971 = vunpack.c.l.b16 %v1931
        %v1972 = vunpack.c.l.b16 %v1932
        %v1973 = vunpack.c.l.b16 %v1933
        %v1974 = vunpack.c.l.b16 %v1934
        %v1975 = vunpack.c.l.b16 %v1935
        %v1976 = vunpack.c.l.b16 %v1936
        %v1977 = vunpack.c.l.b16 %v1937
        %v1978 = vunpack.c.l.b16 %v1938
        %v1979 = vunpack.c.l.b16 %v1939
        %v1980 = vunpack.c.l.b16 %v1940
        %v1981 = vunpack.c.l.b16 %v1941
        %v1982 = vunpack.c.l.b16 %v1942
        %v1983 = vunpack.c.l.b16 %v1943
        %v1984 = vunpack.c.l.b16 %v1944
        %v1985 = vpack.c.b16 %v1970, %v1969
        %v1986 = vpack.c.b16 %v1972, %v1971
        %v1987 = vpack.c.b16 %v1974, %v1973
        %v1988 = vpack.c.b16 %v1976, %v1975
        %v1989 = vpack.c.b16 %v1978, %v1977
        %v1990 = vpack.c.b16 %v1980, %v1979
        %v1991 = vpack.c.b16 %v1982, %v1981
        %v1992 = vpack.c.b16 %v1984, %v1983
        %2001 = vmatprep.subr.bf16.mxu0 0
        %2002 = vmatpush1.bf16.msra.mxu0 %v1985
        %2003 = vmatprep.subr.bf16.mxu0 0
        %2004 = vmatpush1.bf16.msra.mxu0 %v1986
        %2005 = vmatprep.subr.bf16.mxu0 0
        %2006 = vmatpush1.bf16.msra.mxu0 %v1987
        %2007 = vmatprep.subr.bf16.mxu0 0
        %2008 = vmatpush1.bf16.msra.mxu0 %v1988
        %2009 = vmatprep.subr.bf16.mxu0 0
        %2010 = vmatpush1.bf16.msra.mxu0 %v1989
        %2011 = vmatprep.subr.bf16.mxu0 0
        %2012 = vmatpush1.bf16.msra.mxu0 %v1990
        %2013 = vmatprep.subr.bf16.mxu0 0
        %2014 = vmatpush1.bf16.msra.mxu0 %v1991
        %2015 = vmatprep.subr.bf16.mxu0 0
        %2016 = vmatpush1.bf16.msra.mxu0 %v1992
        %2017 = vmatprep.subr.bf16.mxu0 0
        %2018 = vmatpush1.bf16.msra.mxu0 0
        %2019 = vmatprep.subr.bf16.mxu0 0
        %2020 = vmatpush1.bf16.msra.mxu0 0
        %2021 = vmatprep.subr.bf16.mxu0 0
        %2022 = vmatpush1.bf16.msra.mxu0 0
        %2023 = vmatprep.subr.bf16.mxu0 0
        %2024 = vmatpush1.bf16.msra.mxu0 0
        %2025 = vmatprep.subr.bf16.mxu0 0
        %2026 = vmatpush1.bf16.msra.mxu0 0
        %2027 = vmatprep.subr.bf16.mxu0 0
        %2028 = vmatpush1.bf16.msra.mxu0 0
        %2029 = vmatprep.subr.bf16.mxu0 0
        %2030 = vmatpush1.bf16.msra.mxu0 0
        %2031 = vmatprep.subr.bf16.mxu0 0
        %2032 = vmatpush1.bf16.msra.mxu0 0
        %2033 = vmatprep.mubr.bf16.mxu0 0
        %2034 = vmatmul.mubr.bf16.gmra.mrb[0].mxu0 %v1946
        %v2035 = vpop.f32.mrb[0].mxu0
        %v2036 = vadd.f32 %v1951, %v2035
        %v2037 = vpop.f32.mrb[0].mxu0
        %v2038 = vpop.f32.mrb[0].mxu0
        %v2039 = vadd.f32 %v1951, %v2038
        %v2040 = vpop.f32.mrb[0].mxu0
        %2041 = vdwg.mxu0
        %v2042 = vadd.f32 %v731, %v2036
        %v2043 = vadd.f32 %v732, %v2039
        %v2044 = vld [vmem:[%s9] sm:$0x1]
        %v2045 = vld [vmem:[%s10] sm:$0x1]
        %2046 = vadd.xlane.f32.xlu0 %v2042
        %v2047 = vpop.xlane.xlu0 %2046
        %2048 = vadd.xlane.f32.xlu0 %v2043
        %v2049 = vpop.xlane.xlu0 %2048
        %v2050 = vmul.f32 %v2047, %v698
        %v2051 = vmul.f32 %v2049, %v698
        %v2052 = vsub.f32 %v2042, %v2050
        %v2053 = vsub.f32 %v2043, %v2051
        %v2054 = vmul.f32 %v2052, %v2052
        %v2055 = vmul.f32 %v2053, %v2053
        %2056 = vadd.xlane.f32.xlu0 %v2054
        %v2057 = vpop.xlane.xlu0 %2056
        %2058 = vadd.xlane.f32.xlu0 %v2055
        %v2059 = vpop.xlane.xlu0 %2058
        %v2060 = vmul.f32 %v2057, %v698
        %v2061 = vmul.f32 %v2059, %v698
        %v2062 = vadd.f32 %v2060, 1e-12
        %v2063 = vadd.f32 %v2061, 1e-12
        %v2064 = vrsqrt.pop %v2062
        %v2065 = vrsqrt.pop %v2063
        %v2066 = vmul.f32 %v2052, %v2064
        %v2067 = vmul.f32 %v2053, %v2065
        %v2069 = vlaneseq
        %v2070 = vshrl.u32 %v2069, 7
        %v2071 = vsub.s32 0, %v2070
        %v2072 = vrot.slane %v2044, %v2071
        %v2074 = vmul.f32 %v2066, %v2072
        %v2075 = vmul.f32 %v2067, %v2072
        %v2077 = vlaneseq
        %v2078 = vshrl.u32 %v2077, 7
        %v2079 = vsub.s32 0, %v2078
        %v2080 = vrot.slane %v2045, %v2079
        %v2082 = vadd.f32 %v2074, %v2080
        %v2083 = vadd.f32 %v2075, %v2080
        %v2084 = vld [vmem:[%s11] sm:$0xff]
        %v2085 = vld [vmem:[%s11 + $0x8] sm:$0xff]
        %v2086 = vld [vmem:[%s11 + $0x10] sm:$0xff]
        %v2087 = vld [vmem:[%s11 + $0x18] sm:$0xff]
        %v2088 = vld [vmem:[%s11 + $0x20] sm:$0xff]
        %v2089 = vld [vmem:[%s11 + $0x28] sm:$0xff]
        %v2090 = vld [vmem:[%s11 + $0x30] sm:$0xff]
        %v2091 = vld [vmem:[%s11 + $0x38] sm:$0xff]
        %v2092 = vld [vmem:[%s11 + $0x40] sm:$0xff]
        %v2093 = vld [vmem:[%s11 + $0x48] sm:$0xff]
        %v2094 = vld [vmem:[%s11 + $0x50] sm:$0xff]
        %v2095 = vld [vmem:[%s11 + $0x58] sm:$0xff]
        %v2096 = vld [vmem:[%s11 + $0x60] sm:$0xff]
        %v2097 = vld [vmem:[%s11 + $0x68] sm:$0xff]
        %v2098 = vld [vmem:[%s11 + $0x70] sm:$0xff]
        %v2099 = vld [vmem:[%s11 + $0x78] sm:$0xff]
        %v2100 = vld [vmem:[%s12] sm:$0x3]
        %v2101 = vpack.c.bf16 %v2083, %v2082
        %v2103 = vlaneseq
        %v2104 = vshrl.u32 %v2103, 7
        %v2105 = vsub.s32 0, %v2104
        %v2106 = vrot.slane %v2100, %v2105
        %v2107 = vlaneseq
        %v2108 = vshrl.u32 %v2107, 7
        %v2109 = vsub.s32 1, %v2108
        %v2110 = vrot.slane %v2100, %v2109
        %v2129 = vunpack.c.l.b16 %v2084
        %v2130 = vunpack.c.h.b16 %v2084
        %v2131 = vunpack.c.l.b16 %v2085
        %v2132 = vunpack.c.h.b16 %v2085
        %v2133 = vunpack.c.l.b16 %v2086
        %v2134 = vunpack.c.h.b16 %v2086
        %v2135 = vunpack.c.l.b16 %v2087
        %v2136 = vunpack.c.h.b16 %v2087
        %v2137 = vunpack.c.l.b16 %v2088
        %v2138 = vunpack.c.h.b16 %v2088
        %v2139 = vunpack.c.l.b16 %v2089
        %v2140 = vunpack.c.h.b16 %v2089
        %v2141 = vunpack.c.l.b16 %v2090
        %v2142 = vunpack.c.h.b16 %v2090
        %v2143 = vunpack.c.l.b16 %v2091
        %v2144 = vunpack.c.h.b16 %v2091
        %v2145 = vunpack.c.l.b16 %v2092
        %v2146 = vunpack.c.h.b16 %v2092
        %v2147 = vunpack.c.l.b16 %v2093
        %v2148 = vunpack.c.h.b16 %v2093
        %v2149 = vunpack.c.l.b16 %v2094
        %v2150 = vunpack.c.h.b16 %v2094
        %v2151 = vunpack.c.l.b16 %v2095
        %v2152 = vunpack.c.h.b16 %v2095
        %v2153 = vunpack.c.l.b16 %v2096
        %v2154 = vunpack.c.h.b16 %v2096
        %v2155 = vunpack.c.l.b16 %v2097
        %v2156 = vunpack.c.h.b16 %v2097
        %v2157 = vunpack.c.l.b16 %v2098
        %v2158 = vunpack.c.h.b16 %v2098
        %v2159 = vunpack.c.l.b16 %v2099
        %v2160 = vunpack.c.h.b16 %v2099
        %v2161 = vpack.c.b16 %v2131, %v2129
        %v2162 = vpack.c.b16 %v2132, %v2130
        %v2163 = vpack.c.b16 %v2135, %v2133
        %v2164 = vpack.c.b16 %v2136, %v2134
        %v2165 = vpack.c.b16 %v2139, %v2137
        %v2166 = vpack.c.b16 %v2140, %v2138
        %v2167 = vpack.c.b16 %v2143, %v2141
        %v2168 = vpack.c.b16 %v2144, %v2142
        %v2169 = vpack.c.b16 %v2147, %v2145
        %v2170 = vpack.c.b16 %v2148, %v2146
        %v2171 = vpack.c.b16 %v2151, %v2149
        %v2172 = vpack.c.b16 %v2152, %v2150
        %v2173 = vpack.c.b16 %v2155, %v2153
        %v2174 = vpack.c.b16 %v2156, %v2154
        %v2175 = vpack.c.b16 %v2159, %v2157
        %v2176 = vpack.c.b16 %v2160, %v2158
        %2193 = vmatprep.subr.bf16.mxu0 %v2162
        %2194 = vmatpush1.bf16.msra.mxu0 %v2161
        %2195 = vmatprep.subr.bf16.mxu0 %v2164
        %2196 = vmatpush1.bf16.msra.mxu0 %v2163
        %2197 = vmatprep.subr.bf16.mxu0 %v2166
        %2198 = vmatpush1.bf16.msra.mxu0 %v2165
        %2199 = vmatprep.subr.bf16.mxu0 %v2168
        %2200 = vmatpush1.bf16.msra.mxu0 %v2167
        %2201 = vmatprep.subr.bf16.mxu0 %v2170
        %2202 = vmatpush1.bf16.msra.mxu0 %v2169
        %2203 = vmatprep.subr.bf16.mxu0 %v2172
        %2204 = vmatpush1.bf16.msra.mxu0 %v2171
        %2205 = vmatprep.subr.bf16.mxu0 %v2174
        %2206 = vmatpush1.bf16.msra.mxu0 %v2173
        %2207 = vmatprep.subr.bf16.mxu0 %v2176
        %2208 = vmatpush1.bf16.msra.mxu0 %v2175
        %2209 = vmatprep.subr.bf16.mxu0 0
        %2210 = vmatpush1.bf16.msra.mxu0 0
        %2211 = vmatprep.subr.bf16.mxu0 0
        %2212 = vmatpush1.bf16.msra.mxu0 0
        %2213 = vmatprep.subr.bf16.mxu0 0
        %2214 = vmatpush1.bf16.msra.mxu0 0
        %2215 = vmatprep.subr.bf16.mxu0 0
        %2216 = vmatpush1.bf16.msra.mxu0 0
        %2217 = vmatprep.subr.bf16.mxu0 0
        %2218 = vmatpush1.bf16.msra.mxu0 0
        %2219 = vmatprep.subr.bf16.mxu0 0
        %2220 = vmatpush1.bf16.msra.mxu0 0
        %2221 = vmatprep.subr.bf16.mxu0 0
        %2222 = vmatpush1.bf16.msra.mxu0 0
        %2223 = vmatprep.subr.bf16.mxu0 0
        %2224 = vmatpush1.bf16.msra.mxu0 0
        %2225 = vmatprep.mubr.bf16.mxu0 0
        %2226 = vmatmul.mubr.bf16.gmra.mrb[0].mxu0 %v2101
        %v2227 = vpop.f32.mrb[0].mxu0
        %v2228 = vadd.f32 %v2106, %v2227
        %v2229 = vpop.f32.mrb[0].mxu0
        %v2230 = vadd.f32 %v2110, %v2229
        %v2231 = vpop.f32.mrb[0].mxu0
        %v2232 = vadd.f32 %v2106, %v2231
        %v2233 = vpop.f32.mrb[0].mxu0
        %v2234 = vadd.f32 %v2110, %v2233
        %2235 = vdwg.mxu0
        %v2236 = vmul.f32 %v2228, %v2228
        %v2237 = vmul.f32 %v2230, %v2230
        %v2238 = vmul.f32 %v2232, %v2232
        %v2239 = vmul.f32 %v2234, %v2234
        %v2240 = vmul.f32 %v2228, %v2236
        %v2241 = vmul.f32 %v2230, %v2237
        %v2242 = vmul.f32 %v2232, %v2238
        %v2243 = vmul.f32 %v2234, %v2239
        %v2244 = vmul.f32 %v2240, 0.044715
        %v2245 = vmul.f32 %v2241, 0.044715
        %v2246 = vmul.f32 %v2242, 0.044715
        %v2247 = vmul.f32 %v2243, 0.044715
        %v2248 = vadd.f32 %v2228, %v2244
        %v2249 = vadd.f32 %v2230, %v2245
        %v2250 = vadd.f32 %v2232, %v2246
        %v2251 = vadd.f32 %v2234, %v2247
        %v2252 = vmul.f32 %v2248, 0.7978846
        %v2253 = vmul.f32 %v2249, 0.7978846
        %v2254 = vmul.f32 %v2250, 0.7978846
        %v2255 = vmul.f32 %v2251, 0.7978846
        %v2256 = vtanh.pop %v2252
        %v2257 = vtanh.pop %v2253
        %v2258 = vtanh.pop %v2254
        %v2259 = vtanh.pop %v2255
        %v2260 = vadd.f32 %v2256, 1.0
        %v2261 = vadd.f32 %v2257, 1.0
        %v2262 = vadd.f32 %v2258, 1.0
        %v2263 = vadd.f32 %v2259, 1.0
        %v2264 = vmul.f32 %v2260, 0.5
        %v2265 = vmul.f32 %v2261, 0.5
        %v2266 = vmul.f32 %v2262, 0.5
        %v2267 = vmul.f32 %v2263, 0.5
        %v2268 = vmul.f32 %v2228, %v2264
        %v2269 = vmul.f32 %v2230, %v2265
        %v2270 = vmul.f32 %v2232, %v2266
        %v2271 = vmul.f32 %v2234, %v2267
        %v2272 = vld [vmem:[#allocation6] sm:$0xf]
        %v2273 = vld [vmem:[#allocation6 + $0x4] sm:$0xf]
        %v2274 = vld [vmem:[#allocation6 + $0x8] sm:$0xf]
        %v2275 = vld [vmem:[#allocation6 + $0xc] sm:$0xf]
        %v2276 = vld [vmem:[#allocation6 + $0x10] sm:$0xf]
        %v2277 = vld [vmem:[#allocation6 + $0x14] sm:$0xf]
        %v2278 = vld [vmem:[#allocation6 + $0x18] sm:$0xf]
        %v2279 = vld [vmem:[#allocation6 + $0x1c] sm:$0xf]
        %v2280 = vld [vmem:[#allocation6 + $0x20] sm:$0xf]
        %v2281 = vld [vmem:[#allocation6 + $0x24] sm:$0xf]
        %v2282 = vld [vmem:[#allocation6 + $0x28] sm:$0xf]
        %v2283 = vld [vmem:[#allocation6 + $0x2c] sm:$0xf]
        %v2284 = vld [vmem:[#allocation6 + $0x30] sm:$0xf]
        %v2285 = vld [vmem:[#allocation6 + $0x34] sm:$0xf]
        %v2286 = vld [vmem:[#allocation6 + $0x38] sm:$0xf]
        %v2287 = vld [vmem:[#allocation6 + $0x3c] sm:$0xf]
        %v2288 = vld [vmem:[#allocation6 + $0x40] sm:$0xf]
        %v2289 = vld [vmem:[#allocation6 + $0x44] sm:$0xf]
        %v2290 = vld [vmem:[#allocation6 + $0x48] sm:$0xf]
        %v2291 = vld [vmem:[#allocation6 + $0x4c] sm:$0xf]
        %v2292 = vld [vmem:[#allocation6 + $0x50] sm:$0xf]
        %v2293 = vld [vmem:[#allocation6 + $0x54] sm:$0xf]
        %v2294 = vld [vmem:[#allocation6 + $0x58] sm:$0xf]
        %v2295 = vld [vmem:[#allocation6 + $0x5c] sm:$0xf]
        %v2296 = vld [vmem:[#allocation6 + $0x60] sm:$0xf]
        %v2297 = vld [vmem:[#allocation6 + $0x64] sm:$0xf]
        %v2298 = vld [vmem:[#allocation6 + $0x68] sm:$0xf]
        %v2299 = vld [vmem:[#allocation6 + $0x6c] sm:$0xf]
        %v2300 = vld [vmem:[#allocation6 + $0x70] sm:$0xf]
        %v2301 = vld [vmem:[#allocation6 + $0x74] sm:$0xf]
        %v2302 = vld [vmem:[#allocation6 + $0x78] sm:$0xf]
        %v2303 = vld [vmem:[#allocation6 + $0x7c] sm:$0xf]
        %v2304 = vld [vmem:[%s14] sm:$0x1]
        %v2305 = vpack.c.bf16 %v2270, %v2268
        %v2306 = vpack.c.bf16 %v2271, %v2269
        %v2308 = vlaneseq
        %v2309 = vshrl.u32 %v2308, 7
        %v2310 = vsub.s32 0, %v2309
        %v2311 = vrot.slane %v2304, %v2310
        %v2345 = vunpack.c.l.b16 %v2272
        %v2346 = vunpack.c.l.b16 %v2273
        %v2347 = vunpack.c.l.b16 %v2274
        %v2348 = vunpack.c.l.b16 %v2275
        %v2349 = vunpack.c.l.b16 %v2276
        %v2350 = vunpack.c.l.b16 %v2277
        %v2351 = vunpack.c.l.b16 %v2278
        %v2352 = vunpack.c.l.b16 %v2279
        %v2353 = vunpack.c.l.b16 %v2280
        %v2354 = vunpack.c.l.b16 %v2281
        %v2355 = vunpack.c.l.b16 %v2282
        %v2356 = vunpack.c.l.b16 %v2283
        %v2357 = vunpack.c.l.b16 %v2284
        %v2358 = vunpack.c.l.b16 %v2285
        %v2359 = vunpack.c.l.b16 %v2286
        %v2360 = vunpack.c.l.b16 %v2287
        %v2361 = vunpack.c.l.b16 %v2288
        %v2362 = vunpack.c.l.b16 %v2289
        %v2363 = vunpack.c.l.b16 %v2290
        %v2364 = vunpack.c.l.b16 %v2291
        %v2365 = vunpack.c.l.b16 %v2292
        %v2366 = vunpack.c.l.b16 %v2293
        %v2367 = vunpack.c.l.b16 %v2294
        %v2368 = vunpack.c.l.b16 %v2295
        %v2369 = vunpack.c.l.b16 %v2296
        %v2370 = vunpack.c.l.b16 %v2297
        %v2371 = vunpack.c.l.b16 %v2298
        %v2372 = vunpack.c.l.b16 %v2299
        %v2373 = vunpack.c.l.b16 %v2300
        %v2374 = vunpack.c.l.b16 %v2301
        %v2375 = vunpack.c.l.b16 %v2302
        %v2376 = vunpack.c.l.b16 %v2303
        %v2377 = vpack.c.b16 %v2346, %v2345
        %v2378 = vpack.c.b16 %v2348, %v2347
        %v2379 = vpack.c.b16 %v2350, %v2349
        %v2380 = vpack.c.b16 %v2352, %v2351
        %v2381 = vpack.c.b16 %v2354, %v2353
        %v2382 = vpack.c.b16 %v2356, %v2355
        %v2383 = vpack.c.b16 %v2358, %v2357
        %v2384 = vpack.c.b16 %v2360, %v2359
        %v2385 = vpack.c.b16 %v2362, %v2361
        %v2386 = vpack.c.b16 %v2364, %v2363
        %v2387 = vpack.c.b16 %v2366, %v2365
        %v2388 = vpack.c.b16 %v2368, %v2367
        %v2389 = vpack.c.b16 %v2370, %v2369
        %v2390 = vpack.c.b16 %v2372, %v2371
        %v2391 = vpack.c.b16 %v2374, %v2373
        %v2392 = vpack.c.b16 %v2376, %v2375
        %2409 = vmatprep.subr.bf16.mxu0 0
        %2410 = vmatpush1.bf16.msra.mxu0 %v2377
        %2411 = vmatprep.subr.bf16.mxu0 0
        %2412 = vmatpush1.bf16.msra.mxu0 %v2378
        %2413 = vmatprep.subr.bf16.mxu0 0
        %2414 = vmatpush1.bf16.msra.mxu0 %v2379
        %2415 = vmatprep.subr.bf16.mxu0 0
        %2416 = vmatpush1.bf16.msra.mxu0 %v2380
        %2417 = vmatprep.subr.bf16.mxu0 0
        %2418 = vmatpush1.bf16.msra.mxu0 %v2381
        %2419 = vmatprep.subr.bf16.mxu0 0
        %2420 = vmatpush1.bf16.msra.mxu0 %v2382
        %2421 = vmatprep.subr.bf16.mxu0 0
        %2422 = vmatpush1.bf16.msra.mxu0 %v2383
        %2423 = vmatprep.subr.bf16.mxu0 0
        %2424 = vmatpush1.bf16.msra.mxu0 %v2384
        %2425 = vmatprep.subr.bf16.mxu0 0
        %2426 = vmatpush1.bf16.msra.mxu0 %v2385
        %2427 = vmatprep.subr.bf16.mxu0 0
        %2428 = vmatpush1.bf16.msra.mxu0 %v2386
        %2429 = vmatprep.subr.bf16.mxu0 0
        %2430 = vmatpush1.bf16.msra.mxu0 %v2387
        %2431 = vmatprep.subr.bf16.mxu0 0
        %2432 = vmatpush1.bf16.msra.mxu0 %v2388
        %2433 = vmatprep.subr.bf16.mxu0 0
        %2434 = vmatpush1.bf16.msra.mxu0 %v2389
        %2435 = vmatprep.subr.bf16.mxu0 0
        %2436 = vmatpush1.bf16.msra.mxu0 %v2390
        %2437 = vmatprep.subr.bf16.mxu0 0
        %2438 = vmatpush1.bf16.msra.mxu0 %v2391
        %2439 = vmatprep.subr.bf16.mxu0 0
        %2440 = vmatpush1.bf16.msra.mxu0 %v2392
        %2441 = vmatprep.mubr.bf16.mxu0 %v2306
        %2442 = vmatmul.mubr.bf16.gmra.mrb[0].mxu0 %v2305
        %v2443 = vpop.f32.mrb[0].mxu0
        %v2444 = vadd.f32 %v2311, %v2443
        %v2445 = vpop.f32.mrb[0].mxu0
        %v2446 = vpop.f32.mrb[0].mxu0
        %v2447 = vadd.f32 %v2311, %v2446
        %v2448 = vpop.f32.mrb[0].mxu0
        %2449 = vdwg.mxu0
        %v2450 = vadd.f32 %v2082, %v2444
        %v2451 = vadd.f32 %v2083, %v2447
        %v2452 = vld [vmem:[#allocation7] sm:$0x1]
        %v2453 = vld [vmem:[%s16] sm:$0x1]
        %2454 = vadd.xlane.f32.xlu0 %v2450
        %v2455 = vpop.xlane.xlu0 %2454
        %2456 = vadd.xlane.f32.xlu0 %v2451
        %v2457 = vpop.xlane.xlu0 %2456
        %v2458 = vmul.f32 %v2455, %v698
        %v2459 = vmul.f32 %v2457, %v698
        %v2460 = vsub.f32 %v2450, %v2458
        %v2461 = vsub.f32 %v2451, %v2459
        %v2462 = vmul.f32 %v2460, %v2460
        %v2463 = vmul.f32 %v2461, %v2461
        %2464 = vadd.xlane.f32.xlu0 %v2462
        %v2465 = vpop.xlane.xlu0 %2464
        %2466 = vadd.xlane.f32.xlu0 %v2463
        %v2467 = vpop.xlane.xlu0 %2466
        %v2468 = vmul.f32 %v2465, %v698
        %v2469 = vmul.f32 %v2467, %v698
        %v2470 = vadd.f32 %v2468, 1e-12
        %v2471 = vadd.f32 %v2469, 1e-12
        %v2472 = vrsqrt.pop %v2470
        %v2473 = vrsqrt.pop %v2471
        %v2474 = vmul.f32 %v2460, %v2472
        %v2475 = vmul.f32 %v2461, %v2473
        %v2477 = vlaneseq
        %v2478 = vshrl.u32 %v2477, 7
        %v2479 = vsub.s32 0, %v2478
        %v2480 = vrot.slane %v2452, %v2479
        %v2482 = vmul.f32 %v2474, %v2480
        %v2483 = vmul.f32 %v2475, %v2480
        %v2485 = vlaneseq
        %v2486 = vshrl.u32 %v2485, 7
        %v2487 = vsub.s32 0, %v2486
        %v2488 = vrot.slane %v2453, %v2487
        %v2490 = vadd.f32 %v2482, %v2488
        %v2491 = vadd.f32 %v2483, %v2488
        %s2492 = scalar_lea.vmem [#allocation4], 192
        %v2493 = vld [vmem:[%s2492] sm:$0xff]
        %v2494 = vld [vmem:[%s2492 + $0x8] sm:$0xf]
        %v2495 = vld [vmem:[%s2492 + $0xc] sm:$0xff]
        %v2496 = vld [vmem:[%s2492 + $0x14] sm:$0xf]
        %v2497 = vld [vmem:[%s2492 + $0x18] sm:$0xff]
        %v2498 = vld [vmem:[%s2492 + $0x20] sm:$0xf]
        %v2499 = vld [vmem:[%s2492 + $0x24] sm:$0xff]
        %v2500 = vld [vmem:[%s2492 + $0x2c] sm:$0xf]
        %v2501 = vld [vmem:[%s2492 + $0x30] sm:$0xff]
        %v2502 = vld [vmem:[%s2492 + $0x38] sm:$0xf]
        %v2503 = vld [vmem:[%s2492 + $0x3c] sm:$0xff]
        %v2504 = vld [vmem:[%s2492 + $0x44] sm:$0xf]
        %v2505 = vld [vmem:[%s2492 + $0x48] sm:$0xff]
        %v2506 = vld [vmem:[%s2492 + $0x50] sm:$0xf]
        %v2507 = vld [vmem:[%s2492 + $0x54] sm:$0xff]
        %v2508 = vld [vmem:[%s2492 + $0x5c] sm:$0xf]
        %v2509 = vld [vmem:[%s2492 + $0x60] sm:$0xff]
        %v2510 = vld [vmem:[%s2492 + $0x68] sm:$0xf]
        %v2511 = vld [vmem:[%s2492 + $0x6c] sm:$0xff]
        %v2512 = vld [vmem:[%s2492 + $0x74] sm:$0xf]
        %v2513 = vld [vmem:[%s2492 + $0x78] sm:$0xff]
        %v2514 = vld [vmem:[%s2492 + $0x80] sm:$0xf]
        %v2515 = vld [vmem:[%s2492 + $0x84] sm:$0xff]
        %v2516 = vld [vmem:[%s2492 + $0x8c] sm:$0xf]
        %v2517 = vld [vmem:[%s2492 + $0x90] sm:$0xff]
        %v2518 = vld [vmem:[%s2492 + $0x98] sm:$0xf]
        %v2519 = vld [vmem:[%s2492 + $0x9c] sm:$0xff]
        %v2520 = vld [vmem:[%s2492 + $0xa4] sm:$0xf]
        %v2521 = vld [vmem:[%s2492 + $0xa8] sm:$0xff]
        %v2522 = vld [vmem:[%s2492 + $0xb0] sm:$0xf]
        %v2523 = vld [vmem:[%s2492 + $0xb4] sm:$0xff]
        %v2524 = vld [vmem:[%s2492 + $0xbc] sm:$0xf]
        %s2525 = scalar_lea.vmem %s6, 3
        %v2526 = vld [vmem:[%s2525] sm:$0x7]
        %v2527 = vpack.c.bf16 %v2491, %v2490
        %v2529 = vlaneseq
        %v2530 = vshrl.u32 %v2529, 7
        %v2531 = vsub.s32 0, %v2530
        %v2532 = vrot.slane %v2526, %v2531
        %v2533 = vlaneseq
        %v2534 = vshrl.u32 %v2533, 7
        %v2535 = vsub.s32 1, %v2534
        %v2536 = vrot.slane %v2526, %v2535
        %v2537 = vlaneseq
        %v2538 = vshrl.u32 %v2537, 7
        %v2539 = vsub.s32 2, %v2538
        %v2540 = vrot.slane %v2526, %v2539
        %v2576 = vunpack.c.l.b16 %v2493
        %v2577 = vunpack.c.h.b16 %v2493
        %v2578 = vunpack.c.l.b16 %v2494
        %v2579 = vunpack.c.l.b16 %v2495
        %v2580 = vunpack.c.h.b16 %v2495
        %v2581 = vunpack.c.l.b16 %v2496
        %v2582 = vunpack.c.l.b16 %v2497
        %v2583 = vunpack.c.h.b16 %v2497
        %v2584 = vunpack.c.l.b16 %v2498
        %v2585 = vunpack.c.l.b16 %v2499
        %v2586 = vunpack.c.h.b16 %v2499
        %v2587 = vunpack.c.l.b16 %v2500
        %v2588 = vunpack.c.l.b16 %v2501
        %v2589 = vunpack.c.h.b16 %v2501
        %v2590 = vunpack.c.l.b16 %v2502
        %v2591 = vunpack.c.l.b16 %v2503
        %v2592 = vunpack.c.h.b16 %v2503
        %v2593 = vunpack.c.l.b16 %v2504
        %v2594 = vunpack.c.l.b16 %v2505
        %v2595 = vunpack.c.h.b16 %v2505
        %v2596 = vunpack.c.l.b16 %v2506
        %v2597 = vunpack.c.l.b16 %v2507
        %v2598 = vunpack.c.h.b16 %v2507
        %v2599 = vunpack.c.l.b16 %v2508
        %v2600 = vunpack.c.l.b16 %v2509
        %v2601 = vunpack.c.h.b16 %v2509
        %v2602 = vunpack.c.l.b16 %v2510
        %v2603 = vunpack.c.l.b16 %v2511
        %v2604 = vunpack.c.h.b16 %v2511
        %v2605 = vunpack.c.l.b16 %v2512
        %v2606 = vunpack.c.l.b16 %v2513
        %v2607 = vunpack.c.h.b16 %v2513
        %v2608 = vunpack.c.l.b16 %v2514
        %v2609 = vunpack.c.l.b16 %v2515
        %v2610 = vunpack.c.h.b16 %v2515
        %v2611 = vunpack.c.l.b16 %v2516
        %v2612 = vunpack.c.l.b16 %v2517
        %v2613 = vunpack.c.h.b16 %v2517
        %v2614 = vunpack.c.l.b16 %v2518
        %v2615 = vunpack.c.l.b16 %v2519
        %v2616 = vunpack.c.h.b16 %v2519
        %v2617 = vunpack.c.l.b16 %v2520
        %v2618 = vunpack.c.l.b16 %v2521
        %v2619 = vunpack.c.h.b16 %v2521
        %v2620 = vunpack.c.l.b16 %v2522
        %v2621 = vunpack.c.l.b16 %v2523
        %v2622 = vunpack.c.h.b16 %v2523
        %v2623 = vunpack.c.l.b16 %v2524
        %v2624 = vpack.c.b16 %v2579, %v2576
        %v2625 = vpack.c.b16 %v2580, %v2577
        %v2626 = vpack.c.b16 %v2581, %v2578
        %v2627 = vpack.c.b16 %v2585, %v2582
        %v2628 = vpack.c.b16 %v2586, %v2583
        %v2629 = vpack.c.b16 %v2587, %v2584
        %v2630 = vpack.c.b16 %v2591, %v2588
        %v2631 = vpack.c.b16 %v2592, %v2589
        %v2632 = vpack.c.b16 %v2593, %v2590
        %v2633 = vpack.c.b16 %v2597, %v2594
        %v2634 = vpack.c.b16 %v2598, %v2595
        %v2635 = vpack.c.b16 %v2599, %v2596
        %v2636 = vpack.c.b16 %v2603, %v2600
        %v2637 = vpack.c.b16 %v2604, %v2601
        %v2638 = vpack.c.b16 %v2605, %v2602
        %v2639 = vpack.c.b16 %v2609, %v2606
        %v2640 = vpack.c.b16 %v2610, %v2607
        %v2641 = vpack.c.b16 %v2611, %v2608
        %v2642 = vpack.c.b16 %v2615, %v2612
        %v2643 = vpack.c.b16 %v2616, %v2613
        %v2644 = vpack.c.b16 %v2617, %v2614
        %v2645 = vpack.c.b16 %v2621, %v2618
        %v2646 = vpack.c.b16 %v2622, %v2619
        %v2647 = vpack.c.b16 %v2623, %v2620
        %2672 = vmatprep.subr.bf16.mxu0 %v2625
        %2673 = vmatpush1.bf16.msra.mxu0 %v2624
        %2674 = vmatprep.subr.bf16.mxu0 %v2628
        %2675 = vmatpush1.bf16.msra.mxu0 %v2627
        %2676 = vmatprep.subr.bf16.mxu0 %v2631
        %2677 = vmatpush1.bf16.msra.mxu0 %v2630
        %2678 = vmatprep.subr.bf16.mxu0 %v2634
        %2679 = vmatpush1.bf16.msra.mxu0 %v2633
        %2680 = vmatprep.subr.bf16.mxu0 %v2637
        %2681 = vmatpush1.bf16.msra.mxu0 %v2636
        %2682 = vmatprep.subr.bf16.mxu0 %v2640
        %2683 = vmatpush1.bf16.msra.mxu0 %v2639
        %2684 = vmatprep.subr.bf16.mxu0 %v2643
        %2685 = vmatpush1.bf16.msra.mxu0 %v2642
        %2686 = vmatprep.subr.bf16.mxu0 %v2646
        %2687 = vmatpush1.bf16.msra.mxu0 %v2645
        %2688 = vmatprep.subr.bf16.mxu0 0
        %2689 = vmatpush1.bf16.msra.mxu0 0
        %2690 = vmatprep.subr.bf16.mxu0 0
        %2691 = vmatpush1.bf16.msra.mxu0 0
        %2692 = vmatprep.subr.bf16.mxu0 0
        %2693 = vmatpush1.bf16.msra.mxu0 0
        %2694 = vmatprep.subr.bf16.mxu0 0
        %2695 = vmatpush1.bf16.msra.mxu0 0
        %2696 = vmatprep.subr.bf16.mxu0 0
        %2697 = vmatpush1.bf16.msra.mxu0 0
        %2698 = vmatprep.subr.bf16.mxu0 0
        %2699 = vmatpush1.bf16.msra.mxu0 0
        %2700 = vmatprep.subr.bf16.mxu0 0
        %2701 = vmatpush1.bf16.msra.mxu0 0
        %2702 = vmatprep.subr.bf16.mxu0 0
        %2703 = vmatpush1.bf16.msra.mxu0 0
        %2704 = vmatprep.mubr.bf16.mxu0 0
        %2705 = vmatmul.mubr.bf16.gmra.mrb[0].mxu0 %v2527
        %v2706 = vpop.f32.mrb[0].mxu0
        %v2707 = vadd.f32 %v2532, %v2706
        %v2708 = vpop.f32.mrb[0].mxu0
        %v2709 = vadd.f32 %v2536, %v2708
        %v2710 = vpop.f32.mrb[0].mxu0
        %v2711 = vadd.f32 %v2532, %v2710
        %v2712 = vpop.f32.mrb[0].mxu0
        %v2713 = vadd.f32 %v2536, %v2712
        %2714 = vdwg.mxu0
        %2715 = vmatprep.subr.bf16.mxu0 0
        %2716 = vmatpush1.bf16.msra.mxu0 %v2626
        %2717 = vmatprep.subr.bf16.mxu0 0
        %2718 = vmatpush1.bf16.msra.mxu0 %v2629
        %2719 = vmatprep.subr.bf16.mxu0 0
        %2720 = vmatpush1.bf16.msra.mxu0 %v2632
        %2721 = vmatprep.subr.bf16.mxu0 0
        %2722 = vmatpush1.bf16.msra.mxu0 %v2635
        %2723 = vmatprep.subr.bf16.mxu0 0
        %2724 = vmatpush1.bf16.msra.mxu0 %v2638
        %2725 = vmatprep.subr.bf16.mxu0 0
        %2726 = vmatpush1.bf16.msra.mxu0 %v2641
        %2727 = vmatprep.subr.bf16.mxu0 0
        %2728 = vmatpush1.bf16.msra.mxu0 %v2644
        %2729 = vmatprep.subr.bf16.mxu0 0
        %2730 = vmatpush1.bf16.msra.mxu0 %v2647
        %2731 = vmatprep.subr.bf16.mxu0 0
        %2732 = vmatpush1.bf16.msra.mxu0 0
        %2733 = vmatprep.subr.bf16.mxu0 0
        %2734 = vmatpush1.bf16.msra.mxu0 0
        %2735 = vmatprep.subr.bf16.mxu0 0
        %2736 = vmatpush1.bf16.msra.mxu0 0
        %2737 = vmatprep.subr.bf16.mxu0 0
        %2738 = vmatpush1.bf16.msra.mxu0 0
        %2739 = vmatprep.subr.bf16.mxu0 0
        %2740 = vmatpush1.bf16.msra.mxu0 0
        %2741 = vmatprep.subr.bf16.mxu0 0
        %2742 = vmatpush1.bf16.msra.mxu0 0
        %2743 = vmatprep.subr.bf16.mxu0 0
        %2744 = vmatpush1.bf16.msra.mxu0 0
        %2745 = vmatprep.subr.bf16.mxu0 0
        %2746 = vmatpush1.bf16.msra.mxu0 0
        %2747 = vmatprep.mubr.bf16.mxu0 0
        %2748 = vmatmul.mubr.bf16.gmra.mrb[0].mxu0 %v2527
        %v2749 = vpop.f32.mrb[0].mxu0
        %v2750 = vadd.f32 %v2540, %v2749
        %v2751 = vpop.f32.mrb[0].mxu0
        %v2752 = vpop.f32.mrb[0].mxu0
        %v2753 = vadd.f32 %v2540, %v2752
        %v2754 = vpop.f32.mrb[0].mxu0
        %2755 = vdwg.mxu0
        %2758 = vrot.lane.b32.xlu0 %v2707, 64
        %v2759 = vpop.permute.xlu0 %2758
        %2760 = vrot.lane.b32.xlu0 %v2711, 64
        %v2761 = vpop.permute.xlu0 %2760
        %2764 = vrot.lane.b32.xlu0 %v2709, 64
        %v2765 = vpop.permute.xlu0 %2764
        %2766 = vrot.lane.b32.xlu0 %v2713, 64
        %v2767 = vpop.permute.xlu0 %2766
        %2772 = vrot.lane.b32.xlu0 %v2750, 64
        %v2773 = vpop.permute.xlu0 %2772
        %2774 = vrot.lane.b32.xlu0 %v2753, 64
        %v2775 = vpop.permute.xlu0 %2774
        %2778 = vxpose.xlu0.b32.start [1/16] %v2709, 128
        %2779 = vxpose.xlu0.b32.cont [2/16] %v2713, 128
        %2780 = vxpose.xlu0.b32.cont [3/16] 0.0, 128
        %2781 = vxpose.xlu0.b32.cont [4/16] 0.0, 128
        %2782 = vxpose.xlu0.b32.cont [5/16] 0.0, 128
        %2783 = vxpose.xlu0.b32.cont [6/16] 0.0, 128
        %2784 = vxpose.xlu0.b32.cont [7/16] 0.0, 128
        %2785 = vxpose.xlu0.b32.cont [8/16] 0.0, 128
        %2786 = vxpose.xlu0.b32.cont [9/16] 0.0, 128
        %2787 = vxpose.xlu0.b32.cont [10/16] 0.0, 128
        %2788 = vxpose.xlu0.b32.cont [11/16] 0.0, 128
        %2789 = vxpose.xlu0.b32.cont [12/16] 0.0, 128
        %2790 = vxpose.xlu0.b32.cont [13/16] 0.0, 128
        %2791 = vxpose.xlu0.b32.cont [14/16] 0.0, 128
        %2792 = vxpose.xlu0.b32.cont [15/16] 0.0, 128
        %2793 = vxpose.xlu0.b32.end [16/16] 0.0, 128
        %v2794 = vpop.trf.xlu0
        %v2795 = vpop.trf.xlu0
        %v2796 = vpop.trf.xlu0
        %v2797 = vpop.trf.xlu0
        %v2798 = vpop.trf.xlu0
        %v2799 = vpop.trf.xlu0
        %v2800 = vpop.trf.xlu0
        %v2801 = vpop.trf.xlu0
        %v2802 = vpop.trf.xlu0
        %v2803 = vpop.trf.xlu0
        %v2804 = vpop.trf.xlu0
        %v2805 = vpop.trf.xlu0
        %v2806 = vpop.trf.xlu0
        %v2807 = vpop.trf.xlu0
        %v2808 = vpop.trf.xlu0
        %v2809 = vpop.trf.xlu0
        %2810 = vxpose.xlu0.b32.start [1/16] %v2765, 128
        %2811 = vxpose.xlu0.b32.cont [2/16] %v2767, 128
        %2812 = vxpose.xlu0.b32.cont [3/16] 0.0, 128
        %2813 = vxpose.xlu0.b32.cont [4/16] 0.0, 128
        %2814 = vxpose.xlu0.b32.cont [5/16] 0.0, 128
        %2815 = vxpose.xlu0.b32.cont [6/16] 0.0, 128
        %2816 = vxpose.xlu0.b32.cont [7/16] 0.0, 128
        %2817 = vxpose.xlu0.b32.cont [8/16] 0.0, 128
        %2818 = vxpose.xlu0.b32.cont [9/16] 0.0, 128
        %2819 = vxpose.xlu0.b32.cont [10/16] 0.0, 128
        %2820 = vxpose.xlu0.b32.cont [11/16] 0.0, 128
        %2821 = vxpose.xlu0.b32.cont [12/16] 0.0, 128
        %2822 = vxpose.xlu0.b32.cont [13/16] 0.0, 128
        %2823 = vxpose.xlu0.b32.cont [14/16] 0.0, 128
        %2824 = vxpose.xlu0.b32.cont [15/16] 0.0, 128
        %2825 = vxpose.xlu0.b32.end [16/16] 0.0, 128
        %v2826 = vpop.trf.xlu0
        %v2827 = vpop.trf.xlu0
        %v2828 = vpop.trf.xlu0
        %v2829 = vpop.trf.xlu0
        %v2830 = vpop.trf.xlu0
        %v2831 = vpop.trf.xlu0
        %v2832 = vpop.trf.xlu0
        %v2833 = vpop.trf.xlu0
        %v2834 = vpop.trf.xlu0
        %v2835 = vpop.trf.xlu0
        %v2836 = vpop.trf.xlu0
        %v2837 = vpop.trf.xlu0
        %v2838 = vpop.trf.xlu0
        %v2839 = vpop.trf.xlu0
        %v2840 = vpop.trf.xlu0
        %v2841 = vpop.trf.xlu0
        %v2842 = vsel %vm1081, %v2707, 0
        %v2844 = vsel %vm1081, %v2711, 0
        %2846 = vmatprep.subr.mxu0 0.0
        %2847 = vmatpush1.msra.mxu0 %v2794
        %2848 = vmatprep.subr.mxu0 0.0
        %2849 = vmatpush1.msra.mxu0 %v2795
        %2850 = vmatprep.subr.mxu0 0.0
        %2851 = vmatpush1.msra.mxu0 %v2796
        %2852 = vmatprep.subr.mxu0 0.0
        %2853 = vmatpush1.msra.mxu0 %v2797
        %2854 = vmatprep.subr.mxu0 0.0
        %2855 = vmatpush1.msra.mxu0 %v2798
        %2856 = vmatprep.subr.mxu0 0.0
        %2857 = vmatpush1.msra.mxu0 %v2799
        %2858 = vmatprep.subr.mxu0 0.0
        %2859 = vmatpush1.msra.mxu0 %v2800
        %2860 = vmatprep.subr.mxu0 0.0
        %2861 = vmatpush1.msra.mxu0 %v2801
        %2862 = vmatprep.subr.mxu0 0.0
        %2863 = vmatpush1.msra.mxu0 0.0
        %2864 = vmatprep.subr.mxu0 0.0
        %2865 = vmatpush1.msra.mxu0 0.0
        %2866 = vmatprep.subr.mxu0 0.0
        %2867 = vmatpush1.msra.mxu0 0.0
        %2868 = vmatprep.subr.mxu0 0.0
        %2869 = vmatpush1.msra.mxu0 0.0
        %2870 = vmatprep.subr.mxu0 0.0
        %2871 = vmatpush1.msra.mxu0 0.0
        %2872 = vmatprep.subr.mxu0 0.0
        %2873 = vmatpush1.msra.mxu0 0.0
        %2874 = vmatprep.subr.mxu0 0.0
        %2875 = vmatpush1.msra.mxu0 0.0
        %2876 = vmatprep.subr.mxu0 0.0
        %2877 = vmatpush1.msra.mxu0 0.0
        %2878 = vmatprep.subr.mxu0 0.0
        %2879 = vmatpush1.msra.mxu0 0.0
        %2880 = vmatprep.subr.mxu0 0.0
        %2881 = vmatpush1.msra.mxu0 0.0
        %2882 = vmatprep.subr.mxu0 0.0
        %2883 = vmatpush1.msra.mxu0 0.0
        %2884 = vmatprep.subr.mxu0 0.0
        %2885 = vmatpush1.msra.mxu0 0.0
        %2886 = vmatprep.subr.mxu0 0.0
        %2887 = vmatpush1.msra.mxu0 0.0
        %2888 = vmatprep.subr.mxu0 0.0
        %2889 = vmatpush1.msra.mxu0 0.0
        %2890 = vmatprep.subr.mxu0 0.0
        %2891 = vmatpush1.msra.mxu0 0.0
        %2892 = vmatprep.subr.mxu0 0.0
        %2893 = vmatpush1.msra.mxu0 0.0
        %2894 = vmatprep.subr.mxu0 0.0
        %2895 = vmatpush1.msra.mxu0 0.0
        %2896 = vmatprep.subr.mxu0 0.0
        %2897 = vmatpush1.msra.mxu0 0.0
        %2898 = vmatprep.subr.mxu0 0.0
        %2899 = vmatpush1.msra.mxu0 0.0
        %2900 = vmatprep.subr.mxu0 0.0
        %2901 = vmatpush1.msra.mxu0 0.0
        %2902 = vmatprep.subr.mxu0 0.0
        %2903 = vmatpush1.msra.mxu0 0.0
        %2904 = vmatprep.subr.mxu0 0.0
        %2905 = vmatpush1.msra.mxu0 0.0
        %2906 = vmatprep.subr.mxu0 0.0
        %2907 = vmatpush1.msra.mxu0 0.0
        %2908 = vmatprep.subr.mxu0 0.0
        %2909 = vmatpush1.msra.mxu0 0.0
        %2910 = vmatprep.mubr.f32.mxu0 0.0
        %2911 = vmatmul.mubr.f32.gmra.mrb[0].mxu0 %v2842
        %v2912 = vpop.f32.mrb[0].mxu0
        %v2913 = vadd.f32 0.0, %v2912
        %v2914 = vpop.f32.mrb[0].mxu0
        %2915 = vmatprep.mubr.f32.mxu0 0.0
        %2916 = vmatmul.mubr.f32.gmra.mrb[0].mxu0 %v2844
        %v2917 = vpop.f32.mrb[0].mxu0
        %v2918 = vadd.f32 0.0, %v2917
        %v2919 = vpop.f32.mrb[0].mxu0
        %2920 = vdwg.mxu0
        %v2921 = vsel %vm1081, %v2759, 0
        %v2923 = vsel %vm1081, %v2761, 0
        %2925 = vmatprep.subr.mxu0 0.0
        %2926 = vmatpush1.msra.mxu0 %v2826
        %2927 = vmatprep.subr.mxu0 0.0
        %2928 = vmatpush1.msra.mxu0 %v2827
        %2929 = vmatprep.subr.mxu0 0.0
        %2930 = vmatpush1.msra.mxu0 %v2828
        %2931 = vmatprep.subr.mxu0 0.0
        %2932 = vmatpush1.msra.mxu0 %v2829
        %2933 = vmatprep.subr.mxu0 0.0
        %2934 = vmatpush1.msra.mxu0 %v2830
        %2935 = vmatprep.subr.mxu0 0.0
        %2936 = vmatpush1.msra.mxu0 %v2831
        %2937 = vmatprep.subr.mxu0 0.0
        %2938 = vmatpush1.msra.mxu0 %v2832
        %2939 = vmatprep.subr.mxu0 0.0
        %2940 = vmatpush1.msra.mxu0 %v2833
        %2941 = vmatprep.subr.mxu0 0.0
        %2942 = vmatpush1.msra.mxu0 0.0
        %2943 = vmatprep.subr.mxu0 0.0
        %2944 = vmatpush1.msra.mxu0 0.0
        %2945 = vmatprep.subr.mxu0 0.0
        %2946 = vmatpush1.msra.mxu0 0.0
        %2947 = vmatprep.subr.mxu0 0.0
        %2948 = vmatpush1.msra.mxu0 0.0
        %2949 = vmatprep.subr.mxu0 0.0
        %2950 = vmatpush1.msra.mxu0 0.0
        %2951 = vmatprep.subr.mxu0 0.0
        %2952 = vmatpush1.msra.mxu0 0.0
        %2953 = vmatprep.subr.mxu0 0.0
        %2954 = vmatpush1.msra.mxu0 0.0
        %2955 = vmatprep.subr.mxu0 0.0
        %2956 = vmatpush1.msra.mxu0 0.0
        %2957 = vmatprep.subr.mxu0 0.0
        %2958 = vmatpush1.msra.mxu0 0.0
        %2959 = vmatprep.subr.mxu0 0.0
        %2960 = vmatpush1.msra.mxu0 0.0
        %2961 = vmatprep.subr.mxu0 0.0
        %2962 = vmatpush1.msra.mxu0 0.0
        %2963 = vmatprep.subr.mxu0 0.0
        %2964 = vmatpush1.msra.mxu0 0.0
        %2965 = vmatprep.subr.mxu0 0.0
        %2966 = vmatpush1.msra.mxu0 0.0
        %2967 = vmatprep.subr.mxu0 0.0
        %2968 = vmatpush1.msra.mxu0 0.0
        %2969 = vmatprep.subr.mxu0 0.0
        %2970 = vmatpush1.msra.mxu0 0.0
        %2971 = vmatprep.subr.mxu0 0.0
        %2972 = vmatpush1.msra.mxu0 0.0
        %2973 = vmatprep.subr.mxu0 0.0
        %2974 = vmatpush1.msra.mxu0 0.0
        %2975 = vmatprep.subr.mxu0 0.0
        %2976 = vmatpush1.msra.mxu0 0.0
        %2977 = vmatprep.subr.mxu0 0.0
        %2978 = vmatpush1.msra.mxu0 0.0
        %2979 = vmatprep.subr.mxu0 0.0
        %2980 = vmatpush1.msra.mxu0 0.0
        %2981 = vmatprep.subr.mxu0 0.0
        %2982 = vmatpush1.msra.mxu0 0.0
        %2983 = vmatprep.subr.mxu0 0.0
        %2984 = vmatpush1.msra.mxu0 0.0
        %2985 = vmatprep.subr.mxu0 0.0
        %2986 = vmatpush1.msra.mxu0 0.0
        %2987 = vmatprep.subr.mxu0 0.0
        %2988 = vmatpush1.msra.mxu0 0.0
        %2989 = vmatprep.mubr.f32.mxu0 0.0
        %2990 = vmatmul.mubr.f32.gmra.mrb[0].mxu0 %v2921
        %v2991 = vpop.f32.mrb[0].mxu0
        %v2992 = vadd.f32 0.0, %v2991
        %v2993 = vpop.f32.mrb[0].mxu0
        %2994 = vmatprep.mubr.f32.mxu0 0.0
        %2995 = vmatmul.mubr.f32.gmra.mrb[0].mxu0 %v2923
        %v2996 = vpop.f32.mrb[0].mxu0
        %v2997 = vadd.f32 0.0, %v2996
        %v2998 = vpop.f32.mrb[0].mxu0
        %2999 = vdwg.mxu0
        %v3000 = vmul.f32 %v2913, 0.125
        %v3001 = vmul.f32 %v2918, 0.125
        %v3002 = vmul.f32 %v2992, 0.125
        %v3003 = vmul.f32 %v2997, 0.125
        %v3004 = vsel %vm1244, %v3000, -inf
        %3005 = vmax.xlane.f32.xlu0 %v3004
        %v3006 = vpop.xlane.xlu0 %3005
        %v3007 = vsel %vm1244, %v3001, -inf
        %3008 = vmax.xlane.f32.xlu0 %v3007
        %v3009 = vpop.xlane.xlu0 %3008
        %v3010 = vsel %vm1244, %v3002, -inf
        %3011 = vmax.xlane.f32.xlu0 %v3010
        %v3012 = vpop.xlane.xlu0 %3011
        %v3013 = vsel %vm1244, %v3003, -inf
        %3014 = vmax.xlane.f32.xlu0 %v3013
        %v3015 = vpop.xlane.xlu0 %3014
        %v3016 = vsub.f32 %v3000, %v3006
        %v3017 = vsub.f32 %v3001, %v3009
        %v3018 = vsub.f32 %v3002, %v3012
        %v3019 = vsub.f32 %v3003, %v3015
        %v3020 = vmul.f32 %v3016, 1.442695
        %v3021 = vpow.pop %v3020
        %v3022 = vmul.f32 %v3017, 1.442695
        %v3023 = vpow.pop %v3022
        %v3024 = vmul.f32 %v3018, 1.442695
        %v3025 = vpow.pop %v3024
        %v3026 = vmul.f32 %v3019, 1.442695
        %v3027 = vpow.pop %v3026
        %v3028 = vsel %vm1244, %v3021, 0.0
        %3029 = vadd.xlane.f32.xlu0 %v3028
        %v3030 = vpop.xlane.xlu0 %3029
        %v3031 = vsel %vm1244, %v3023, 0.0
        %3032 = vadd.xlane.f32.xlu0 %v3031
        %v3033 = vpop.xlane.xlu0 %3032
        %v3034 = vsel %vm1244, %v3025, 0.0
        %3035 = vadd.xlane.f32.xlu0 %v3034
        %v3036 = vpop.xlane.xlu0 %3035
        %v3037 = vsel %vm1244, %v3027, 0.0
        %3038 = vadd.xlane.f32.xlu0 %v3037
        %v3039 = vpop.xlane.xlu0 %3038
        %v3040 = vrcp.pop %v3030
        %v3041 = vrcp.pop %v3033
        %v3042 = vrcp.pop %v3036
        %v3043 = vrcp.pop %v3039
        %v3044 = vmul.f32 %v3021, %v3040
        %v3045 = vmul.f32 %v3023, %v3041
        %v3046 = vmul.f32 %v3025, %v3042
        %v3047 = vmul.f32 %v3027, %v3043
        %3048 = vxpose.xlu0.b32.start [1/16] %v2750, 128
        %3049 = vxpose.xlu0.b32.cont [2/16] %v2753, 128
        %3050 = vxpose.xlu0.b32.cont [3/16] 0.0, 128
        %3051 = vxpose.xlu0.b32.cont [4/16] 0.0, 128
        %3052 = vxpose.xlu0.b32.cont [5/16] 0.0, 128
        %3053 = vxpose.xlu0.b32.cont [6/16] 0.0, 128
        %3054 = vxpose.xlu0.b32.cont [7/16] 0.0, 128
        %3055 = vxpose.xlu0.b32.cont [8/16] 0.0, 128
        %3056 = vxpose.xlu0.b32.cont [9/16] 0.0, 128
        %3057 = vxpose.xlu0.b32.cont [10/16] 0.0, 128
        %3058 = vxpose.xlu0.b32.cont [11/16] 0.0, 128
        %3059 = vxpose.xlu0.b32.cont [12/16] 0.0, 128
        %3060 = vxpose.xlu0.b32.cont [13/16] 0.0, 128
        %3061 = vxpose.xlu0.b32.cont [14/16] 0.0, 128
        %3062 = vxpose.xlu0.b32.cont [15/16] 0.0, 128
        %3063 = vxpose.xlu0.b32.end [16/16] 0.0, 128
        %v3064 = vpop.trf.xlu0
        %v3065 = vpop.trf.xlu0
        %v3066 = vpop.trf.xlu0
        %v3067 = vpop.trf.xlu0
        %v3068 = vpop.trf.xlu0
        %v3069 = vpop.trf.xlu0
        %v3070 = vpop.trf.xlu0
        %v3071 = vpop.trf.xlu0
        %v3072 = vpop.trf.xlu0
        %v3073 = vpop.trf.xlu0
        %v3074 = vpop.trf.xlu0
        %v3075 = vpop.trf.xlu0
        %v3076 = vpop.trf.xlu0
        %v3077 = vpop.trf.xlu0
        %v3078 = vpop.trf.xlu0
        %v3079 = vpop.trf.xlu0
        %3080 = vxpose.xlu0.b32.start [1/16] %v2773, 128
        %3081 = vxpose.xlu0.b32.cont [2/16] %v2775, 128
        %3082 = vxpose.xlu0.b32.cont [3/16] 0.0, 128
        %3083 = vxpose.xlu0.b32.cont [4/16] 0.0, 128
        %3084 = vxpose.xlu0.b32.cont [5/16] 0.0, 128
        %3085 = vxpose.xlu0.b32.cont [6/16] 0.0, 128
        %3086 = vxpose.xlu0.b32.cont [7/16] 0.0, 128
        %3087 = vxpose.xlu0.b32.cont [8/16] 0.0, 128
        %3088 = vxpose.xlu0.b32.cont [9/16] 0.0, 128
        %3089 = vxpose.xlu0.b32.cont [10/16] 0.0, 128
        %3090 = vxpose.xlu0.b32.cont [11/16] 0.0, 128
        %3091 = vxpose.xlu0.b32.cont [12/16] 0.0, 128
        %3092 = vxpose.xlu0.b32.cont [13/16] 0.0, 128
        %3093 = vxpose.xlu0.b32.cont [14/16] 0.0, 128
        %3094 = vxpose.xlu0.b32.cont [15/16] 0.0, 128
        %3095 = vxpose.xlu0.b32.end [16/16] 0.0, 128
        %v3096 = vpop.trf.xlu0
        %v3097 = vpop.trf.xlu0
        %v3098 = vpop.trf.xlu0
        %v3099 = vpop.trf.xlu0
        %v3100 = vpop.trf.xlu0
        %v3101 = vpop.trf.xlu0
        %v3102 = vpop.trf.xlu0
        %v3103 = vpop.trf.xlu0
        %v3104 = vpop.trf.xlu0
        %v3105 = vpop.trf.xlu0
        %v3106 = vpop.trf.xlu0
        %v3107 = vpop.trf.xlu0
        %v3108 = vpop.trf.xlu0
        %v3109 = vpop.trf.xlu0
        %v3110 = vpop.trf.xlu0
        %v3111 = vpop.trf.xlu0
        %v3113 = vsel %vm1244, %v3064, 0
        %v3116 = vsel %vm1244, %v3065, 0
        %v3119 = vsel %vm1244, %v3066, 0
        %v3122 = vsel %vm1244, %v3067, 0
        %v3125 = vsel %vm1244, %v3068, 0
        %v3128 = vsel %vm1244, %v3069, 0
        %v3131 = vsel %vm1244, %v3070, 0
        %v3134 = vsel %vm1244, %v3071, 0
        %v3137 = vsel %vm1244, %v3044, 0
        %v3140 = vsel %vm1244, %v3045, 0
        %3142 = vmatprep.subr.mxu0 0.0
        %3143 = vmatpush1.xpose.msra.mxu0 %v3137
        %3144 = vmatprep.subr.mxu0 0.0
        %3145 = vmatpush1.xpose.msra.mxu0 %v3140
        %3146 = vmatprep.subr.mxu0 0.0
        %3147 = vmatpush1.xpose.msra.mxu0 0.0
        %3148 = vmatprep.subr.mxu0 0.0
        %3149 = vmatpush1.xpose.msra.mxu0 0.0
        %3150 = vmatprep.subr.mxu0 0.0
        %3151 = vmatpush1.xpose.msra.mxu0 0.0
        %3152 = vmatprep.subr.mxu0 0.0
        %3153 = vmatpush1.xpose.msra.mxu0 0.0
        %3154 = vmatprep.subr.mxu0 0.0
        %3155 = vmatpush1.xpose.msra.mxu0 0.0
        %3156 = vmatprep.subr.mxu0 0.0
        %3157 = vmatpush1.xpose.msra.mxu0 0.0
        %3158 = vmatprep.subr.mxu0 0.0
        %3159 = vmatpush1.xpose.msra.mxu0 0.0
        %3160 = vmatprep.subr.mxu0 0.0
        %3161 = vmatpush1.xpose.msra.mxu0 0.0
        %3162 = vmatprep.subr.mxu0 0.0
        %3163 = vmatpush1.xpose.msra.mxu0 0.0
        %3164 = vmatprep.subr.mxu0 0.0
        %3165 = vmatpush1.xpose.msra.mxu0 0.0
        %3166 = vmatprep.subr.mxu0 0.0
        %3167 = vmatpush1.xpose.msra.mxu0 0.0
        %3168 = vmatprep.subr.mxu0 0.0
        %3169 = vmatpush1.xpose.msra.mxu0 0.0
        %3170 = vmatprep.subr.mxu0 0.0
        %3171 = vmatpush1.xpose.msra.mxu0 0.0
        %3172 = vmatprep.subr.mxu0 0.0
        %3173 = vmatpush1.xpose.msra.mxu0 0.0
        %3174 = vmatprep.subr.mxu0 0.0
        %3175 = vmatpush1.xpose.msra.mxu0 0.0
        %3176 = vmatprep.subr.mxu0 0.0
        %3177 = vmatpush1.xpose.msra.mxu0 0.0
        %3178 = vmatprep.subr.mxu0 0.0
        %3179 = vmatpush1.xpose.msra.mxu0 0.0
        %3180 = vmatprep.subr.mxu0 0.0
        %3181 = vmatpush1.xpose.msra.mxu0 0.0
        %3182 = vmatprep.subr.mxu0 0.0
        %3183 = vmatpush1.xpose.msra.mxu0 0.0
        %3184 = vmatprep.subr.mxu0 0.0
        %3185 = vmatpush1.xpose.msra.mxu0 0.0
        %3186 = vmatprep.subr.mxu0 0.0
        %3187 = vmatpush1.xpose.msra.mxu0 0.0
        %3188 = vmatprep.subr.mxu0 0.0
        %3189 = vmatpush1.xpose.msra.mxu0 0.0
        %3190 = vmatprep.subr.mxu0 0.0
        %3191 = vmatpush1.xpose.msra.mxu0 0.0
        %3192 = vmatprep.subr.mxu0 0.0
        %3193 = vmatpush1.xpose.msra.mxu0 0.0
        %3194 = vmatprep.subr.mxu0 0.0
        %3195 = vmatpush1.xpose.msra.mxu0 0.0
        %3196 = vmatprep.subr.mxu0 0.0
        %3197 = vmatpush1.xpose.msra.mxu0 0.0
        %3198 = vmatprep.subr.mxu0 0.0
        %3199 = vmatpush1.xpose.msra.mxu0 0.0
        %3200 = vmatprep.subr.mxu0 0.0
        %3201 = vmatpush1.xpose.msra.mxu0 0.0
        %3202 = vmatprep.subr.mxu0 0.0
        %3203 = vmatpush1.xpose.msra.mxu0 0.0
        %3204 = vmatprep.subr.mxu0 0.0
        %3205 = vmatpush1.xpose.msra.mxu0 0.0
        %3206 = vmatprep.mubr.f32.mxu0 0.0
        %3207 = vmatmul.mubr.f32.gmra.mrb[0].mxu0 %v3113
        %v3208 = vpop.f32.mrb[0].mxu0
        %v3209 = vadd.f32 0.0, %v3208
        %v3210 = vpop.f32.mrb[0].mxu0
        %3211 = vmatprep.mubr.f32.mxu0 0.0
        %3212 = vmatmul.mubr.f32.gmra.mrb[0].mxu0 %v3116
        %v3213 = vpop.f32.mrb[0].mxu0
        %v3214 = vadd.f32 0.0, %v3213
        %v3215 = vpop.f32.mrb[0].mxu0
        %3216 = vmatprep.mubr.f32.mxu0 0.0
        %3217 = vmatmul.mubr.f32.gmra.mrb[0].mxu0 %v3119
        %v3218 = vpop.f32.mrb[0].mxu0
        %v3219 = vadd.f32 0.0, %v3218
        %v3220 = vpop.f32.mrb[0].mxu0
        %3221 = vmatprep.mubr.f32.mxu0 0.0
        %3222 = vmatmul.mubr.f32.gmra.mrb[0].mxu0 %v3122
        %v3223 = vpop.f32.mrb[0].mxu0
        %v3224 = vadd.f32 0.0, %v3223
        %v3225 = vpop.f32.mrb[0].mxu0
        %3226 = vmatprep.mubr.f32.mxu0 0.0
        %3227 = vmatmul.mubr.f32.gmra.mrb[0].mxu0 %v3125
        %v3228 = vpop.f32.mrb[0].mxu0
        %v3229 = vadd.f32 0.0, %v3228
        %v3230 = vpop.f32.mrb[0].mxu0
        %3231 = vmatprep.mubr.f32.mxu0 0.0
        %3232 = vmatmul.mubr.f32.gmra.mrb[0].mxu0 %v3128
        %v3233 = vpop.f32.mrb[0].mxu0
        %v3234 = vadd.f32 0.0, %v3233
        %v3235 = vpop.f32.mrb[0].mxu0
        %3236 = vmatprep.mubr.f32.mxu0 0.0
        %3237 = vmatmul.mubr.f32.gmra.mrb[0].mxu0 %v3131
        %v3238 = vpop.f32.mrb[0].mxu0
        %v3239 = vadd.f32 0.0, %v3238
        %v3240 = vpop.f32.mrb[0].mxu0
        %3241 = vmatprep.mubr.f32.mxu0 0.0
        %3242 = vmatmul.mubr.f32.gmra.mrb[0].mxu0 %v3134
        %v3243 = vpop.f32.mrb[0].mxu0
        %v3244 = vadd.f32 0.0, %v3243
        %v3245 = vpop.f32.mrb[0].mxu0
        %3246 = vdwg.mxu0
        %v3248 = vsel %vm1244, %v3096, 0
        %v3251 = vsel %vm1244, %v3097, 0
        %v3254 = vsel %vm1244, %v3098, 0
        %v3257 = vsel %vm1244, %v3099, 0
        %v3260 = vsel %vm1244, %v3100, 0
        %v3263 = vsel %vm1244, %v3101, 0
        %v3266 = vsel %vm1244, %v3102, 0
        %v3269 = vsel %vm1244, %v3103, 0
        %v3272 = vsel %vm1244, %v3046, 0
        %v3275 = vsel %vm1244, %v3047, 0
        %3277 = vmatprep.subr.mxu0 0.0
        %3278 = vmatpush1.xpose.msra.mxu0 %v3272
        %3279 = vmatprep.subr.mxu0 0.0
        %3280 = vmatpush1.xpose.msra.mxu0 %v3275
        %3281 = vmatprep.subr.mxu0 0.0
        %3282 = vmatpush1.xpose.msra.mxu0 0.0
        %3283 = vmatprep.subr.mxu0 0.0
        %3284 = vmatpush1.xpose.msra.mxu0 0.0
        %3285 = vmatprep.subr.mxu0 0.0
        %3286 = vmatpush1.xpose.msra.mxu0 0.0
        %3287 = vmatprep.subr.mxu0 0.0
        %3288 = vmatpush1.xpose.msra.mxu0 0.0
        %3289 = vmatprep.subr.mxu0 0.0
        %3290 = vmatpush1.xpose.msra.mxu0 0.0
        %3291 = vmatprep.subr.mxu0 0.0
        %3292 = vmatpush1.xpose.msra.mxu0 0.0
        %3293 = vmatprep.subr.mxu0 0.0
        %3294 = vmatpush1.xpose.msra.mxu0 0.0
        %3295 = vmatprep.subr.mxu0 0.0
        %3296 = vmatpush1.xpose.msra.mxu0 0.0
        %3297 = vmatprep.subr.mxu0 0.0
        %3298 = vmatpush1.xpose.msra.mxu0 0.0
        %3299 = vmatprep.subr.mxu0 0.0
        %3300 = vmatpush1.xpose.msra.mxu0 0.0
        %3301 = vmatprep.subr.mxu0 0.0
        %3302 = vmatpush1.xpose.msra.mxu0 0.0
        %3303 = vmatprep.subr.mxu0 0.0
        %3304 = vmatpush1.xpose.msra.mxu0 0.0
        %3305 = vmatprep.subr.mxu0 0.0
        %3306 = vmatpush1.xpose.msra.mxu0 0.0
        %3307 = vmatprep.subr.mxu0 0.0
        %3308 = vmatpush1.xpose.msra.mxu0 0.0
        %3309 = vmatprep.subr.mxu0 0.0
        %3310 = vmatpush1.xpose.msra.mxu0 0.0
        %3311 = vmatprep.subr.mxu0 0.0
        %3312 = vmatpush1.xpose.msra.mxu0 0.0
        %3313 = vmatprep.subr.mxu0 0.0
        %3314 = vmatpush1.xpose.msra.mxu0 0.0
        %3315 = vmatprep.subr.mxu0 0.0
        %3316 = vmatpush1.xpose.msra.mxu0 0.0
        %3317 = vmatprep.subr.mxu0 0.0
        %3318 = vmatpush1.xpose.msra.mxu0 0.0
        %3319 = vmatprep.subr.mxu0 0.0
        %3320 = vmatpush1.xpose.msra.mxu0 0.0
        %3321 = vmatprep.subr.mxu0 0.0
        %3322 = vmatpush1.xpose.msra.mxu0 0.0
        %3323 = vmatprep.subr.mxu0 0.0
        %3324 = vmatpush1.xpose.msra.mxu0 0.0
        %3325 = vmatprep.subr.mxu0 0.0
        %3326 = vmatpush1.xpose.msra.mxu0 0.0
        %3327 = vmatprep.subr.mxu0 0.0
        %3328 = vmatpush1.xpose.msra.mxu0 0.0
        %3329 = vmatprep.subr.mxu0 0.0
        %3330 = vmatpush1.xpose.msra.mxu0 0.0
        %3331 = vmatprep.subr.mxu0 0.0
        %3332 = vmatpush1.xpose.msra.mxu0 0.0
        %3333 = vmatprep.subr.mxu0 0.0
        %3334 = vmatpush1.xpose.msra.mxu0 0.0
        %3335 = vmatprep.subr.mxu0 0.0
        %3336 = vmatpush1.xpose.msra.mxu0 0.0
        %3337 = vmatprep.subr.mxu0 0.0
        %3338 = vmatpush1.xpose.msra.mxu0 0.0
        %3339 = vmatprep.subr.mxu0 0.0
        %3340 = vmatpush1.xpose.msra.mxu0 0.0
        %3341 = vmatprep.mubr.f32.mxu0 0.0
        %3342 = vmatmul.mubr.f32.gmra.mrb[0].mxu0 %v3248
        %v3343 = vpop.f32.mrb[0].mxu0
        %v3344 = vadd.f32 0.0, %v3343
        %v3345 = vpop.f32.mrb[0].mxu0
        %3346 = vmatprep.mubr.f32.mxu0 0.0
        %3347 = vmatmul.mubr.f32.gmra.mrb[0].mxu0 %v3251
        %v3348 = vpop.f32.mrb[0].mxu0
        %v3349 = vadd.f32 0.0, %v3348
        %v3350 = vpop.f32.mrb[0].mxu0
        %3351 = vmatprep.mubr.f32.mxu0 0.0
        %3352 = vmatmul.mubr.f32.gmra.mrb[0].mxu0 %v3254
        %v3353 = vpop.f32.mrb[0].mxu0
        %v3354 = vadd.f32 0.0, %v3353
        %v3355 = vpop.f32.mrb[0].mxu0
        %3356 = vmatprep.mubr.f32.mxu0 0.0
        %3357 = vmatmul.mubr.f32.gmra.mrb[0].mxu0 %v3257
        %v3358 = vpop.f32.mrb[0].mxu0
        %v3359 = vadd.f32 0.0, %v3358
        %v3360 = vpop.f32.mrb[0].mxu0
        %3361 = vmatprep.mubr.f32.mxu0 0.0
        %3362 = vmatmul.mubr.f32.gmra.mrb[0].mxu0 %v3260
        %v3363 = vpop.f32.mrb[0].mxu0
        %v3364 = vadd.f32 0.0, %v3363
        %v3365 = vpop.f32.mrb[0].mxu0
        %3366 = vmatprep.mubr.f32.mxu0 0.0
        %3367 = vmatmul.mubr.f32.gmra.mrb[0].mxu0 %v3263
        %v3368 = vpop.f32.mrb[0].mxu0
        %v3369 = vadd.f32 0.0, %v3368
        %v3370 = vpop.f32.mrb[0].mxu0
        %3371 = vmatprep.mubr.f32.mxu0 0.0
        %3372 = vmatmul.mubr.f32.gmra.mrb[0].mxu0 %v3266
        %v3373 = vpop.f32.mrb[0].mxu0
        %v3374 = vadd.f32 0.0, %v3373
        %v3375 = vpop.f32.mrb[0].mxu0
        %3376 = vmatprep.mubr.f32.mxu0 0.0
        %3377 = vmatmul.mubr.f32.gmra.mrb[0].mxu0 %v3269
        %v3378 = vpop.f32.mrb[0].mxu0
        %v3379 = vadd.f32 0.0, %v3378
        %v3380 = vpop.f32.mrb[0].mxu0
        %3381 = vdwg.mxu0
        %3382 = vxpose.xlu0.b32.start [1/16] %v3209, 128
        %3383 = vxpose.xlu0.b32.cont [2/16] %v3214, 128
        %3384 = vxpose.xlu0.b32.cont [3/16] %v3219, 128
        %3385 = vxpose.xlu0.b32.cont [4/16] %v3224, 128
        %3386 = vxpose.xlu0.b32.cont [5/16] %v3229, 128
        %3387 = vxpose.xlu0.b32.cont [6/16] %v3234, 128
        %3388 = vxpose.xlu0.b32.cont [7/16] %v3239, 128
        %3389 = vxpose.xlu0.b32.cont [8/16] %v3244, 128
        %3390 = vxpose.xlu0.b32.cont [9/16] 0.0, 128
        %3391 = vxpose.xlu0.b32.cont [10/16] 0.0, 128
        %3392 = vxpose.xlu0.b32.cont [11/16] 0.0, 128
        %3393 = vxpose.xlu0.b32.cont [12/16] 0.0, 128
        %3394 = vxpose.xlu0.b32.cont [13/16] 0.0, 128
        %3395 = vxpose.xlu0.b32.cont [14/16] 0.0, 128
        %3396 = vxpose.xlu0.b32.cont [15/16] 0.0, 128
        %3397 = vxpose.xlu0.b32.end [16/16] 0.0, 128
        %v3398 = vpop.trf.xlu0
        %v3399 = vpop.trf.xlu0
        %v3400 = vpop.trf.xlu0
        %v3401 = vpop.trf.xlu0
        %v3402 = vpop.trf.xlu0
        %v3403 = vpop.trf.xlu0
        %v3404 = vpop.trf.xlu0
        %v3405 = vpop.trf.xlu0
        %v3406 = vpop.trf.xlu0
        %v3407 = vpop.trf.xlu0
        %v3408 = vpop.trf.xlu0
        %v3409 = vpop.trf.xlu0
        %v3410 = vpop.trf.xlu0
        %v3411 = vpop.trf.xlu0
        %v3412 = vpop.trf.xlu0
        %v3413 = vpop.trf.xlu0
        %3414 = vxpose.xlu0.b32.start [1/16] %v3344, 128
        %3415 = vxpose.xlu0.b32.cont [2/16] %v3349, 128
        %3416 = vxpose.xlu0.b32.cont [3/16] %v3354, 128
        %3417 = vxpose.xlu0.b32.cont [4/16] %v3359, 128
        %3418 = vxpose.xlu0.b32.cont [5/16] %v3364, 128
        %3419 = vxpose.xlu0.b32.cont [6/16] %v3369, 128
        %3420 = vxpose.xlu0.b32.cont [7/16] %v3374, 128
        %3421 = vxpose.xlu0.b32.cont [8/16] %v3379, 128
        %3422 = vxpose.xlu0.b32.cont [9/16] 0.0, 128
        %3423 = vxpose.xlu0.b32.cont [10/16] 0.0, 128
        %3424 = vxpose.xlu0.b32.cont [11/16] 0.0, 128
        %3425 = vxpose.xlu0.b32.cont [12/16] 0.0, 128
        %3426 = vxpose.xlu0.b32.cont [13/16] 0.0, 128
        %3427 = vxpose.xlu0.b32.cont [14/16] 0.0, 128
        %3428 = vxpose.xlu0.b32.cont [15/16] 0.0, 128
        %3429 = vxpose.xlu0.b32.end [16/16] 0.0, 128
        %v3430 = vpop.trf.xlu0
        %v3431 = vpop.trf.xlu0
        %v3432 = vpop.trf.xlu0
        %v3433 = vpop.trf.xlu0
        %v3434 = vpop.trf.xlu0
        %v3435 = vpop.trf.xlu0
        %v3436 = vpop.trf.xlu0
        %v3437 = vpop.trf.xlu0
        %v3438 = vpop.trf.xlu0
        %v3439 = vpop.trf.xlu0
        %v3440 = vpop.trf.xlu0
        %v3441 = vpop.trf.xlu0
        %v3442 = vpop.trf.xlu0
        %v3443 = vpop.trf.xlu0
        %v3444 = vpop.trf.xlu0
        %v3445 = vpop.trf.xlu0
        %v3446 = vcombine.high %v3398, 0.0
        %v3448 = vunpack.c.l.s4 1983009808
        %v3449 = vunpack.c.0.s8 %v3448
        %v3450 = vlaneseq
        %v3451 = vshrl.u32 %v3450, 7
        %v3452 = vsub.s32 %v3449, %v3451
        %v3453 = vrot.slane %v3398, %v3452
        %v3455 = vunpack.c.l.s4 1983009808
        %v3456 = vunpack.c.0.s8 %v3455
        %v3457 = vlaneseq
        %v3458 = vshrl.u32 %v3457, 7
        %v3459 = vsub.s32 %v3456, %v3458
        %v3460 = vrot.slane %v3446, %v3459
        %v3461 = vcombine.high %v3430, 0.0
        %v3463 = vunpack.c.l.s4 1983009808
        %v3464 = vunpack.c.0.s8 %v3463
        %v3465 = vlaneseq
        %v3466 = vshrl.u32 %v3465, 7
        %v3467 = vsub.s32 %v3464, %v3466
        %v3468 = vrot.slane %v3430, %v3467
        %v3470 = vunpack.c.l.s4 1983009808
        %v3471 = vunpack.c.0.s8 %v3470
        %v3472 = vlaneseq
        %v3473 = vshrl.u32 %v3472, 7
        %v3474 = vsub.s32 %v3471, %v3473
        %v3475 = vrot.slane %v3461, %v3474
        %v3476 = vcombine.low %v3453, %v3468
        %v3477 = vcombine.high %v3453, %v3468
        %v3479 = vunpack.c.l.s4 1934713408
        %v3480 = vunpack.c.0.s8 %v3479
        %v3481 = vlaneseq
        %v3482 = vshrl.u32 %v3481, 7
        %v3483 = vsub.s32 %v3480, %v3482
        %v3484 = vrot.slane %v3476, %v3483
        %v3486 = vunpack.c.l.s4 1934713408
        %v3487 = vunpack.c.0.s8 %v3486
        %v3488 = vlaneseq
        %v3489 = vshrl.u32 %v3488, 7
        %v3490 = vsub.s32 %v3487, %v3489
        %v3491 = vrot.slane %v3477, %v3490
        %v3492 = vcombine.low %v3460, %v3475
        %v3493 = vcombine.high %v3460, %v3475
        %v3495 = vunpack.c.l.s4 1934713408
        %v3496 = vunpack.c.0.s8 %v3495
        %v3497 = vlaneseq
        %v3498 = vshrl.u32 %v3497, 7
        %v3499 = vsub.s32 %v3496, %v3498
        %v3500 = vrot.slane %v3492, %v3499
        %v3502 = vunpack.c.l.s4 1934713408
        %v3503 = vunpack.c.0.s8 %v3502
        %v3504 = vlaneseq
        %v3505 = vshrl.u32 %v3504, 7
        %v3506 = vsub.s32 %v3503, %v3505
        %v3507 = vrot.slane %v3493, %v3506
        %v3508 = vcombine.high %v3484, 0.0
        %v3509 = vcombine.high %v3491, 0.0
        %v3510 = vcombine.high %v3500, 0.0
        %v3511 = vcombine.high %v3507, 0.0
        %v3512 = vcombine.high %v3399, 0.0
        %v3514 = vunpack.c.l.s4 1983009808
        %v3515 = vunpack.c.0.s8 %v3514
        %v3516 = vlaneseq
        %v3517 = vshrl.u32 %v3516, 7
        %v3518 = vsub.s32 %v3515, %v3517
        %v3519 = vrot.slane %v3399, %v3518
        %v3521 = vunpack.c.l.s4 1983009808
        %v3522 = vunpack.c.0.s8 %v3521
        %v3523 = vlaneseq
        %v3524 = vshrl.u32 %v3523, 7
        %v3525 = vsub.s32 %v3522, %v3524
        %v3526 = vrot.slane %v3512, %v3525
        %v3527 = vcombine.high %v3431, 0.0
        %v3529 = vunpack.c.l.s4 1983009808
        %v3530 = vunpack.c.0.s8 %v3529
        %v3531 = vlaneseq
        %v3532 = vshrl.u32 %v3531, 7
        %v3533 = vsub.s32 %v3530, %v3532
        %v3534 = vrot.slane %v3431, %v3533
        %v3536 = vunpack.c.l.s4 1983009808
        %v3537 = vunpack.c.0.s8 %v3536
        %v3538 = vlaneseq
        %v3539 = vshrl.u32 %v3538, 7
        %v3540 = vsub.s32 %v3537, %v3539
        %v3541 = vrot.slane %v3527, %v3540
        %v3542 = vcombine.low %v3519, %v3534
        %v3543 = vcombine.high %v3519, %v3534
        %v3545 = vunpack.c.l.s4 1934713408
        %v3546 = vunpack.c.0.s8 %v3545
        %v3547 = vlaneseq
        %v3548 = vshrl.u32 %v3547, 7
        %v3549 = vsub.s32 %v3546, %v3548
        %v3550 = vrot.slane %v3542, %v3549
        %v3552 = vunpack.c.l.s4 1934713408
        %v3553 = vunpack.c.0.s8 %v3552
        %v3554 = vlaneseq
        %v3555 = vshrl.u32 %v3554, 7
        %v3556 = vsub.s32 %v3553, %v3555
        %v3557 = vrot.slane %v3543, %v3556
        %v3558 = vcombine.low %v3526, %v3541
        %v3559 = vcombine.high %v3526, %v3541
        %v3561 = vunpack.c.l.s4 1934713408
        %v3562 = vunpack.c.0.s8 %v3561
        %v3563 = vlaneseq
        %v3564 = vshrl.u32 %v3563, 7
        %v3565 = vsub.s32 %v3562, %v3564
        %v3566 = vrot.slane %v3558, %v3565
        %v3568 = vunpack.c.l.s4 1934713408
        %v3569 = vunpack.c.0.s8 %v3568
        %v3570 = vlaneseq
        %v3571 = vshrl.u32 %v3570, 7
        %v3572 = vsub.s32 %v3569, %v3571
        %v3573 = vrot.slane %v3559, %v3572
        %v3574 = vcombine.high %v3550, 0.0
        %v3575 = vcombine.high %v3557, 0.0
        %v3576 = vcombine.high %v3566, 0.0
        %v3577 = vcombine.high %v3573, 0.0
        %v3578 = vcombine.low %v3484, %v3491
        %v3580 = vunpack.c.l.s4 1983009808
        %v3581 = vunpack.c.0.s8 %v3580
        %v3582 = vlaneseq
        %v3583 = vshrl.u32 %v3582, 7
        %v3584 = vsub.s32 %v3581, %v3583
        %v3585 = vrot.slane %v3578, %v3584
        %v3586 = vcombine.low %v3508, %v3509
        %v3588 = vunpack.c.l.s4 1983009808
        %v3589 = vunpack.c.0.s8 %v3588
        %v3590 = vlaneseq
        %v3591 = vshrl.u32 %v3590, 7
        %v3592 = vsub.s32 %v3589, %v3591
        %v3593 = vrot.slane %v3586, %v3592
        %v3594 = vcombine.low %v3500, %v3507
        %v3596 = vunpack.c.l.s4 1983009808
        %v3597 = vunpack.c.0.s8 %v3596
        %v3598 = vlaneseq
        %v3599 = vshrl.u32 %v3598, 7
        %v3600 = vsub.s32 %v3597, %v3599
        %v3601 = vrot.slane %v3594, %v3600
        %v3602 = vcombine.low %v3510, %v3511
        %v3604 = vunpack.c.l.s4 1983009808
        %v3605 = vunpack.c.0.s8 %v3604
        %v3606 = vlaneseq
        %v3607 = vshrl.u32 %v3606, 7
        %v3608 = vsub.s32 %v3605, %v3607
        %v3609 = vrot.slane %v3602, %v3608
        %v3610 = vcombine.low %v3585, %v3593
        %v3612 = vunpack.c.l.s4 1934713408
        %v3613 = vunpack.c.0.s8 %v3612
        %v3614 = vlaneseq
        %v3615 = vshrl.u32 %v3614, 7
        %v3616 = vsub.s32 %v3613, %v3615
        %v3617 = vrot.slane %v3610, %v3616
        %v3618 = vcombine.low %v3601, %v3609
        %v3620 = vunpack.c.l.s4 1934713408
        %v3621 = vunpack.c.0.s8 %v3620
        %v3622 = vlaneseq
        %v3623 = vshrl.u32 %v3622, 7
        %v3624 = vsub.s32 %v3621, %v3623
        %v3625 = vrot.slane %v3618, %v3624
        %v3626 = vcombine.low %v3617, %v3625
        %v3627 = vcombine.high %v3617, %v3625
        %v3628 = vcombine.low %v3550, %v3557
        %v3630 = vunpack.c.l.s4 1983009808
        %v3631 = vunpack.c.0.s8 %v3630
        %v3632 = vlaneseq
        %v3633 = vshrl.u32 %v3632, 7
        %v3634 = vsub.s32 %v3631, %v3633
        %v3635 = vrot.slane %v3628, %v3634
        %v3636 = vcombine.low %v3574, %v3575
        %v3638 = vunpack.c.l.s4 1983009808
        %v3639 = vunpack.c.0.s8 %v3638
        %v3640 = vlaneseq
        %v3641 = vshrl.u32 %v3640, 7
        %v3642 = vsub.s32 %v3639, %v3641
        %v3643 = vrot.slane %v3636, %v3642
        %v3644 = vcombine.low %v3566, %v3573
        %v3646 = vunpack.c.l.s4 1983009808
        %v3647 = vunpack.c.0.s8 %v3646
        %v3648 = vlaneseq
        %v3649 = vshrl.u32 %v3648, 7
        %v3650 = vsub.s32 %v3647, %v3649
        %v3651 = vrot.slane %v3644, %v3650
        %v3652 = vcombine.low %v3576, %v3577
        %v3654 = vunpack.c.l.s4 1983009808
        %v3655 = vunpack.c.0.s8 %v3654
        %v3656 = vlaneseq
        %v3657 = vshrl.u32 %v3656, 7
        %v3658 = vsub.s32 %v3655, %v3657
        %v3659 = vrot.slane %v3652, %v3658
        %v3660 = vcombine.low %v3635, %v3643
        %v3662 = vunpack.c.l.s4 1934713408
        %v3663 = vunpack.c.0.s8 %v3662
        %v3664 = vlaneseq
        %v3665 = vshrl.u32 %v3664, 7
        %v3666 = vsub.s32 %v3663, %v3665
        %v3667 = vrot.slane %v3660, %v3666
        %v3668 = vcombine.low %v3651, %v3659
        %v3670 = vunpack.c.l.s4 1934713408
        %v3671 = vunpack.c.0.s8 %v3670
        %v3672 = vlaneseq
        %v3673 = vshrl.u32 %v3672, 7
        %v3674 = vsub.s32 %v3671, %v3673
        %v3675 = vrot.slane %v3668, %v3674
        %v3676 = vcombine.low %v3667, %v3675
        %v3677 = vcombine.high %v3667, %v3675
        %3680 = vrot.lane.b32.xlu0 %v3627, 64
        %v3681 = vpop.permute.xlu0 %3680
        %3682 = vrot.lane.b32.xlu0 %v3677, 64
        %v3683 = vpop.permute.xlu0 %3682
        %v3686 = vsel %vm1081, %v3626, %v3681
        %v3687 = vsel %vm1081, %v3676, %v3683
        %s3688 = scalar_lea.vmem %s7, 64
        %v3689 = vld [vmem:[%s3688] sm:$0xf]
        %v3690 = vld [vmem:[%s3688 + $0x4] sm:$0xf]
        %v3691 = vld [vmem:[%s3688 + $0x8] sm:$0xf]
        %v3692 = vld [vmem:[%s3688 + $0xc] sm:$0xf]
        %v3693 = vld [vmem:[%s3688 + $0x10] sm:$0xf]
        %v3694 = vld [vmem:[%s3688 + $0x14] sm:$0xf]
        %v3695 = vld [vmem:[%s3688 + $0x18] sm:$0xf]
        %v3696 = vld [vmem:[%s3688 + $0x1c] sm:$0xf]
        %v3697 = vld [vmem:[%s3688 + $0x20] sm:$0xf]
        %v3698 = vld [vmem:[%s3688 + $0x24] sm:$0xf]
        %v3699 = vld [vmem:[%s3688 + $0x28] sm:$0xf]
        %v3700 = vld [vmem:[%s3688 + $0x2c] sm:$0xf]
        %v3701 = vld [vmem:[%s3688 + $0x30] sm:$0xf]
        %v3702 = vld [vmem:[%s3688 + $0x34] sm:$0xf]
        %v3703 = vld [vmem:[%s3688 + $0x38] sm:$0xf]
        %v3704 = vld [vmem:[%s3688 + $0x3c] sm:$0xf]
        %s3705 = scalar_lea.vmem %s8, 1
        %v3706 = vld [vmem:[%s3705] sm:$0x1]
        %v3707 = vpack.c.bf16 %v3687, %v3686
        %v3709 = vlaneseq
        %v3710 = vshrl.u32 %v3709, 7
        %v3711 = vsub.s32 0, %v3710
        %v3712 = vrot.slane %v3706, %v3711
        %v3730 = vunpack.c.l.b16 %v3689
        %v3731 = vunpack.c.l.b16 %v3690
        %v3732 = vunpack.c.l.b16 %v3691
        %v3733 = vunpack.c.l.b16 %v3692
        %v3734 = vunpack.c.l.b16 %v3693
        %v3735 = vunpack.c.l.b16 %v3694
        %v3736 = vunpack.c.l.b16 %v3695
        %v3737 = vunpack.c.l.b16 %v3696
        %v3738 = vunpack.c.l.b16 %v3697
        %v3739 = vunpack.c.l.b16 %v3698
        %v3740 = vunpack.c.l.b16 %v3699
        %v3741 = vunpack.c.l.b16 %v3700
        %v3742 = vunpack.c.l.b16 %v3701
        %v3743 = vunpack.c.l.b16 %v3702
        %v3744 = vunpack.c.l.b16 %v3703
        %v3745 = vunpack.c.l.b16 %v3704
        %v3746 = vpack.c.b16 %v3731, %v3730
        %v3747 = vpack.c.b16 %v3733, %v3732
        %v3748 = vpack.c.b16 %v3735, %v3734
        %v3749 = vpack.c.b16 %v3737, %v3736
        %v3750 = vpack.c.b16 %v3739, %v3738
        %v3751 = vpack.c.b16 %v3741, %v3740
        %v3752 = vpack.c.b16 %v3743, %v3742
        %v3753 = vpack.c.b16 %v3745, %v3744
        %3762 = vmatprep.subr.bf16.mxu0 0
        %3763 = vmatpush1.bf16.msra.mxu0 %v3746
        %3764 = vmatprep.subr.bf16.mxu0 0
        %3765 = vmatpush1.bf16.msra.mxu0 %v3747
        %3766 = vmatprep.subr.bf16.mxu0 0
        %3767 = vmatpush1.bf16.msra.mxu0 %v3748
        %3768 = vmatprep.subr.bf16.mxu0 0
        %3769 = vmatpush1.bf16.msra.mxu0 %v3749
        %3770 = vmatprep.subr.bf16.mxu0 0
        %3771 = vmatpush1.bf16.msra.mxu0 %v3750
        %3772 = vmatprep.subr.bf16.mxu0 0
        %3773 = vmatpush1.bf16.msra.mxu0 %v3751
        %3774 = vmatprep.subr.bf16.mxu0 0
        %3775 = vmatpush1.bf16.msra.mxu0 %v3752
        %3776 = vmatprep.subr.bf16.mxu0 0
        %3777 = vmatpush1.bf16.msra.mxu0 %v3753
        %3778 = vmatprep.subr.bf16.mxu0 0
        %3779 = vmatpush1.bf16.msra.mxu0 0
        %3780 = vmatprep.subr.bf16.mxu0 0
        %3781 = vmatpush1.bf16.msra.mxu0 0
        %3782 = vmatprep.subr.bf16.mxu0 0
        %3783 = vmatpush1.bf16.msra.mxu0 0
        %3784 = vmatprep.subr.bf16.mxu0 0
        %3785 = vmatpush1.bf16.msra.mxu0 0
        %3786 = vmatprep.subr.bf16.mxu0 0
        %3787 = vmatpush1.bf16.msra.mxu0 0
        %3788 = vmatprep.subr.bf16.mxu0 0
        %3789 = vmatpush1.bf16.msra.mxu0 0
        %3790 = vmatprep.subr.bf16.mxu0 0
        %3791 = vmatpush1.bf16.msra.mxu0 0
        %3792 = vmatprep.subr.bf16.mxu0 0
        %3793 = vmatpush1.bf16.msra.mxu0 0
        %3794 = vmatprep.mubr.bf16.mxu0 0
        %3795 = vmatmul.mubr.bf16.gmra.mrb[0].mxu0 %v3707
        %v3796 = vpop.f32.mrb[0].mxu0
        %v3797 = vadd.f32 %v3712, %v3796
        %v3798 = vpop.f32.mrb[0].mxu0
        %v3799 = vpop.f32.mrb[0].mxu0
        %v3800 = vadd.f32 %v3712, %v3799
        %v3801 = vpop.f32.mrb[0].mxu0
        %3802 = vdwg.mxu0
        %v3803 = vadd.f32 %v2490, %v3797
        %v3804 = vadd.f32 %v2491, %v3800
        %s3805 = scalar_lea.vmem %s9, 1
        %v3806 = vld [vmem:[%s3805] sm:$0x1]
        %s3807 = scalar_lea.vmem %s10, 1
        %v3808 = vld [vmem:[%s3807] sm:$0x1]
        %3809 = vadd.xlane.f32.xlu0 %v3803
        %v3810 = vpop.xlane.xlu0 %3809
        %3811 = vadd.xlane.f32.xlu0 %v3804
        %v3812 = vpop.xlane.xlu0 %3811
        %v3813 = vmul.f32 %v3810, %v698
        %v3814 = vmul.f32 %v3812, %v698
        %v3815 = vsub.f32 %v3803, %v3813
        %v3816 = vsub.f32 %v3804, %v3814
        %v3817 = vmul.f32 %v3815, %v3815
        %v3818 = vmul.f32 %v3816, %v3816
        %3819 = vadd.xlane.f32.xlu0 %v3817
        %v3820 = vpop.xlane.xlu0 %3819
        %3821 = vadd.xlane.f32.xlu0 %v3818
        %v3822 = vpop.xlane.xlu0 %3821
        %v3823 = vmul.f32 %v3820, %v698
        %v3824 = vmul.f32 %v3822, %v698
        %v3825 = vadd.f32 %v3823, 1e-12
        %v3826 = vadd.f32 %v3824, 1e-12
        %v3827 = vrsqrt.pop %v3825
        %v3828 = vrsqrt.pop %v3826
        %v3829 = vmul.f32 %v3815, %v3827
        %v3830 = vmul.f32 %v3816, %v3828
        %v3832 = vlaneseq
        %v3833 = vshrl.u32 %v3832, 7
        %v3834 = vsub.s32 0, %v3833
        %v3835 = vrot.slane %v3806, %v3834
        %v3837 = vmul.f32 %v3829, %v3835
        %v3838 = vmul.f32 %v3830, %v3835
        %v3840 = vlaneseq
        %v3841 = vshrl.u32 %v3840, 7
        %v3842 = vsub.s32 0, %v3841
        %v3843 = vrot.slane %v3808, %v3842
        %v3845 = vadd.f32 %v3837, %v3843
        %v3846 = vadd.f32 %v3838, %v3843
        %s3847 = scalar_lea.vmem %s11, 128
        %v3848 = vld [vmem:[%s3847] sm:$0xff]
        %v3849 = vld [vmem:[%s3847 + $0x8] sm:$0xff]
        %v3850 = vld [vmem:[%s3847 + $0x10] sm:$0xff]
        %v3851 = vld [vmem:[%s3847 + $0x18] sm:$0xff]
        %v3852 = vld [vmem:[%s3847 + $0x20] sm:$0xff]
        %v3853 = vld [vmem:[%s3847 + $0x28] sm:$0xff]
        %v3854 = vld [vmem:[%s3847 + $0x30] sm:$0xff]
        %v3855 = vld [vmem:[%s3847 + $0x38] sm:$0xff]
        %v3856 = vld [vmem:[%s3847 + $0x40] sm:$0xff]
        %v3857 = vld [vmem:[%s3847 + $0x48] sm:$0xff]
        %v3858 = vld [vmem:[%s3847 + $0x50] sm:$0xff]
        %v3859 = vld [vmem:[%s3847 + $0x58] sm:$0xff]
        %v3860 = vld [vmem:[%s3847 + $0x60] sm:$0xff]
        %v3861 = vld [vmem:[%s3847 + $0x68] sm:$0xff]
        %v3862 = vld [vmem:[%s3847 + $0x70] sm:$0xff]
        %v3863 = vld [vmem:[%s3847 + $0x78] sm:$0xff]
        %s3864 = scalar_lea.vmem %s12, 2
        %v3865 = vld [vmem:[%s3864] sm:$0x3]
        %v3866 = vpack.c.bf16 %v3846, %v3845
        %v3868 = vlaneseq
        %v3869 = vshrl.u32 %v3868, 7
        %v3870 = vsub.s32 0, %v3869
        %v3871 = vrot.slane %v3865, %v3870
        %v3872 = vlaneseq
        %v3873 = vshrl.u32 %v3872, 7
        %v3874 = vsub.s32 1, %v3873
        %v3875 = vrot.slane %v3865, %v3874
        %v3894 = vunpack.c.l.b16 %v3848
        %v3895 = vunpack.c.h.b16 %v3848
        %v3896 = vunpack.c.l.b16 %v3849
        %v3897 = vunpack.c.h.b16 %v3849
        %v3898 = vunpack.c.l.b16 %v3850
        %v3899 = vunpack.c.h.b16 %v3850
        %v3900 = vunpack.c.l.b16 %v3851
        %v3901 = vunpack.c.h.b16 %v3851
        %v3902 = vunpack.c.l.b16 %v3852
        %v3903 = vunpack.c.h.b16 %v3852
        %v3904 = vunpack.c.l.b16 %v3853
        %v3905 = vunpack.c.h.b16 %v3853
        %v3906 = vunpack.c.l.b16 %v3854
        %v3907 = vunpack.c.h.b16 %v3854
        %v3908 = vunpack.c.l.b16 %v3855
        %v3909 = vunpack.c.h.b16 %v3855
        %v3910 = vunpack.c.l.b16 %v3856
        %v3911 = vunpack.c.h.b16 %v3856
        %v3912 = vunpack.c.l.b16 %v3857
        %v3913 = vunpack.c.h.b16 %v3857
        %v3914 = vunpack.c.l.b16 %v3858
        %v3915 = vunpack.c.h.b16 %v3858
        %v3916 = vunpack.c.l.b16 %v3859
        %v3917 = vunpack.c.h.b16 %v3859
        %v3918 = vunpack.c.l.b16 %v3860
        %v3919 = vunpack.c.h.b16 %v3860
        %v3920 = vunpack.c.l.b16 %v3861
        %v3921 = vunpack.c.h.b16 %v3861
        %v3922 = vunpack.c.l.b16 %v3862
        %v3923 = vunpack.c.h.b16 %v3862
        %v3924 = vunpack.c.l.b16 %v3863
        %v3925 = vunpack.c.h.b16 %v3863
        %v3926 = vpack.c.b16 %v3896, %v3894
        %v3927 = vpack.c.b16 %v3897, %v3895
        %v3928 = vpack.c.b16 %v3900, %v3898
        %v3929 = vpack.c.b16 %v3901, %v3899
        %v3930 = vpack.c.b16 %v3904, %v3902
        %v3931 = vpack.c.b16 %v3905, %v3903
        %v3932 = vpack.c.b16 %v3908, %v3906
        %v3933 = vpack.c.b16 %v3909, %v3907
        %v3934 = vpack.c.b16 %v3912, %v3910
        %v3935 = vpack.c.b16 %v3913, %v3911
        %v3936 = vpack.c.b16 %v3916, %v3914
        %v3937 = vpack.c.b16 %v3917, %v3915
        %v3938 = vpack.c.b16 %v3920, %v3918
        %v3939 = vpack.c.b16 %v3921, %v3919
        %v3940 = vpack.c.b16 %v3924, %v3922
        %v3941 = vpack.c.b16 %v3925, %v3923
        %3958 = vmatprep.subr.bf16.mxu0 %v3927
        %3959 = vmatpush1.bf16.msra.mxu0 %v3926
        %3960 = vmatprep.subr.bf16.mxu0 %v3929
        %3961 = vmatpush1.bf16.msra.mxu0 %v3928
        %3962 = vmatprep.subr.bf16.mxu0 %v3931
        %3963 = vmatpush1.bf16.msra.mxu0 %v3930
        %3964 = vmatprep.subr.bf16.mxu0 %v3933
        %3965 = vmatpush1.bf16.msra.mxu0 %v3932
        %3966 = vmatprep.subr.bf16.mxu0 %v3935
        %3967 = vmatpush1.bf16.msra.mxu0 %v3934
        %3968 = vmatprep.subr.bf16.mxu0 %v3937
        %3969 = vmatpush1.bf16.msra.mxu0 %v3936
        %3970 = vmatprep.subr.bf16.mxu0 %v3939
        %3971 = vmatpush1.bf16.msra.mxu0 %v3938
        %3972 = vmatprep.subr.bf16.mxu0 %v3941
        %3973 = vmatpush1.bf16.msra.mxu0 %v3940
        %3974 = vmatprep.subr.bf16.mxu0 0
        %3975 = vmatpush1.bf16.msra.mxu0 0
        %3976 = vmatprep.subr.bf16.mxu0 0
        %3977 = vmatpush1.bf16.msra.mxu0 0
        %3978 = vmatprep.subr.bf16.mxu0 0
        %3979 = vmatpush1.bf16.msra.mxu0 0
        %3980 = vmatprep.subr.bf16.mxu0 0
        %3981 = vmatpush1.bf16.msra.mxu0 0
        %3982 = vmatprep.subr.bf16.mxu0 0
        %3983 = vmatpush1.bf16.msra.mxu0 0
        %3984 = vmatprep.subr.bf16.mxu0 0
        %3985 = vmatpush1.bf16.msra.mxu0 0
        %3986 = vmatprep.subr.bf16.mxu0 0
        %3987 = vmatpush1.bf16.msra.mxu0 0
        %3988 = vmatprep.subr.bf16.mxu0 0
        %3989 = vmatpush1.bf16.msra.mxu0 0
        %3990 = vmatprep.mubr.bf16.mxu0 0
        %3991 = vmatmul.mubr.bf16.gmra.mrb[0].mxu0 %v3866
        %v3992 = vpop.f32.mrb[0].mxu0
        %v3993 = vadd.f32 %v3871, %v3992
        %v3994 = vpop.f32.mrb[0].mxu0
        %v3995 = vadd.f32 %v3875, %v3994
        %v3996 = vpop.f32.mrb[0].mxu0
        %v3997 = vadd.f32 %v3871, %v3996
        %v3998 = vpop.f32.mrb[0].mxu0
        %v3999 = vadd.f32 %v3875, %v3998
        %4000 = vdwg.mxu0
        %v4001 = vmul.f32 %v3993, %v3993
        %v4002 = vmul.f32 %v3995, %v3995
        %v4003 = vmul.f32 %v3997, %v3997
        %v4004 = vmul.f32 %v3999, %v3999
        %v4005 = vmul.f32 %v3993, %v4001
        %v4006 = vmul.f32 %v3995, %v4002
        %v4007 = vmul.f32 %v3997, %v4003
        %v4008 = vmul.f32 %v3999, %v4004
        %v4009 = vmul.f32 %v4005, 0.044715
        %v4010 = vmul.f32 %v4006, 0.044715
        %v4011 = vmul.f32 %v4007, 0.044715
        %v4012 = vmul.f32 %v4008, 0.044715
        %v4013 = vadd.f32 %v3993, %v4009
        %v4014 = vadd.f32 %v3995, %v4010
        %v4015 = vadd.f32 %v3997, %v4011
        %v4016 = vadd.f32 %v3999, %v4012
        %v4017 = vmul.f32 %v4013, 0.7978846
        %v4018 = vmul.f32 %v4014, 0.7978846
        %v4019 = vmul.f32 %v4015, 0.7978846
        %v4020 = vmul.f32 %v4016, 0.7978846
        %v4021 = vtanh.pop %v4017
        %v4022 = vtanh.pop %v4018
        %v4023 = vtanh.pop %v4019
        %v4024 = vtanh.pop %v4020
        %v4025 = vadd.f32 %v4021, 1.0
        %v4026 = vadd.f32 %v4022, 1.0
        %v4027 = vadd.f32 %v4023, 1.0
        %v4028 = vadd.f32 %v4024, 1.0
        %v4029 = vmul.f32 %v4025, 0.5
        %v4030 = vmul.f32 %v4026, 0.5
        %v4031 = vmul.f32 %v4027, 0.5
        %v4032 = vmul.f32 %v4028, 0.5
        %v4033 = vmul.f32 %v3993, %v4029
        %v4034 = vmul.f32 %v3995, %v4030
        %v4035 = vmul.f32 %v3997, %v4031
        %v4036 = vmul.f32 %v3999, %v4032
        %s4037 = scalar_lea.vmem [#allocation6], 128
        %v4038 = vld [vmem:[%s4037] sm:$0xf]
        %v4039 = vld [vmem:[%s4037 + $0x4] sm:$0xf]
        %v4040 = vld [vmem:[%s4037 + $0x8] sm:$0xf]
        %v4041 = vld [vmem:[%s4037 + $0xc] sm:$0xf]
        %v4042 = vld [vmem:[%s4037 + $0x10] sm:$0xf]
        %v4043 = vld [vmem:[%s4037 + $0x14] sm:$0xf]
        %v4044 = vld [vmem:[%s4037 + $0x18] sm:$0xf]
        %v4045 = vld [vmem:[%s4037 + $0x1c] sm:$0xf]
        %v4046 = vld [vmem:[%s4037 + $0x20] sm:$0xf]
        %v4047 = vld [vmem:[%s4037 + $0x24] sm:$0xf]
        %v4048 = vld [vmem:[%s4037 + $0x28] sm:$0xf]
        %v4049 = vld [vmem:[%s4037 + $0x2c] sm:$0xf]
        %v4050 = vld [vmem:[%s4037 + $0x30] sm:$0xf]
        %v4051 = vld [vmem:[%s4037 + $0x34] sm:$0xf]
        %v4052 = vld [vmem:[%s4037 + $0x38] sm:$0xf]
        %v4053 = vld [vmem:[%s4037 + $0x3c] sm:$0xf]
        %v4054 = vld [vmem:[%s4037 + $0x40] sm:$0xf]
        %v4055 = vld [vmem:[%s4037 + $0x44] sm:$0xf]
        %v4056 = vld [vmem:[%s4037 + $0x48] sm:$0xf]
        %v4057 = vld [vmem:[%s4037 + $0x4c] sm:$0xf]
        %v4058 = vld [vmem:[%s4037 + $0x50] sm:$0xf]
        %v4059 = vld [vmem:[%s4037 + $0x54] sm:$0xf]
        %v4060 = vld [vmem:[%s4037 + $0x58] sm:$0xf]
        %v4061 = vld [vmem:[%s4037 + $0x5c] sm:$0xf]
        %v4062 = vld [vmem:[%s4037 + $0x60] sm:$0xf]
        %v4063 = vld [vmem:[%s4037 + $0x64] sm:$0xf]
        %v4064 = vld [vmem:[%s4037 + $0x68] sm:$0xf]
        %v4065 = vld [vmem:[%s4037 + $0x6c] sm:$0xf]
        %v4066 = vld [vmem:[%s4037 + $0x70] sm:$0xf]
        %v4067 = vld [vmem:[%s4037 + $0x74] sm:$0xf]
        %v4068 = vld [vmem:[%s4037 + $0x78] sm:$0xf]
        %v4069 = vld [vmem:[%s4037 + $0x7c] sm:$0xf]
        %s4070 = scalar_lea.vmem %s14, 1
        %v4071 = vld [vmem:[%s4070] sm:$0x1]
        %v4072 = vpack.c.bf16 %v4035, %v4033
        %v4073 = vpack.c.bf16 %v4036, %v4034
        %v4075 = vlaneseq
        %v4076 = vshrl.u32 %v4075, 7
        %v4077 = vsub.s32 0, %v4076
        %v4078 = vrot.slane %v4071, %v4077
        %v4112 = vunpack.c.l.b16 %v4038
        %v4113 = vunpack.c.l.b16 %v4039
        %v4114 = vunpack.c.l.b16 %v4040
        %v4115 = vunpack.c.l.b16 %v4041
        %v4116 = vunpack.c.l.b16 %v4042
        %v4117 = vunpack.c.l.b16 %v4043
        %v4118 = vunpack.c.l.b16 %v4044
        %v4119 = vunpack.c.l.b16 %v4045
        %v4120 = vunpack.c.l.b16 %v4046
        %v4121 = vunpack.c.l.b16 %v4047
        %v4122 = vunpack.c.l.b16 %v4048
        %v4123 = vunpack.c.l.b16 %v4049
        %v4124 = vunpack.c.l.b16 %v4050
        %v4125 = vunpack.c.l.b16 %v4051
        %v4126 = vunpack.c.l.b16 %v4052
        %v4127 = vunpack.c.l.b16 %v4053
        %v4128 = vunpack.c.l.b16 %v4054
        %v4129 = vunpack.c.l.b16 %v4055
        %v4130 = vunpack.c.l.b16 %v4056
        %v4131 = vunpack.c.l.b16 %v4057
        %v4132 = vunpack.c.l.b16 %v4058
        %v4133 = vunpack.c.l.b16 %v4059
        %v4134 = vunpack.c.l.b16 %v4060
        %v4135 = vunpack.c.l.b16 %v4061
        %v4136 = vunpack.c.l.b16 %v4062
        %v4137 = vunpack.c.l.b16 %v4063
        %v4138 = vunpack.c.l.b16 %v4064
        %v4139 = vunpack.c.l.b16 %v4065
        %v4140 = vunpack.c.l.b16 %v4066
        %v4141 = vunpack.c.l.b16 %v4067
        %v4142 = vunpack.c.l.b16 %v4068
        %v4143 = vunpack.c.l.b16 %v4069
        %v4144 = vpack.c.b16 %v4113, %v4112
        %v4145 = vpack.c.b16 %v4115, %v4114
        %v4146 = vpack.c.b16 %v4117, %v4116
        %v4147 = vpack.c.b16 %v4119, %v4118
        %v4148 = vpack.c.b16 %v4121, %v4120
        %v4149 = vpack.c.b16 %v4123, %v4122
        %v4150 = vpack.c.b16 %v4125, %v4124
        %v4151 = vpack.c.b16 %v4127, %v4126
        %v4152 = vpack.c.b16 %v4129, %v4128
        %v4153 = vpack.c.b16 %v4131, %v4130
        %v4154 = vpack.c.b16 %v4133, %v4132
        %v4155 = vpack.c.b16 %v4135, %v4134
        %v4156 = vpack.c.b16 %v4137, %v4136
        %v4157 = vpack.c.b16 %v4139, %v4138
        %v4158 = vpack.c.b16 %v4141, %v4140
        %v4159 = vpack.c.b16 %v4143, %v4142
        %4176 = vmatprep.subr.bf16.mxu0 0
        %4177 = vmatpush1.bf16.msra.mxu0 %v4144
        %4178 = vmatprep.subr.bf16.mxu0 0
        %4179 = vmatpush1.bf16.msra.mxu0 %v4145
        %4180 = vmatprep.subr.bf16.mxu0 0
        %4181 = vmatpush1.bf16.msra.mxu0 %v4146
        %4182 = vmatprep.subr.bf16.mxu0 0
        %4183 = vmatpush1.bf16.msra.mxu0 %v4147
        %4184 = vmatprep.subr.bf16.mxu0 0
        %4185 = vmatpush1.bf16.msra.mxu0 %v4148
        %4186 = vmatprep.subr.bf16.mxu0 0
        %4187 = vmatpush1.bf16.msra.mxu0 %v4149
        %4188 = vmatprep.subr.bf16.mxu0 0
        %4189 = vmatpush1.bf16.msra.mxu0 %v4150
        %4190 = vmatprep.subr.bf16.mxu0 0
        %4191 = vmatpush1.bf16.msra.mxu0 %v4151
        %4192 = vmatprep.subr.bf16.mxu0 0
        %4193 = vmatpush1.bf16.msra.mxu0 %v4152
        %4194 = vmatprep.subr.bf16.mxu0 0
        %4195 = vmatpush1.bf16.msra.mxu0 %v4153
        %4196 = vmatprep.subr.bf16.mxu0 0
        %4197 = vmatpush1.bf16.msra.mxu0 %v4154
        %4198 = vmatprep.subr.bf16.mxu0 0
        %4199 = vmatpush1.bf16.msra.mxu0 %v4155
        %4200 = vmatprep.subr.bf16.mxu0 0
        %4201 = vmatpush1.bf16.msra.mxu0 %v4156
        %4202 = vmatprep.subr.bf16.mxu0 0
        %4203 = vmatpush1.bf16.msra.mxu0 %v4157
        %4204 = vmatprep.subr.bf16.mxu0 0
        %4205 = vmatpush1.bf16.msra.mxu0 %v4158
        %4206 = vmatprep.subr.bf16.mxu0 0
        %4207 = vmatpush1.bf16.msra.mxu0 %v4159
        %4208 = vmatprep.mubr.bf16.mxu0 %v4073
        %4209 = vmatmul.mubr.bf16.gmra.mrb[0].mxu0 %v4072
        %v4210 = vpop.f32.mrb[0].mxu0
        %v4211 = vadd.f32 %v4078, %v4210
        %v4212 = vpop.f32.mrb[0].mxu0
        %v4213 = vpop.f32.mrb[0].mxu0
        %v4214 = vadd.f32 %v4078, %v4213
        %v4215 = vpop.f32.mrb[0].mxu0
        %4216 = vdwg.mxu0
        %v4217 = vadd.f32 %v3845, %v4211
        %v4218 = vadd.f32 %v3846, %v4214
        %s4219 = scalar_lea.vmem [#allocation7], 1
        %v4220 = vld [vmem:[%s4219] sm:$0x1]
        %s4221 = scalar_lea.vmem %s16, 1
        %v4222 = vld [vmem:[%s4221] sm:$0x1]
        %4223 = vadd.xlane.f32.xlu0 %v4217
        %v4224 = vpop.xlane.xlu0 %4223
        %4225 = vadd.xlane.f32.xlu0 %v4218
        %v4226 = vpop.xlane.xlu0 %4225
        %v4227 = vmul.f32 %v4224, %v698
        %v4228 = vmul.f32 %v4226, %v698
        %v4229 = vsub.f32 %v4217, %v4227
        %v4230 = vsub.f32 %v4218, %v4228
        %v4231 = vmul.f32 %v4229, %v4229
        %v4232 = vmul.f32 %v4230, %v4230
        %4233 = vadd.xlane.f32.xlu0 %v4231
        %v4234 = vpop.xlane.xlu0 %4233
        %4235 = vadd.xlane.f32.xlu0 %v4232
        %v4236 = vpop.xlane.xlu0 %4235
        %v4237 = vmul.f32 %v4234, %v698
        %v4238 = vmul.f32 %v4236, %v698
        %v4239 = vadd.f32 %v4237, 1e-12
        %v4240 = vadd.f32 %v4238, 1e-12
        %v4241 = vrsqrt.pop %v4239
        %v4242 = vrsqrt.pop %v4240
        %v4243 = vmul.f32 %v4229, %v4241
        %v4244 = vmul.f32 %v4230, %v4242
        %v4246 = vlaneseq
        %v4247 = vshrl.u32 %v4246, 7
        %v4248 = vsub.s32 0, %v4247
        %v4249 = vrot.slane %v4220, %v4248
        %v4251 = vmul.f32 %v4243, %v4249
        %v4252 = vmul.f32 %v4244, %v4249
        %v4254 = vlaneseq
        %v4255 = vshrl.u32 %v4254, 7
        %v4256 = vsub.s32 0, %v4255
        %v4257 = vrot.slane %v4222, %v4256
        %v4259 = vadd.f32 %v4251, %v4257
        %v4260 = vadd.f32 %v4252, %v4257
        %v4261 = vld [vmem:[#allocation9] sm:$0xf]
        %v4262 = vld [vmem:[#allocation9 + $0x4] sm:$0xf]
        %v4263 = vld [vmem:[#allocation9 + $0x8] sm:$0xf]
        %v4264 = vld [vmem:[#allocation9 + $0xc] sm:$0xf]
        %v4265 = vld [vmem:[#allocation9 + $0x10] sm:$0xf]
        %v4266 = vld [vmem:[#allocation9 + $0x14] sm:$0xf]
        %v4267 = vld [vmem:[#allocation9 + $0x18] sm:$0xf]
        %v4268 = vld [vmem:[#allocation9 + $0x1c] sm:$0xf]
        %v4269 = vld [vmem:[#allocation9 + $0x20] sm:$0xf]
        %v4270 = vld [vmem:[#allocation9 + $0x24] sm:$0xf]
        %v4271 = vld [vmem:[#allocation9 + $0x28] sm:$0xf]
        %v4272 = vld [vmem:[#allocation9 + $0x2c] sm:$0xf]
        %v4273 = vld [vmem:[#allocation9 + $0x30] sm:$0xf]
        %v4274 = vld [vmem:[#allocation9 + $0x34] sm:$0xf]
        %v4275 = vld [vmem:[#allocation9 + $0x38] sm:$0xf]
        %v4276 = vld [vmem:[#allocation9 + $0x3c] sm:$0xf]
        %v4277 = vld [vmem:[%s18] sm:$0x1]
        %v4278 = vpack.c.bf16 %v4260, %v4259
        %v4280 = vlaneseq
        %v4281 = vshrl.u32 %v4280, 7
        %v4282 = vsub.s32 0, %v4281
        %v4283 = vrot.slane %v4277, %v4282
        %v4301 = vunpack.c.l.b16 %v4261
        %v4302 = vunpack.c.l.b16 %v4262
        %v4303 = vunpack.c.l.b16 %v4263
        %v4304 = vunpack.c.l.b16 %v4264
        %v4305 = vunpack.c.l.b16 %v4265
        %v4306 = vunpack.c.l.b16 %v4266
        %v4307 = vunpack.c.l.b16 %v4267
        %v4308 = vunpack.c.l.b16 %v4268
        %v4309 = vunpack.c.l.b16 %v4269
        %v4310 = vunpack.c.l.b16 %v4270
        %v4311 = vunpack.c.l.b16 %v4271
        %v4312 = vunpack.c.l.b16 %v4272
        %v4313 = vunpack.c.l.b16 %v4273
        %v4314 = vunpack.c.l.b16 %v4274
        %v4315 = vunpack.c.l.b16 %v4275
        %v4316 = vunpack.c.l.b16 %v4276
        %v4317 = vpack.c.b16 %v4302, %v4301
        %v4318 = vpack.c.b16 %v4304, %v4303
        %v4319 = vpack.c.b16 %v4306, %v4305
        %v4320 = vpack.c.b16 %v4308, %v4307
        %v4321 = vpack.c.b16 %v4310, %v4309
        %v4322 = vpack.c.b16 %v4312, %v4311
        %v4323 = vpack.c.b16 %v4314, %v4313
        %v4324 = vpack.c.b16 %v4316, %v4315
        %4333 = vmatprep.subr.bf16.mxu0 0
        %4334 = vmatpush1.bf16.msra.mxu0 %v4317
        %4335 = vmatprep.subr.bf16.mxu0 0
        %4336 = vmatpush1.bf16.msra.mxu0 %v4318
        %4337 = vmatprep.subr.bf16.mxu0 0
        %4338 = vmatpush1.bf16.msra.mxu0 %v4319
        %4339 = vmatprep.subr.bf16.mxu0 0
        %4340 = vmatpush1.bf16.msra.mxu0 %v4320
        %4341 = vmatprep.subr.bf16.mxu0 0
        %4342 = vmatpush1.bf16.msra.mxu0 %v4321
        %4343 = vmatprep.subr.bf16.mxu0 0
        %4344 = vmatpush1.bf16.msra.mxu0 %v4322
        %4345 = vmatprep.subr.bf16.mxu0 0
        %4346 = vmatpush1.bf16.msra.mxu0 %v4323
        %4347 = vmatprep.subr.bf16.mxu0 0
        %4348 = vmatpush1.bf16.msra.mxu0 %v4324
        %4349 = vmatprep.subr.bf16.mxu0 0
        %4350 = vmatpush1.bf16.msra.mxu0 0
        %4351 = vmatprep.subr.bf16.mxu0 0
        %4352 = vmatpush1.bf16.msra.mxu0 0
        %4353 = vmatprep.subr.bf16.mxu0 0
        %4354 = vmatpush1.bf16.msra.mxu0 0
        %4355 = vmatprep.subr.bf16.mxu0 0
        %4356 = vmatpush1.bf16.msra.mxu0 0
        %4357 = vmatprep.subr.bf16.mxu0 0
        %4358 = vmatpush1.bf16.msra.mxu0 0
        %4359 = vmatprep.subr.bf16.mxu0 0
        %4360 = vmatpush1.bf16.msra.mxu0 0
        %4361 = vmatprep.subr.bf16.mxu0 0
        %4362 = vmatpush1.bf16.msra.mxu0 0
        %4363 = vmatprep.subr.bf16.mxu0 0
        %4364 = vmatpush1.bf16.msra.mxu0 0
        %4365 = vmatprep.mubr.bf16.mxu0 0
        %4366 = vmatmul.mubr.bf16.gmra.mrb[0].mxu0 %v4278
        %v4367 = vpop.f32.mrb[0].mxu0
        %v4368 = vadd.f32 %v4283, %v4367
        %v4369 = vpop.f32.mrb[0].mxu0
        %v4370 = vpop.f32.mrb[0].mxu0
        %v4371 = vadd.f32 %v4283, %v4370
        %v4372 = vpop.f32.mrb[0].mxu0
        %4373 = vdwg.mxu0
        %4374 = vst [vmem:[%s675] sm:$0xff] %v4368
        %4375 = vst [vmem:[%s675 + $0x8] sm:$0xff] %v4371
        %p4376 = scmp.lt.s32.totalorder %s33, 1
        %s4377 = scalar_select %p4376, %s33, 1
        %s4378 = smul.addr %s4377, 2
        %s4379 = smul.addr %s4378, 8
        %s4380 = scalar_lea.vmem %s19, %s4379
        // Predicated region
        $region117: #{forward.1} parent=95 // pred_check
          %p4381 = pneg %p455
        $region118: #{forward.1} parent=95 // pred_check_branch
          %4383 = sbr.rel (%p4381) target = $region120
        $region119: #{forward.1} parent=95 // pred_region
          _
        $region120: #{forward.1} parent=95 // pred_fallthru
          _
      $region96: #{forward.1} parent=5 // pred_fallthru
        _
      %p4384 = scmp.le.s32.totalorder 2, %s28
      // Predicated region
      $region121: #{forward.1} parent=5 // pred_check
        %p4385 = pneg %p4384
      $region122: #{forward.1} parent=5 // pred_check_branch
        %4387 = sbr.rel (%p4385) target = $region124
      $region123: #{forward.1} parent=5 // pred_region
        %s4388 = ssub.s32 %s28, 2
        // Predicated region
        $region125: #{forward.1} parent=123 // pred_check
          %p4389 = pneg %p461
        $region126: #{forward.1} parent=123 // pred_check_branch
          %4391 = sbr.rel (%p4389) target = $region128
        $region127: #{forward.1} parent=123 // pred_region
          %p4392 = scmp.lt.s32.totalorder %s34, 1
          %s4393 = scalar_select %p4392, %s34, 1
          %s4394 = smul.addr %s4393, 2
          %s4395 = smul.addr %s4394, 8
          %s4396 = scalar_lea.vmem %s19, %s4395
        $region128: #{forward.1} parent=123 // pred_fallthru
          _
      $region124: #{forward.1} parent=5 // pred_fallthru
        _
    $region6: #{forward.1} parent=1 // loop_footer
      %s32 = sadd.s32 1, %s28
    $region7: #{forward.1} parent=1 // loop_footer_branch
      %27 = sbr.rel target = $region3
    $region8: #{forward.1} parent=1 // loop_exit
      _
    %4397 = vsyncpa [#allocation3], 1
    %s4398 = scalar_lea.sflag [#allocation3], 1
    %4399 = vsyncpa %s4398, 1
    %4400 = vsyncpa [#allocation5], 1
    %4401 = vsyncpa [#allocation8], 1

</llo_original>
